<compile_context>
chip_gen: v7x
topology: tpu7x:2x2x1
jax: 0.10.0
libtpu: 0.0.40
codegen_flags: <defaults>
</compile_context>

<pallas_src>
import math
import functools

import jax
import jax.numpy as jnp
from jax import lax
from jax.experimental import pallas as pl
from jax.experimental.pallas import tpu as pltpu


# Row indices into the packed (11, hidden) parameter table.
_BQ, _BK, _BQA, _BKA, _BVA, _BO, _G1, _BE1, _B2, _G2, _BE2 = range(11)
_PACKED_VEC_NAMES = ("bq", "bk", "bqa", "bka", "bva", "bo",
                     "g1", "be1", "b2", "g2", "be2")


def _cross_attn_kernel(
    # per-batch activations (batch dim squeezed by BlockSpec)
    q_emb_ref, k_emb_ref,
    # matrices (attention weights resident; FFN weights tiled over grid axis 1)
    wq_ref, wk_ref, wqa_ref, wkv_ref, wo_ref, w1_ref, w2_ref,
    # packed (11, H) vector table and the (1, ffn_tile) slice of the FFN bias1
    vecs_ref, b1_ref,
    # output (Lq, H) block for this batch
    out_ref,
    # VMEM scratch: LN1 output and FFN f32 accumulator (persist across axis 1)
    x_sc, acc_sc,
    *, num_heads: int, q_len: int, k_len: int, hidden: int,
    eps: float = 1e-5, mxu_dtype=jnp.bfloat16,
):
    f32 = jnp.float32
    head_dim = hidden // num_heads
    scale = 1.0 / math.sqrt(head_dim)
    f = pl.program_id(1)

    def mm(a, b):
        return jnp.dot(a.astype(mxu_dtype), b.astype(mxu_dtype),
                       preferred_element_type=f32)

    # Single hoisted load of the packed bias / LayerNorm table.
    vec_tbl = vecs_ref[...].astype(f32)

    def vrow(i):
        return vec_tbl[i:i + 1, :]                       # (1, H), broadcast on add

    def layer_norm(x, gamma, beta):
        m = jnp.mean(x, axis=-1, keepdims=True)
        c = x - m
        var = jnp.mean(c * c, axis=-1, keepdims=True)
        return c * lax.rsqrt(var + eps) * gamma + beta

    # ---------- attention block: once per batch (first step of the FFN axis) --
    @pl.when(f == 0)
    def _attention():
        q_emb = q_emb_ref[...].astype(f32)               # (Lq, Dq)
        k_emb = k_emb_ref[...].astype(f32)               # (Lk, Dk)

        # query_proj / key_proj (nn.Linear)
        q_proj = mm(q_emb, wq_ref[...]) + vrow(_BQ)      # (Lq, H)
        k_proj = mm(k_emb, wk_ref[...]) + vrow(_BK)      # (Lk, H)

        # MultiheadAttention in-projections; k/v fused into one (H, 2H) matmul.
        q = (mm(q_proj, wqa_ref[...]) + vrow(_BQA)) * scale   # scale folded in f32
        kv = mm(k_proj, wkv_ref[...])                          # (Lk, 2H)
        k = kv[:, :hidden] + vrow(_BKA)
        v = kv[:, hidden:] + vrow(_BVA)

        # Heads to the leading dim: ONE reshape+transpose per tensor (no
        # per-head slice/stack loop), then batched einsums over heads.
        qh = q.astype(mxu_dtype).reshape(q_len, num_heads, head_dim).transpose(1, 0, 2)
        kh = k.astype(mxu_dtype).reshape(k_len, num_heads, head_dim).transpose(1, 0, 2)
        vh = v.astype(mxu_dtype).reshape(k_len, num_heads, head_dim).transpose(1, 0, 2)

        s = jnp.einsum('hqd,hkd->hqk', qh, kh, preferred_element_type=f32)
        s = s - jnp.max(s, axis=-1, keepdims=True)
        p = jnp.exp(s)
        p = p / jnp.sum(p, axis=-1, keepdims=True)       # exact divide (parity)
        o = jnp.einsum('hqk,hkd->hqd', p.astype(mxu_dtype), vh,
                       preferred_element_type=f32)       # (nh, Lq, hd)

        # Heads back to lane-contiguous (Lq, H): single full-depth (K = H)
        # out-projection matmul instead of per-head K = head_dim matmuls.
        o_cat = o.transpose(1, 0, 2).reshape(q_len, hidden)
        attn = mm(o_cat, wo_ref[...]) + vrow(_BO)
        # TODO(synk): attention-weight / FFN dropout omitted (inference mode).

        # residual + LayerNorm1 -> persists in VMEM across the FFN axis.
        x_sc[...] = layer_norm(attn + q_proj, vrow(_G1), vrow(_BE1))
        acc_sc[...] = jnp.zeros_like(acc_sc)

    # ---------- FFN: tiled over the ffn dim (grid axis 1), f32 accumulator ----
    x = x_sc[...]
    h1 = jnp.maximum(mm(x, w1_ref[...]) + b1_ref[...].astype(f32), 0.0)
    acc_sc[...] += mm(h1, w2_ref[...])

    @pl.when(f == pl.num_programs(1) - 1)
    def _finalize():
        ffn = acc_sc[...] + vrow(_B2)
        y = layer_norm(ffn + x_sc[...], vrow(_G2), vrow(_BE2))
        out_ref[...] = y.astype(out_ref.dtype)


def cross_attention_pallas(query_embeds, key_embeds, params, *, num_heads,
                           mxu_dtype=jnp.bfloat16, ffn_tile=512):
    B, Lq, Dq = query_embeds.shape
    Bk, Lk, Dk = key_embeds.shape
    assert B == Bk
    H = params["wq"].shape[1]
    F = params["w1"].shape[1]
    assert H % num_heads == 0

    ffn_tile = min(ffn_tile, F)
    assert F % ffn_tile == 0 and (ffn_tile % 128 == 0 or ffn_tile == F), \
        "ffn_tile must divide ffn_dim and be lane-aligned"
    n_f = F // ffn_tile

    # Fuse the k/v in-projections; pack all (1, H) vectors into one table.
    wkv = jnp.concatenate([params["wka"], params["wva"]], axis=1)           # (H, 2H)
    vecs = jnp.concatenate([params[n] for n in _PACKED_VEC_NAMES],
                           axis=0).astype(jnp.float32)                      # (11, H)

    # Matmul operands in mxu_dtype (bf16 default): halves weight DMA / VMEM on
    # v6e/v7x; the vector path inside the kernel stays f32.
    def wcast(x):
        return x.astype(mxu_dtype)

    operands = [
        query_embeds.astype(jnp.float32), key_embeds.astype(jnp.float32),
        wcast(params["wq"]), wcast(params["wk"]), wcast(params["wqa"]),
        wcast(wkv), wcast(params["wo"]), wcast(params["w1"]), wcast(params["w2"]),
        vecs, params["b1"].astype(jnp.float32),
    ]

    def resident(shape):
        return pl.BlockSpec(shape, lambda b, f: (0,) * len(shape))

    in_specs = [
        pl.BlockSpec((None, Lq, Dq), lambda b, f: (b, 0, 0)),   # per-batch query
        pl.BlockSpec((None, Lk, Dk), lambda b, f: (b, 0, 0)),   # per-batch key
        resident((Dq, H)), resident((Dk, H)), resident((H, H)),
        resident((H, 2 * H)), resident((H, H)),
        pl.BlockSpec((H, ffn_tile), lambda b, f: (0, f)),       # w1 column tile
        pl.BlockSpec((ffn_tile, H), lambda b, f: (f, 0)),       # w2 row tile
        resident((11, H)),
        pl.BlockSpec((1, ffn_tile), lambda b, f: (0, f)),       # b1 tile
    ]
    out_specs = pl.BlockSpec((None, Lq, H), lambda b, f: (b, 0, 0))

    operand_bytes = sum(int(x.size) * x.dtype.itemsize for x in operands)
    out_bytes = B * Lq * H * 4
    vmem_limit = int(min(64 * 2**20, max(16 * 2**20, 4 * (operand_bytes + out_bytes))))

    kernel = functools.partial(
        _cross_attn_kernel, num_heads=num_heads, q_len=Lq, k_len=Lk,
        hidden=H, mxu_dtype=mxu_dtype)

    out = pl.pallas_call(
        kernel,
        out_shape=jax.ShapeDtypeStruct((B, Lq, H), jnp.float32),
        grid_spec=pltpu.PrefetchScalarGridSpec(
            num_scalar_prefetch=0,
            grid=(B, n_f),                       # batch parallel, ffn arbitrary
            in_specs=in_specs,
            out_specs=out_specs,
            scratch_shapes=[pltpu.VMEM((Lq, H), jnp.float32),    # LN1 output
                            pltpu.VMEM((Lq, H), jnp.float32)],   # FFN accumulator
        ),
        compiler_params=pltpu.CompilerParams(
            dimension_semantics=("parallel", "arbitrary"),
            vmem_limit_bytes=vmem_limit),
    )(*operands)
    return out


def _reference(query_embeds, key_embeds, params, *, num_heads, eps=1e-5):
    """Pure-JAX reference (same math as the PyTorch module, inference mode)."""
    qp = query_embeds @ params["wq"] + params["bq"]
    kp = key_embeds @ params["wk"] + params["bk"]
    q = qp @ params["wqa"] + params["bqa"]
    k = kp @ params["wka"] + params["bka"]
    v = kp @ params["wva"] + params["bva"]
    B, Lq, H = q.shape
    Lk = k.shape[1]
    hd = H // num_heads
    qh = q.reshape(B, Lq, num_heads, hd).transpose(0, 2, 1, 3)
    kh = k.reshape(B, Lk, num_heads, hd).transpose(0, 2, 1, 3)
    vh = v.reshape(B, Lk, num_heads, hd).transpose(0, 2, 1, 3)
    s = jnp.einsum("bhqd,bhkd->bhqk", qh, kh) / math.sqrt(hd)
    p = jax.nn.softmax(s, axis=-1)
    a = jnp.einsum("bhqk,bhkd->bhqd", p, vh).transpose(0, 2, 1, 3).reshape(B, Lq, H)
    a = a @ params["wo"] + params["bo"]

    def ln(x, g, b):
        m = x.mean(-1, keepdims=True)
        var = ((x - m) ** 2).mean(-1, keepdims=True)
        return (x - m) * jax.lax.rsqrt(var + eps) * g + b

    x = ln(a + qp, params["g1"], params["be1"])
    f = jnp.maximum(x @ params["w1"] + params["b1"], 0.0) @ params["w2"] + params["b2"]
    return ln(f + x, params["g2"], params["be2"])


def make_params(key, query_dim, key_dim, hidden_dim, ffn_multiplier):
    """Deterministic synthetic parameters (matching the module's shapes)."""
    ks = jax.random.split(key, 16)
    ffn_dim = hidden_dim * ffn_multiplier

    def w(k, shape, scale=0.05):
        return (scale * jax.random.normal(k, shape)).astype(jnp.float32)

    return {
        # query_proj / key_proj
        "wq": w(ks[0], (query_dim, hidden_dim)),
        "bq": w(ks[1], (1, hidden_dim)),
        "wk": w(ks[2], (key_dim, hidden_dim)),
        "bk": w(ks[3], (1, hidden_dim)),
        # MultiheadAttention in_proj (split per q/k/v) + out_proj
        "wqa": w(ks[4], (hidden_dim, hidden_dim)),
        "bqa": w(ks[5], (1, hidden_dim)),
        "wka": w(ks[6], (hidden_dim, hidden_dim)),
        "bka": w(ks[7], (1, hidden_dim)),
        "wva": w(ks[8], (hidden_dim, hidden_dim)),
        "bva": w(ks[9], (1, hidden_dim)),
        "wo": w(ks[10], (hidden_dim, hidden_dim)),
        "bo": w(ks[11], (1, hidden_dim)),
        # LayerNorm 1
        "g1": jnp.ones((1, hidden_dim), jnp.float32),
        "be1": jnp.zeros((1, hidden_dim), jnp.float32),
        # FFN
        "w1": w(ks[12], (hidden_dim, ffn_dim)),
        "b1": w(ks[13], (1, ffn_dim)),
        "w2": w(ks[14], (ffn_dim, hidden_dim)),
        "b2": w(ks[15], (1, hidden_dim)),
        # LayerNorm 2
        "g2": jnp.ones((1, hidden_dim), jnp.float32),
        "be2": jnp.zeros((1, hidden_dim), jnp.float32),
    }


if __name__ == "__main__":
    # Small shapes consistent with the module's forward:
    #   query_embeds: (batch, seq_len, query_dim)
    #   key_embeds:   (batch, num_patches, key_dim)
    batch, seq_len, num_patches = 2, 8, 16
    query_dim, key_dim, hidden_dim = 32, 48, 64
    num_heads, ffn_multiplier = 4, 4          # ffn_dim = 256 -> 2 FFN grid tiles

    root = jax.random.PRNGKey(0)
    k_params, k_q, k_k = jax.random.split(root, 3)

    params = make_params(k_params, query_dim, key_dim, hidden_dim, ffn_multiplier)
    query_embeds = jax.random.normal(k_q, (batch, seq_len, query_dim), jnp.float32)
    key_embeds = jax.random.normal(k_k, (batch, num_patches, key_dim), jnp.float32)

    ref = _reference(query_embeds, key_embeds, params, num_heads=num_heads)

    # Exact-parity path (f32 MXU operands) -- exercises the tiled FFN axis (n_f=2).
    out_f32 = cross_attention_pallas(query_embeds, key_embeds, params,
                                     num_heads=num_heads,
                                     mxu_dtype=jnp.float32, ffn_tile=128)
    out_f32 = jax.block_until_ready(out_f32)
    assert out_f32.shape == (batch, seq_len, hidden_dim)
    assert jnp.allclose(out_f32, ref, atol=2e-3, rtol=2e-3), \
        float(jnp.max(jnp.abs(out_f32 - ref)))

    # Default fast path (bf16 MXU operands, f32 vector path).
    out_bf16 = cross_attention_pallas(query_embeds, key_embeds, params,
                                      num_heads=num_heads, ffn_tile=128)
    out_bf16 = jax.block_until_ready(out_bf16)
    assert jnp.allclose(out_bf16, ref, atol=1e-1, rtol=1e-1), \
        float(jnp.max(jnp.abs(out_bf16 - ref)))

    print("KERNEL_OK")
</pallas_src>

<mosaic_0001>
module attributes {stable_mosaic.version = 11 : i64} {
  func.func @_cross_attn_kernel(%arg0: i32, %arg1: i32, %arg2: memref<1x8x32xf32, #tpu.memory_space<vmem>>, %arg3: memref<1x16x48xf32, #tpu.memory_space<vmem>>, %arg4: memref<32x64xf32, #tpu.memory_space<vmem>>, %arg5: memref<48x64xf32, #tpu.memory_space<vmem>>, %arg6: memref<64x64xf32, #tpu.memory_space<vmem>>, %arg7: memref<64x128xf32, #tpu.memory_space<vmem>>, %arg8: memref<64x64xf32, #tpu.memory_space<vmem>>, %arg9: memref<64x128xf32, #tpu.memory_space<vmem>>, %arg10: memref<128x64xf32, #tpu.memory_space<vmem>>, %arg11: memref<11x64xf32, #tpu.memory_space<vmem>>, %arg12: memref<1x128xf32, #tpu.memory_space<vmem>>, %arg13: memref<1x8x64xf32, #tpu.memory_space<vmem>>, %arg14: memref<8x64xf32, #tpu.memory_space<vmem>>, %arg15: memref<8x64xf32, #tpu.memory_space<vmem>>) attributes {dimension_semantics = [#tpu.dimension_semantics<parallel>, #tpu.dimension_semantics<arbitrary>], iteration_bounds = array<i64: 2, 2>, scalar_prefetch = 0 : i64, scratch_operands = 2 : i64, tpu.core_type = #tpu.core_type<tc>, window_params = [{transform_indices = @transform_0, window_bounds = array<i64: 1, 8, 32>}, {transform_indices = @transform_1, window_bounds = array<i64: 1, 16, 48>}, {pipeline_mode = #tpu.pipeline_mode<synchronous>, transform_indices = @transform_2, window_bounds = array<i64: 32, 64>}, {pipeline_mode = #tpu.pipeline_mode<synchronous>, transform_indices = @transform_3, window_bounds = array<i64: 48, 64>}, {pipeline_mode = #tpu.pipeline_mode<synchronous>, transform_indices = @transform_4, window_bounds = array<i64: 64, 64>}, {pipeline_mode = #tpu.pipeline_mode<synchronous>, transform_indices = @transform_5, window_bounds = array<i64: 64, 128>}, {pipeline_mode = #tpu.pipeline_mode<synchronous>, transform_indices = @transform_6, window_bounds = array<i64: 64, 64>}, {transform_indices = @transform_7, window_bounds = array<i64: 64, 128>}, {transform_indices = @transform_8, window_bounds = array<i64: 128, 64>}, {pipeline_mode = #tpu.pipeline_mode<synchronous>, transform_indices = @transform_9, window_bounds = array<i64: 11, 64>}, {transform_indices = @transform_10, window_bounds = array<i64: 1, 128>}, {transform_indices = @transform_11, window_bounds = array<i64: 1, 8, 64>}]} {
    %c0 = arith.constant 0 : index
    %c0_0 = arith.constant 0 : index
    %0 = vector.load %arg11[%c0, %c0_0] : memref<11x64xf32, #tpu.memory_space<vmem>>, vector<11x64xf32>
    %c0_i32 = arith.constant 0 : i32
    %1 = arith.cmpi eq, %arg1, %c0_i32 : i32
    %2 = arith.extui %1 : i1 to i32
    %c0_i32_1 = arith.constant 0 : i32
    %3 = arith.cmpi ne, %2, %c0_i32_1 : i32
    scf.if %3 {
      %c0_17 = arith.constant 0 : index
      %c0_18 = arith.constant 0 : index
      %c0_19 = arith.constant 0 : index
      %20 = vector.load %arg2[%c0_17, %c0_18, %c0_19] : memref<1x8x32xf32, #tpu.memory_space<vmem>>, vector<1x8x32xf32>
      %21 = vector.shape_cast %20 : vector<1x8x32xf32> to vector<8x32xf32>
      %c0_20 = arith.constant 0 : index
      %c0_21 = arith.constant 0 : index
      %c0_22 = arith.constant 0 : index
      %22 = vector.load %arg3[%c0_20, %c0_21, %c0_22] : memref<1x16x48xf32, #tpu.memory_space<vmem>>, vector<1x16x48xf32>
      %23 = vector.shape_cast %22 : vector<1x16x48xf32> to vector<16x48xf32>
      %c0_23 = arith.constant 0 : index
      %c0_24 = arith.constant 0 : index
      %24 = vector.load %arg4[%c0_23, %c0_24] : memref<32x64xf32, #tpu.memory_space<vmem>>, vector<32x64xf32>
      %cst_25 = arith.constant dense<0.000000e+00> : vector<8x64xf32>
      %25 = tpu.matmul %21, %24, %cst_25 {dimension_numbers = #tpu.dot_dimension_numbers<[1], [0], [0], [1], [0, 0, 1, 1], [], []>} : vector<8x32xf32>, vector<32x64xf32>, vector<8x64xf32> -> vector<8x64xf32>
      %26 = vector.extract_strided_slice %0 {offsets = [0, 0], sizes = [1, 64], strides = [1, 1]} : vector<11x64xf32> to vector<1x64xf32>
      %27 = vector.broadcast %26 : vector<1x64xf32> to vector<8x64xf32>
      %28 = arith.addf %25, %27 : vector<8x64xf32>
      %c0_26 = arith.constant 0 : index
      %c0_27 = arith.constant 0 : index
      %29 = vector.load %arg5[%c0_26, %c0_27] : memref<48x64xf32, #tpu.memory_space<vmem>>, vector<48x64xf32>
      %cst_28 = arith.constant dense<0.000000e+00> : vector<16x64xf32>
      %30 = tpu.matmul %23, %29, %cst_28 {dimension_numbers = #tpu.dot_dimension_numbers<[1], [0], [0], [1], [0, 0, 1, 1], [], []>} : vector<16x48xf32>, vector<48x64xf32>, vector<16x64xf32> -> vector<16x64xf32>
      %31 = vector.extract_strided_slice %0 {offsets = [1, 0], sizes = [1, 64], strides = [1, 1]} : vector<11x64xf32> to vector<1x64xf32>
      %32 = vector.broadcast %31 : vector<1x64xf32> to vector<16x64xf32>
      %33 = arith.addf %30, %32 : vector<16x64xf32>
      %c0_29 = arith.constant 0 : index
      %c0_30 = arith.constant 0 : index
      %34 = vector.load %arg6[%c0_29, %c0_30] : memref<64x64xf32, #tpu.memory_space<vmem>>, vector<64x64xf32>
      %cst_31 = arith.constant dense<0.000000e+00> : vector<8x64xf32>
      %35 = tpu.matmul %28, %34, %cst_31 {dimension_numbers = #tpu.dot_dimension_numbers<[1], [0], [0], [1], [0, 0, 1, 1], [], []>} : vector<8x64xf32>, vector<64x64xf32>, vector<8x64xf32> -> vector<8x64xf32>
      %36 = vector.extract_strided_slice %0 {offsets = [2, 0], sizes = [1, 64], strides = [1, 1]} : vector<11x64xf32> to vector<1x64xf32>
      %37 = vector.broadcast %36 : vector<1x64xf32> to vector<8x64xf32>
      %38 = arith.addf %35, %37 : vector<8x64xf32>
      %cst_32 = arith.constant 2.500000e-01 : f32
      %39 = vector.broadcast %cst_32 : f32 to vector<8x64xf32>
      %40 = arith.mulf %38, %39 : vector<8x64xf32>
      %c0_33 = arith.constant 0 : index
      %c0_34 = arith.constant 0 : index
      %41 = vector.load %arg7[%c0_33, %c0_34] : memref<64x128xf32, #tpu.memory_space<vmem>>, vector<64x128xf32>
      %cst_35 = arith.constant dense<0.000000e+00> : vector<16x128xf32>
      %42 = tpu.matmul %33, %41, %cst_35 {dimension_numbers = #tpu.dot_dimension_numbers<[1], [0], [0], [1], [0, 0, 1, 1], [], []>} : vector<16x64xf32>, vector<64x128xf32>, vector<16x128xf32> -> vector<16x128xf32>
      %43 = vector.extract_strided_slice %42 {offsets = [0, 0], sizes = [16, 64], strides = [1, 1]} : vector<16x128xf32> to vector<16x64xf32>
      %44 = vector.extract_strided_slice %0 {offsets = [3, 0], sizes = [1, 64], strides = [1, 1]} : vector<11x64xf32> to vector<1x64xf32>
      %45 = vector.broadcast %44 : vector<1x64xf32> to vector<16x64xf32>
      %46 = arith.addf %43, %45 : vector<16x64xf32>
      %47 = vector.extract_strided_slice %42 {offsets = [0, 64], sizes = [16, 64], strides = [1, 1]} : vector<16x128xf32> to vector<16x64xf32>
      %48 = vector.extract_strided_slice %0 {offsets = [4, 0], sizes = [1, 64], strides = [1, 1]} : vector<11x64xf32> to vector<1x64xf32>
      %49 = vector.broadcast %48 : vector<1x64xf32> to vector<16x64xf32>
      %50 = arith.addf %47, %49 : vector<16x64xf32>
      %51 = vector.shape_cast %40 : vector<8x64xf32> to vector<8x4x16xf32>
      %52 = tpu.transpose %51, [1, 0, 2] : vector<8x4x16xf32> -> vector<4x8x16xf32>
      %53 = vector.shape_cast %46 : vector<16x64xf32> to vector<16x4x16xf32>
      %54 = tpu.transpose %53, [1, 0, 2] : vector<16x4x16xf32> -> vector<4x16x16xf32>
      %55 = vector.shape_cast %50 : vector<16x64xf32> to vector<16x4x16xf32>
      %56 = tpu.transpose %55, [1, 0, 2] : vector<16x4x16xf32> -> vector<4x16x16xf32>
      "tpu.trace_start"() <{level = 10 : i32, message = "hqd,hkd->hqk"}> : () -> ()
      %cst_36 = arith.constant dense<0.000000e+00> : vector<4x8x16xf32>
      %57 = tpu.matmul %52, %54, %cst_36 {dimension_numbers = #tpu.dot_dimension_numbers<[2], [2], [1], [1], [0, 0, 0, 1, 1, 1], [0], [0]>} : vector<4x8x16xf32>, vector<4x16x16xf32>, vector<4x8x16xf32> -> vector<4x8x16xf32>
      "tpu.trace_stop"() : () -> ()
      %cst_37 = arith.constant dense<0xFF800000> : vector<4x8xf32>
      %58 = vector.multi_reduction <maximumf>, %57, %cst_37 [2] : vector<4x8x16xf32> to vector<4x8xf32>
      %59 = vector.shape_cast %58 : vector<4x8xf32> to vector<4x8x1xf32>
      %60 = vector.broadcast %59 : vector<4x8x1xf32> to vector<4x8x16xf32>
      %61 = arith.subf %57, %60 : vector<4x8x16xf32>
      %62 = math.exp %61 : vector<4x8x16xf32>
      %cst_38 = arith.constant dense<0.000000e+00> : vector<4x8xf32>
      %63 = vector.multi_reduction <add>, %62, %cst_38 [2] : vector<4x8x16xf32> to vector<4x8xf32>
      %64 = vector.shape_cast %63 : vector<4x8xf32> to vector<4x8x1xf32>
      %65 = vector.broadcast %64 : vector<4x8x1xf32> to vector<4x8x16xf32>
      %66 = arith.divf %62, %65 : vector<4x8x16xf32>
      "tpu.trace_start"() <{level = 10 : i32, message = "hqk,hkd->hqd"}> : () -> ()
      %cst_39 = arith.constant dense<0.000000e+00> : vector<4x8x16xf32>
      %67 = tpu.matmul %66, %56, %cst_39 {dimension_numbers = #tpu.dot_dimension_numbers<[2], [1], [1], [2], [0, 0, 0, 1, 1, 2], [0], [0]>} : vector<4x8x16xf32>, vector<4x16x16xf32>, vector<4x8x16xf32> -> vector<4x8x16xf32>
      "tpu.trace_stop"() : () -> ()
      %68 = tpu.transpose %67, [1, 0, 2] : vector<4x8x16xf32> -> vector<8x4x16xf32>
      %69 = vector.shape_cast %68 : vector<8x4x16xf32> to vector<8x64xf32>
      %c0_40 = arith.constant 0 : index
      %c0_41 = arith.constant 0 : index
      %70 = vector.load %arg8[%c0_40, %c0_41] : memref<64x64xf32, #tpu.memory_space<vmem>>, vector<64x64xf32>
      %cst_42 = arith.constant dense<0.000000e+00> : vector<8x64xf32>
      %71 = tpu.matmul %69, %70, %cst_42 {dimension_numbers = #tpu.dot_dimension_numbers<[1], [0], [0], [1], [0, 0, 1, 1], [], []>} : vector<8x64xf32>, vector<64x64xf32>, vector<8x64xf32> -> vector<8x64xf32>
      %72 = vector.extract_strided_slice %0 {offsets = [5, 0], sizes = [1, 64], strides = [1, 1]} : vector<11x64xf32> to vector<1x64xf32>
      %73 = vector.broadcast %72 : vector<1x64xf32> to vector<8x64xf32>
      %74 = arith.addf %71, %73 : vector<8x64xf32>
      %75 = arith.addf %74, %28 : vector<8x64xf32>
      %76 = vector.extract_strided_slice %0 {offsets = [6, 0], sizes = [1, 64], strides = [1, 1]} : vector<11x64xf32> to vector<1x64xf32>
      %77 = vector.extract_strided_slice %0 {offsets = [7, 0], sizes = [1, 64], strides = [1, 1]} : vector<11x64xf32> to vector<1x64xf32>
      %cst_43 = arith.constant dense<0.000000e+00> : vector<8xf32>
      %78 = vector.multi_reduction <add>, %75, %cst_43 [1] : vector<8x64xf32> to vector<8xf32>
      %79 = vector.shape_cast %78 : vector<8xf32> to vector<8x1xf32>
      %cst_44 = arith.constant 6.400000e+01 : f32
      %80 = vector.broadcast %cst_44 : f32 to vector<8x1xf32>
      %81 = arith.divf %79, %80 : vector<8x1xf32>
      %82 = vector.broadcast %81 : vector<8x1xf32> to vector<8x64xf32>
      %83 = arith.subf %75, %82 : vector<8x64xf32>
      %84 = arith.mulf %83, %83 : vector<8x64xf32>
      %cst_45 = arith.constant dense<0.000000e+00> : vector<8xf32>
      %85 = vector.multi_reduction <add>, %84, %cst_45 [1] : vector<8x64xf32> to vector<8xf32>
      %86 = vector.shape_cast %85 : vector<8xf32> to vector<8x1xf32>
      %cst_46 = arith.constant 6.400000e+01 : f32
      %87 = vector.broadcast %cst_46 : f32 to vector<8x1xf32>
      %88 = arith.divf %86, %87 : vector<8x1xf32>
      %cst_47 = arith.constant 9.99999974E-6 : f32
      %89 = vector.broadcast %cst_47 : f32 to vector<8x1xf32>
      %90 = arith.addf %88, %89 : vector<8x1xf32>
      %91 = math.rsqrt %90 : vector<8x1xf32>
      %92 = vector.broadcast %91 : vector<8x1xf32> to vector<8x64xf32>
      %93 = arith.mulf %83, %92 : vector<8x64xf32>
      %94 = vector.broadcast %76 : vector<1x64xf32> to vector<8x64xf32>
      %95 = arith.mulf %93, %94 : vector<8x64xf32>
      %96 = vector.broadcast %77 : vector<1x64xf32> to vector<8x64xf32>
      %97 = arith.addf %95, %96 : vector<8x64xf32>
      %c0_48 = arith.constant 0 : index
      %c0_49 = arith.constant 0 : index
      %98 = vector.load %arg14[%c0_48, %c0_49] : memref<8x64xf32, #tpu.memory_space<vmem>>, vector<8x64xf32>
      tpu.vector_store %arg14[%c0_48, %c0_49], %97 {strides = array<i32>} : memref<8x64xf32, #tpu.memory_space<vmem>>, vector<8x64xf32>,
      %cst_50 = arith.constant 0.000000e+00 : f32
      %99 = vector.broadcast %cst_50 : f32 to vector<8x64xf32>
      %c0_51 = arith.constant 0 : index
      %c0_52 = arith.constant 0 : index
      %100 = vector.load %arg15[%c0_51, %c0_52] : memref<8x64xf32, #tpu.memory_space<vmem>>, vector<8x64xf32>
      tpu.vector_store %arg15[%c0_51, %c0_52], %99 {strides = array<i32>} : memref<8x64xf32, #tpu.memory_space<vmem>>, vector<8x64xf32>,
    } else {
    }
    %c0_2 = arith.constant 0 : index
    %c0_3 = arith.constant 0 : index
    %4 = vector.load %arg14[%c0_2, %c0_3] : memref<8x64xf32, #tpu.memory_space<vmem>>, vector<8x64xf32>
    %c0_4 = arith.constant 0 : index
    %c0_5 = arith.constant 0 : index
    %5 = vector.load %arg9[%c0_4, %c0_5] : memref<64x128xf32, #tpu.memory_space<vmem>>, vector<64x128xf32>
    %cst = arith.constant dense<0.000000e+00> : vector<8x128xf32>
    %6 = tpu.matmul %4, %5, %cst {dimension_numbers = #tpu.dot_dimension_numbers<[1], [0], [0], [1], [0, 0, 1, 1], [], []>} : vector<8x64xf32>, vector<64x128xf32>, vector<8x128xf32> -> vector<8x128xf32>
    %c0_6 = arith.constant 0 : index
    %c0_7 = arith.constant 0 : index
    %7 = vector.load %arg12[%c0_6, %c0_7] : memref<1x128xf32, #tpu.memory_space<vmem>>, vector<1x128xf32>
    %8 = vector.broadcast %7 : vector<1x128xf32> to vector<8x128xf32>
    %9 = arith.addf %6, %8 : vector<8x128xf32>
    %cst_8 = arith.constant 0.000000e+00 : f32
    %10 = vector.broadcast %cst_8 : f32 to vector<8x128xf32>
    %11 = arith.maximumf %9, %10 : vector<8x128xf32>
    %c0_9 = arith.constant 0 : index
    %c0_10 = arith.constant 0 : index
    %12 = vector.load %arg15[%c0_9, %c0_10] : memref<8x64xf32, #tpu.memory_space<vmem>>, vector<8x64xf32>
    %c0_11 = arith.constant 0 : index
    %c0_12 = arith.constant 0 : index
    %13 = vector.load %arg10[%c0_11, %c0_12] : memref<128x64xf32, #tpu.memory_space<vmem>>, vector<128x64xf32>
    %cst_13 = arith.constant dense<0.000000e+00> : vector<8x64xf32>
    %14 = tpu.matmul %11, %13, %cst_13 {dimension_numbers = #tpu.dot_dimension_numbers<[1], [0], [0], [1], [0, 0, 1, 1], [], []>} : vector<8x128xf32>, vector<128x64xf32>, vector<8x64xf32> -> vector<8x64xf32>
    %15 = arith.addf %12, %14 : vector<8x64xf32>
    %c0_14 = arith.constant 0 : index
    %c0_15 = arith.constant 0 : index
    %16 = vector.load %arg15[%c0_14, %c0_15] : memref<8x64xf32, #tpu.memory_space<vmem>>, vector<8x64xf32>
    tpu.vector_store %arg15[%c0_14, %c0_15], %15 {strides = array<i32>} : memref<8x64xf32, #tpu.memory_space<vmem>>, vector<8x64xf32>,
    %c1_i32 = arith.constant 1 : i32
    %17 = arith.cmpi eq, %arg1, %c1_i32 : i32
    %18 = arith.extui %17 : i1 to i32
    %c0_i32_16 = arith.constant 0 : i32
    %19 = arith.cmpi ne, %18, %c0_i32_16 : i32
    scf.if %19 {
      %c0_17 = arith.constant 0 : index
      %c0_18 = arith.constant 0 : index
      %20 = vector.load %arg15[%c0_17, %c0_18] : memref<8x64xf32, #tpu.memory_space<vmem>>, vector<8x64xf32>
      %21 = vector.extract_strided_slice %0 {offsets = [8, 0], sizes = [1, 64], strides = [1, 1]} : vector<11x64xf32> to vector<1x64xf32>
      %22 = vector.broadcast %21 : vector<1x64xf32> to vector<8x64xf32>
      %23 = arith.addf %20, %22 : vector<8x64xf32>
      %c0_19 = arith.constant 0 : index
      %c0_20 = arith.constant 0 : index
      %24 = vector.load %arg14[%c0_19, %c0_20] : memref<8x64xf32, #tpu.memory_space<vmem>>, vector<8x64xf32>
      %25 = arith.addf %23, %24 : vector<8x64xf32>
      %26 = vector.extract_strided_slice %0 {offsets = [9, 0], sizes = [1, 64], strides = [1, 1]} : vector<11x64xf32> to vector<1x64xf32>
      %27 = vector.extract_strided_slice %0 {offsets = [10, 0], sizes = [1, 64], strides = [1, 1]} : vector<11x64xf32> to vector<1x64xf32>
      %cst_21 = arith.constant dense<0.000000e+00> : vector<8xf32>
      %28 = vector.multi_reduction <add>, %25, %cst_21 [1] : vector<8x64xf32> to vector<8xf32>
      %29 = vector.shape_cast %28 : vector<8xf32> to vector<8x1xf32>
      %cst_22 = arith.constant 6.400000e+01 : f32
      %30 = vector.broadcast %cst_22 : f32 to vector<8x1xf32>
      %31 = arith.divf %29, %30 : vector<8x1xf32>
      %32 = vector.broadcast %31 : vector<8x1xf32> to vector<8x64xf32>
      %33 = arith.subf %25, %32 : vector<8x64xf32>
      %34 = arith.mulf %33, %33 : vector<8x64xf32>
      %cst_23 = arith.constant dense<0.000000e+00> : vector<8xf32>
      %35 = vector.multi_reduction <add>, %34, %cst_23 [1] : vector<8x64xf32> to vector<8xf32>
      %36 = vector.shape_cast %35 : vector<8xf32> to vector<8x1xf32>
      %cst_24 = arith.constant 6.400000e+01 : f32
      %37 = vector.broadcast %cst_24 : f32 to vector<8x1xf32>
      %38 = arith.divf %36, %37 : vector<8x1xf32>
      %cst_25 = arith.constant 9.99999974E-6 : f32
      %39 = vector.broadcast %cst_25 : f32 to vector<8x1xf32>
      %40 = arith.addf %38, %39 : vector<8x1xf32>
      %41 = math.rsqrt %40 : vector<8x1xf32>
      %42 = vector.broadcast %41 : vector<8x1xf32> to vector<8x64xf32>
      %43 = arith.mulf %33, %42 : vector<8x64xf32>
      %44 = vector.broadcast %26 : vector<1x64xf32> to vector<8x64xf32>
      %45 = arith.mulf %43, %44 : vector<8x64xf32>
      %46 = vector.broadcast %27 : vector<1x64xf32> to vector<8x64xf32>
      %47 = arith.addf %45, %46 : vector<8x64xf32>
      %c0_26 = arith.constant 0 : index
      %c0_27 = arith.constant 0 : index
      %c0_28 = arith.constant 0 : index
      %48 = vector.load %arg13[%c0_26, %c0_27, %c0_28] : memref<1x8x64xf32, #tpu.memory_space<vmem>>, vector<1x8x64xf32>
      %49 = vector.shape_cast %48 : vector<1x8x64xf32> to vector<8x64xf32>
      %50 = vector.shape_cast %47 : vector<8x64xf32> to vector<1x8x64xf32>
      tpu.vector_store %arg13[%c0_26, %c0_27, %c0_28], %50 {strides = array<i32>} : memref<1x8x64xf32, #tpu.memory_space<vmem>>, vector<1x8x64xf32>,
    } else {
    }
    return
  }
  func.func @transform_0(%arg0: i32, %arg1: i32) -> (i32, i32, i32) {
    %c0_i32 = arith.constant 0 : i32
    %c0_i32_0 = arith.constant 0 : i32
    %c0_i32_1 = arith.constant 0 : i32
    return %arg0, %c0_i32, %c0_i32_0 : i32, i32, i32
  }
  func.func @transform_1(%arg0: i32, %arg1: i32) -> (i32, i32, i32) {
    %c0_i32 = arith.constant 0 : i32
    %c0_i32_0 = arith.constant 0 : i32
    %c0_i32_1 = arith.constant 0 : i32
    return %arg0, %c0_i32, %c0_i32_0 : i32, i32, i32
  }
  func.func @transform_2(%arg0: i32, %arg1: i32) -> (i32, i32) {
    %c0_i32 = arith.constant 0 : i32
    %c0_i32_0 = arith.constant 0 : i32
    %c0_i32_1 = arith.constant 0 : i32
    return %c0_i32, %c0_i32_0 : i32, i32
  }
  func.func @transform_3(%arg0: i32, %arg1: i32) -> (i32, i32) {
    %c0_i32 = arith.constant 0 : i32
    %c0_i32_0 = arith.constant 0 : i32
    %c0_i32_1 = arith.constant 0 : i32
    return %c0_i32, %c0_i32_0 : i32, i32
  }
  func.func @transform_4(%arg0: i32, %arg1: i32) -> (i32, i32) {
    %c0_i32 = arith.constant 0 : i32
    %c0_i32_0 = arith.constant 0 : i32
    %c0_i32_1 = arith.constant 0 : i32
    return %c0_i32, %c0_i32_0 : i32, i32
  }
  func.func @transform_5(%arg0: i32, %arg1: i32) -> (i32, i32) {
    %c0_i32 = arith.constant 0 : i32
    %c0_i32_0 = arith.constant 0 : i32
    %c0_i32_1 = arith.constant 0 : i32
    return %c0_i32, %c0_i32_0 : i32, i32
  }
  func.func @transform_6(%arg0: i32, %arg1: i32) -> (i32, i32) {
    %c0_i32 = arith.constant 0 : i32
    %c0_i32_0 = arith.constant 0 : i32
    %c0_i32_1 = arith.constant 0 : i32
    return %c0_i32, %c0_i32_0 : i32, i32
  }
  func.func @transform_7(%arg0: i32, %arg1: i32) -> (i32, i32) {
    %c0_i32 = arith.constant 0 : i32
    %c0_i32_0 = arith.constant 0 : i32
    return %c0_i32, %arg1 : i32, i32
  }
  func.func @transform_8(%arg0: i32, %arg1: i32) -> (i32, i32) {
    %c0_i32 = arith.constant 0 : i32
    %c0_i32_0 = arith.constant 0 : i32
    return %arg1, %c0_i32 : i32, i32
  }
  func.func @transform_9(%arg0: i32, %arg1: i32) -> (i32, i32) {
    %c0_i32 = arith.constant 0 : i32
    %c0_i32_0 = arith.constant 0 : i32
    %c0_i32_1 = arith.constant 0 : i32
    return %c0_i32, %c0_i32_0 : i32, i32
  }
  func.func @transform_10(%arg0: i32, %arg1: i32) -> (i32, i32) {
    %c0_i32 = arith.constant 0 : i32
    %c0_i32_0 = arith.constant 0 : i32
    return %c0_i32, %arg1 : i32, i32
  }
  func.func @transform_11(%arg0: i32, %arg1: i32) -> (i32, i32, i32) {
    %c0_i32 = arith.constant 0 : i32
    %c0_i32_0 = arith.constant 0 : i32
    %c0_i32_1 = arith.constant 0 : i32
    return %arg0, %c0_i32, %c0_i32_0 : i32, i32, i32
  }
}

</mosaic_0001>

<llo_original>
// kernel: tpu_custom_call.1
$region0: #{tpu_custom_call.1}
  #allocation0 [shape = 'u32[]', space=smem, size = 0x4, offset = 0x4, fixed_abs, tag = 'smem constant byte address 0x4 - core index']
  #allocation1 [shape = 'u32[144,128]{1,0:T(1,128)}', space=vmem, size = 0x12000, scoped, tag = 'internal scratch']
  #allocation2 [shape = 'f32[8,64]{1,0:T(8,128)}', space=vmem, size = 0x1000, scoped, tag = 'scratch operand']
  #allocation3 [shape = 'f32[8,64]{1,0:T(8,128)}', space=vmem, size = 0x1000, scoped, tag = 'scratch operand']
  %s0 = inlined_call_operand.vmem [shape: f32[2,8,32], index: 0, kind: input, shape index: {}]
  %s1 = inlined_call_operand.hbm [shape: f32[2,16,48], index: 1, kind: input, shape index: {}]
  %s2 = inlined_call_operand.hbm [shape: f32[32,64], index: 2, kind: input, shape index: {}]
  %s3 = inlined_call_operand.vmem [shape: f32[48,64], index: 3, kind: input, shape index: {}]
  %s4 = inlined_call_operand.vmem [shape: f32[64,64], index: 4, kind: input, shape index: {}]
  %s5 = inlined_call_operand.vmem [shape: f32[64,128], index: 5, kind: input, shape index: {}]
  %s6 = inlined_call_operand.vmem [shape: f32[64,64], index: 6, kind: input, shape index: {}]
  %s7 = inlined_call_operand.vmem [shape: f32[64,256], index: 7, kind: input, shape index: {}]
  %s8 = inlined_call_operand.vmem [shape: f32[256,64], index: 8, kind: input, shape index: {}]
  %s9 = inlined_call_operand.vmem [shape: f32[11,64], index: 9, kind: input, shape index: {}]
  %s10 = inlined_call_operand.vmem [shape: f32[1,256], index: 10, kind: input, shape index: {}]
  %s11 = inlined_call_operand.hbm [shape: f32[2,8,64], index: 11, kind: output, shape index: {}]
  %s12 = sld [smem:[#allocation0]]
  $region131: #{tpu_custom_call.1} parent=0
    _
  %s14 = ssub.s32 1, %s12
  %s15 = scalar_select 0, %s14, %s12
  $region1: #{tpu_custom_call.1} parent=0
    #allocation4 [shape = 'u8[16384]{0}', space=vmem, size = 0x4000, scoped, tag = 'input window, operand 1']
    #allocation5 [shape = 's32[2]{0}', space=sflag, size = 0x8, scoped, tag = 'scoped memory for tpu_custom_call.1']
    #allocation6 [shape = 's32[2]{0}', space=sflag, size = 0x8, scoped, tag = 'scoped memory for tpu_custom_call.1']
    #allocation7 [shape = 'u8[16384]{0}', space=vmem, size = 0x4000, scoped, tag = 'input window, operand 2, single buffered']
    #allocation8 [shape = 's32[1]{0}', space=sflag, size = 0x4, scoped, tag = 'scoped memory for tpu_custom_call.1']
    #allocation9 [shape = 'u8[65536]{0}', space=vmem, size = 0x10000, scoped, tag = 'input window, operand 7']
    #allocation10 [shape = 'u8[8192]{0}', space=vmem, size = 0x2000, scoped, tag = 'output window, operand 0']
    %16 = vsyncpa [#allocation5], 0
    %s17 = scalar_lea.sflag [#allocation5], 1
    %18 = vsyncpa %s17, 0
    %19 = vsyncpa [#allocation8], 0
    %20 = vsyncpa [#allocation6], 0
    %s21 = scalar_lea.sflag [#allocation6], 1
    %22 = vsyncpa %s21, 0
    loop: start=0, step=1, limit=6
    $region2: #{tpu_custom_call.1} parent=1 // loop_pre_header
      _
    $region3: #{tpu_custom_call.1} parent=1 // loop_header
      %s24 = sphi 0, %s28
      %p25 = scmp.ge.s32.totalorder %s24, 6
      %s31 = sphi 0, %s43
      %s32 = sphi 0, %s39
      %s33 = sphi 0, %s31
      %s34 = sphi 0, %s32
      %s35 = sphi 0, %s33
      %s36 = sphi 0, %s34
      %s46 = sphi 0, %s48
      %s49 = sphi 0, %s46
      %s50 = sphi 0, %s49
      %s66 = sphi 0, %s50
      %s72 = sphi 0, %s74
      %s75 = sphi 0, %s72
      %s76 = sphi 0, %s75
      %s92 = sphi 0, %s76
      %s96 = sphi 0, %s96
      %s98 = sphi 0, %s96
      %s99 = sphi 0, %s98
      %s113 = sphi 0, %s99
      %s117 = sphi 0, %s117
      %s119 = sphi 0, %s117
      %s120 = sphi 0, %s119
      %s134 = sphi 0, %s120
      %s138 = sphi 0, %s138
      %s140 = sphi 0, %s138
      %s141 = sphi 0, %s140
      %s155 = sphi 0, %s141
      %s159 = sphi 0, %s159
      %s161 = sphi 0, %s159
      %s162 = sphi 0, %s161
      %s176 = sphi 0, %s162
      %s180 = sphi 0, %s180
      %s182 = sphi 0, %s180
      %s183 = sphi 0, %s182
      %s197 = sphi 0, %s183
      %s203 = sphi 0, %s205
      %s206 = sphi 0, %s203
      %s207 = sphi 0, %s206
      %s223 = sphi 0, %s207
      %s229 = sphi 0, %s231
      %s232 = sphi 0, %s229
      %s233 = sphi 0, %s232
      %s249 = sphi 0, %s233
      %s253 = sphi 0, %s253
      %s255 = sphi 0, %s253
      %s256 = sphi 0, %s255
      %s270 = sphi 0, %s256
      %s276 = sphi 0, %s278
      %s279 = sphi 0, %s276
      %s280 = sphi 0, %s279
      %s296 = sphi 0, %s280
      %s302 = sphi 0, %s304
      %s305 = sphi 0, %s302
      %s306 = sphi 0, %s305
      %s322 = sphi 0, %s306
    $region4: #{tpu_custom_call.1} parent=1 // loop_header_branch
      %27 = sbr.rel (%p25) target = $region8
    $region5: #{tpu_custom_call.1} parent=1 // loop_body
      %s29 = ssub.s32 %s24, 1
      %s30 = ssub.s32 %s24, 2
      %s37 = sadd.s32 1, %s32
      %p38 = scmp.ge.s32.totalorder %s37, 2
      %s39 = scalar_select %p38, 0, %s37
      %s40 = sadd.s32 1, %s31
      %s41 = scalar_select %p38, %s40, %s31
      %p42 = scmp.ge.s32.totalorder %s41, 2
      %s43 = scalar_select %p42, 0, %s41
      %s44 = ssub.s32 %s31, %s43
      %p45 = scmp.eq.s32.totalorder %s44, 0
      %s47 = sadd.s32 %s46, 1
      %s48 = scalar_select %p45, %s46, %s47
      %p51 = pneg %p45
      %p52 = scmp.eq.s32.totalorder %s24, 3
      %p53 = por %p51, %p52
      %p54 = scmp.ne.s32.totalorder %s46, %s49
      %p55 = scmp.eq.s32.totalorder %s24, 0
      %p56 = por %p54, %p55
      %p57 = scmp.ne.s32.totalorder %s46, %s49
      %p58 = scmp.eq.s32.totalorder %s29, 3
      %p59 = por %p57, %p58
      %p60 = scmp.ne.s32.totalorder %s49, %s50
      %p61 = scmp.eq.s32.totalorder %s29, 0
      %p62 = por %p60, %p61
      %p63 = scmp.ne.s32.totalorder %s49, %s50
      %p64 = scmp.eq.s32.totalorder %s30, 3
      %p65 = por %p63, %p64
      %p67 = scmp.ne.s32.totalorder %s50, %s66
      %p68 = scmp.eq.s32.totalorder %s30, 0
      %p69 = por %p67, %p68
      %s70 = ssub.s32 %s31, %s43
      %p71 = scmp.eq.s32.totalorder %s70, 0
      %s73 = sadd.s32 %s72, 1
      %s74 = scalar_select %p71, %s72, %s73
      %p77 = pneg %p71
      %p78 = scmp.eq.s32.totalorder %s24, 3
      %p79 = por %p77, %p78
      %p80 = scmp.ne.s32.totalorder %s72, %s75
      %p81 = scmp.eq.s32.totalorder %s24, 0
      %p82 = por %p80, %p81
      %p83 = scmp.ne.s32.totalorder %s72, %s75
      %p84 = scmp.eq.s32.totalorder %s29, 3
      %p85 = por %p83, %p84
      %p86 = scmp.ne.s32.totalorder %s75, %s76
      %p87 = scmp.eq.s32.totalorder %s29, 0
      %p88 = por %p86, %p87
      %p89 = scmp.ne.s32.totalorder %s75, %s76
      %p90 = scmp.eq.s32.totalorder %s30, 3
      %p91 = por %p89, %p90
      %p93 = scmp.ne.s32.totalorder %s76, %s92
      %p94 = scmp.eq.s32.totalorder %s30, 0
      %p95 = por %p93, %p94
      %s97 = sadd.s32 %s96, 1
      %p100 = scmp.eq.s32.totalorder %s24, 3
      %p101 = scmp.ne.s32.totalorder %s96, %s98
      %p102 = scmp.eq.s32.totalorder %s24, 0
      %p103 = por %p101, %p102
      %p104 = scmp.ne.s32.totalorder %s96, %s98
      %p105 = scmp.eq.s32.totalorder %s29, 3
      %p106 = por %p104, %p105
      %p107 = scmp.ne.s32.totalorder %s98, %s99
      %p108 = scmp.eq.s32.totalorder %s29, 0
      %p109 = por %p107, %p108
      %p110 = scmp.ne.s32.totalorder %s98, %s99
      %p111 = scmp.eq.s32.totalorder %s30, 3
      %p112 = por %p110, %p111
      %p114 = scmp.ne.s32.totalorder %s99, %s113
      %p115 = scmp.eq.s32.totalorder %s30, 0
      %p116 = por %p114, %p115
      %s118 = sadd.s32 %s117, 1
      %p121 = scmp.eq.s32.totalorder %s24, 3
      %p122 = scmp.ne.s32.totalorder %s117, %s119
      %p123 = scmp.eq.s32.totalorder %s24, 0
      %p124 = por %p122, %p123
      %p125 = scmp.ne.s32.totalorder %s117, %s119
      %p126 = scmp.eq.s32.totalorder %s29, 3
      %p127 = por %p125, %p126
      %p128 = scmp.ne.s32.totalorder %s119, %s120
      %p129 = scmp.eq.s32.totalorder %s29, 0
      %p130 = por %p128, %p129
      %p131 = scmp.ne.s32.totalorder %s119, %s120
      %p132 = scmp.eq.s32.totalorder %s30, 3
      %p133 = por %p131, %p132
      %p135 = scmp.ne.s32.totalorder %s120, %s134
      %p136 = scmp.eq.s32.totalorder %s30, 0
      %p137 = por %p135, %p136
      %s139 = sadd.s32 %s138, 1
      %p142 = scmp.eq.s32.totalorder %s24, 3
      %p143 = scmp.ne.s32.totalorder %s138, %s140
      %p144 = scmp.eq.s32.totalorder %s24, 0
      %p145 = por %p143, %p144
      %p146 = scmp.ne.s32.totalorder %s138, %s140
      %p147 = scmp.eq.s32.totalorder %s29, 3
      %p148 = por %p146, %p147
      %p149 = scmp.ne.s32.totalorder %s140, %s141
      %p150 = scmp.eq.s32.totalorder %s29, 0
      %p151 = por %p149, %p150
      %p152 = scmp.ne.s32.totalorder %s140, %s141
      %p153 = scmp.eq.s32.totalorder %s30, 3
      %p154 = por %p152, %p153
      %p156 = scmp.ne.s32.totalorder %s141, %s155
      %p157 = scmp.eq.s32.totalorder %s30, 0
      %p158 = por %p156, %p157
      %s160 = sadd.s32 %s159, 1
      %p163 = scmp.eq.s32.totalorder %s24, 3
      %p164 = scmp.ne.s32.totalorder %s159, %s161
      %p165 = scmp.eq.s32.totalorder %s24, 0
      %p166 = por %p164, %p165
      %p167 = scmp.ne.s32.totalorder %s159, %s161
      %p168 = scmp.eq.s32.totalorder %s29, 3
      %p169 = por %p167, %p168
      %p170 = scmp.ne.s32.totalorder %s161, %s162
      %p171 = scmp.eq.s32.totalorder %s29, 0
      %p172 = por %p170, %p171
      %p173 = scmp.ne.s32.totalorder %s161, %s162
      %p174 = scmp.eq.s32.totalorder %s30, 3
      %p175 = por %p173, %p174
      %p177 = scmp.ne.s32.totalorder %s162, %s176
      %p178 = scmp.eq.s32.totalorder %s30, 0
      %p179 = por %p177, %p178
      %s181 = sadd.s32 %s180, 1
      %p184 = scmp.eq.s32.totalorder %s24, 3
      %p185 = scmp.ne.s32.totalorder %s180, %s182
      %p186 = scmp.eq.s32.totalorder %s24, 0
      %p187 = por %p185, %p186
      %p188 = scmp.ne.s32.totalorder %s180, %s182
      %p189 = scmp.eq.s32.totalorder %s29, 3
      %p190 = por %p188, %p189
      %p191 = scmp.ne.s32.totalorder %s182, %s183
      %p192 = scmp.eq.s32.totalorder %s29, 0
      %p193 = por %p191, %p192
      %p194 = scmp.ne.s32.totalorder %s182, %s183
      %p195 = scmp.eq.s32.totalorder %s30, 3
      %p196 = por %p194, %p195
      %p198 = scmp.ne.s32.totalorder %s183, %s197
      %p199 = scmp.eq.s32.totalorder %s30, 0
      %p200 = por %p198, %p199
      %s201 = ssub.s32 %s32, %s39
      %p202 = scmp.eq.s32.totalorder %s201, 0
      %s204 = sadd.s32 %s203, 1
      %s205 = scalar_select %p202, %s203, %s204
      %p208 = pneg %p202
      %p209 = scmp.eq.s32.totalorder %s24, 3
      %p210 = por %p208, %p209
      %p211 = scmp.ne.s32.totalorder %s203, %s206
      %p212 = scmp.eq.s32.totalorder %s24, 0
      %p213 = por %p211, %p212
      %p214 = scmp.ne.s32.totalorder %s203, %s206
      %p215 = scmp.eq.s32.totalorder %s29, 3
      %p216 = por %p214, %p215
      %p217 = scmp.ne.s32.totalorder %s206, %s207
      %p218 = scmp.eq.s32.totalorder %s29, 0
      %p219 = por %p217, %p218
      %p220 = scmp.ne.s32.totalorder %s206, %s207
      %p221 = scmp.eq.s32.totalorder %s30, 3
      %p222 = por %p220, %p221
      %p224 = scmp.ne.s32.totalorder %s207, %s223
      %p225 = scmp.eq.s32.totalorder %s30, 0
      %p226 = por %p224, %p225
      %s227 = ssub.s32 %s32, %s39
      %p228 = scmp.eq.s32.totalorder %s227, 0
      %s230 = sadd.s32 %s229, 1
      %s231 = scalar_select %p228, %s229, %s230
      %p234 = pneg %p228
      %p235 = scmp.eq.s32.totalorder %s24, 3
      %p236 = por %p234, %p235
      %p237 = scmp.ne.s32.totalorder %s229, %s232
      %p238 = scmp.eq.s32.totalorder %s24, 0
      %p239 = por %p237, %p238
      %p240 = scmp.ne.s32.totalorder %s229, %s232
      %p241 = scmp.eq.s32.totalorder %s29, 3
      %p242 = por %p240, %p241
      %p243 = scmp.ne.s32.totalorder %s232, %s233
      %p244 = scmp.eq.s32.totalorder %s29, 0
      %p245 = por %p243, %p244
      %p246 = scmp.ne.s32.totalorder %s232, %s233
      %p247 = scmp.eq.s32.totalorder %s30, 3
      %p248 = por %p246, %p247
      %p250 = scmp.ne.s32.totalorder %s233, %s249
      %p251 = scmp.eq.s32.totalorder %s30, 0
      %p252 = por %p250, %p251
      %s254 = sadd.s32 %s253, 1
      %p257 = scmp.eq.s32.totalorder %s24, 3
      %p258 = scmp.ne.s32.totalorder %s253, %s255
      %p259 = scmp.eq.s32.totalorder %s24, 0
      %p260 = por %p258, %p259
      %p261 = scmp.ne.s32.totalorder %s253, %s255
      %p262 = scmp.eq.s32.totalorder %s29, 3
      %p263 = por %p261, %p262
      %p264 = scmp.ne.s32.totalorder %s255, %s256
      %p265 = scmp.eq.s32.totalorder %s29, 0
      %p266 = por %p264, %p265
      %p267 = scmp.ne.s32.totalorder %s255, %s256
      %p268 = scmp.eq.s32.totalorder %s30, 3
      %p269 = por %p267, %p268
      %p271 = scmp.ne.s32.totalorder %s256, %s270
      %p272 = scmp.eq.s32.totalorder %s30, 0
      %p273 = por %p271, %p272
      %s274 = ssub.s32 %s32, %s39
      %p275 = scmp.eq.s32.totalorder %s274, 0
      %s277 = sadd.s32 %s276, 1
      %s278 = scalar_select %p275, %s276, %s277
      %p281 = pneg %p275
      %p282 = scmp.eq.s32.totalorder %s24, 3
      %p283 = por %p281, %p282
      %p284 = scmp.ne.s32.totalorder %s276, %s279
      %p285 = scmp.eq.s32.totalorder %s24, 0
      %p286 = por %p284, %p285
      %p287 = scmp.ne.s32.totalorder %s276, %s279
      %p288 = scmp.eq.s32.totalorder %s29, 3
      %p289 = por %p287, %p288
      %p290 = scmp.ne.s32.totalorder %s279, %s280
      %p291 = scmp.eq.s32.totalorder %s29, 0
      %p292 = por %p290, %p291
      %p293 = scmp.ne.s32.totalorder %s279, %s280
      %p294 = scmp.eq.s32.totalorder %s30, 3
      %p295 = por %p293, %p294
      %p297 = scmp.ne.s32.totalorder %s280, %s296
      %p298 = scmp.eq.s32.totalorder %s30, 0
      %p299 = por %p297, %p298
      %s300 = ssub.s32 %s31, %s43
      %p301 = scmp.eq.s32.totalorder %s300, 0
      %s303 = sadd.s32 %s302, 1
      %s304 = scalar_select %p301, %s302, %s303
      %p307 = pneg %p301
      %p308 = scmp.eq.s32.totalorder %s24, 3
      %p309 = por %p307, %p308
      %p310 = scmp.ne.s32.totalorder %s302, %s305
      %p311 = scmp.eq.s32.totalorder %s24, 0
      %p312 = por %p310, %p311
      %p313 = scmp.ne.s32.totalorder %s302, %s305
      %p314 = scmp.eq.s32.totalorder %s29, 3
      %p315 = por %p313, %p314
      %p316 = scmp.ne.s32.totalorder %s305, %s306
      %p317 = scmp.eq.s32.totalorder %s29, 0
      %p318 = por %p316, %p317
      %p319 = scmp.ne.s32.totalorder %s305, %s306
      %p320 = scmp.eq.s32.totalorder %s30, 3
      %p321 = por %p319, %p320
      %p323 = scmp.ne.s32.totalorder %s306, %s322
      %p324 = scmp.eq.s32.totalorder %s30, 0
      %p325 = por %p323, %p324
      %p326 = scmp.le.s32.totalorder 1, %s24
      %p327 = scmp.lt.s32.totalorder %s24, 5
      %p328 = pnand %p326, %p327
      %p329 = pneg %p328
      // Predicated region
      $region9: #{tpu_custom_call.1} parent=5 // pred_check
        _
      $region10: #{tpu_custom_call.1} parent=5 // pred_check_branch
        %331 = sbr.rel (%p328) target = $region12
      $region11: #{tpu_custom_call.1} parent=5 // pred_region
        %s332 = ssub.s32 %s24, 1
        // Predicated region
        $region13: #{tpu_custom_call.1} parent=11 // pred_check
          %p333 = pneg %p109
        $region14: #{tpu_custom_call.1} parent=11 // pred_check_branch
          %335 = sbr.rel (%p333) target = $region16
        $region15: #{tpu_custom_call.1} parent=11 // pred_region
          %s337 = ssub.s32 512, 512
          %338 = vsyncadd [#allocation8], %s337
          %s339 = sshll.u32 [#allocation7], 4
          %s340 = int_to_ptr.vmem [resolvable:$true] %s339
          %345 = dma.hbm_to_vmem [thread:$0]  %s2, 512, %s340, [#allocation8], 128, 128, 8
        $region16: #{tpu_custom_call.1} parent=11 // pred_fallthru
          _
        // Predicated region
        $region17: #{tpu_custom_call.1} parent=11 // pred_check
          %p346 = pneg %p130
        $region18: #{tpu_custom_call.1} parent=11 // pred_check_branch
          %348 = sbr.rel (%p346) target = $region20
        $region19: #{tpu_custom_call.1} parent=11 // pred_region
          _
        $region20: #{tpu_custom_call.1} parent=11 // pred_fallthru
          _
        // Predicated region
        $region21: #{tpu_custom_call.1} parent=11 // pred_check
          %p349 = pneg %p151
        $region22: #{tpu_custom_call.1} parent=11 // pred_check_branch
          %351 = sbr.rel (%p349) target = $region24
        $region23: #{tpu_custom_call.1} parent=11 // pred_region
          _
        $region24: #{tpu_custom_call.1} parent=11 // pred_fallthru
          _
        // Predicated region
        $region25: #{tpu_custom_call.1} parent=11 // pred_check
          %p352 = pneg %p172
        $region26: #{tpu_custom_call.1} parent=11 // pred_check_branch
          %354 = sbr.rel (%p352) target = $region28
        $region27: #{tpu_custom_call.1} parent=11 // pred_region
          _
        $region28: #{tpu_custom_call.1} parent=11 // pred_fallthru
          _
        // Predicated region
        $region29: #{tpu_custom_call.1} parent=11 // pred_check
          %p355 = pneg %p193
        $region30: #{tpu_custom_call.1} parent=11 // pred_check_branch
          %357 = sbr.rel (%p355) target = $region32
        $region31: #{tpu_custom_call.1} parent=11 // pred_region
          _
        $region32: #{tpu_custom_call.1} parent=11 // pred_fallthru
          _
        // Predicated region
        $region33: #{tpu_custom_call.1} parent=11 // pred_check
          %p358 = pneg %p266
        $region34: #{tpu_custom_call.1} parent=11 // pred_check_branch
          %360 = sbr.rel (%p358) target = $region36
        $region35: #{tpu_custom_call.1} parent=11 // pred_region
          _
        $region36: #{tpu_custom_call.1} parent=11 // pred_fallthru
          _
      $region12: #{tpu_custom_call.1} parent=5 // pred_fallthru
        _
      %p361 = scmp.lt.s32.totalorder %s24, 4
      // Predicated region
      $region37: #{tpu_custom_call.1} parent=5 // pred_check
        %p362 = pneg %p361
      $region38: #{tpu_custom_call.1} parent=5 // pred_check_branch
        %364 = sbr.rel (%p362) target = $region40
      $region39: #{tpu_custom_call.1} parent=5 // pred_region
        // Predicated region
        $region41: #{tpu_custom_call.1} parent=39 // pred_check
          %p365 = pneg %p56
        $region42: #{tpu_custom_call.1} parent=39 // pred_check_branch
          %367 = sbr.rel (%p365) target = $region44
        $region43: #{tpu_custom_call.1} parent=39 // pred_region
          %p368 = scmp.lt.s32.totalorder %s31, 1
          %s369 = scalar_select %p368, %s31, 1
          %s370 = smul.addr %s369, 8
          %s371 = scalar_lea.vmem %s0, %s370
        $region44: #{tpu_custom_call.1} parent=39 // pred_fallthru
          _
        // Predicated region
        $region45: #{tpu_custom_call.1} parent=39 // pred_check
          %p372 = pneg %p82
        $region46: #{tpu_custom_call.1} parent=39 // pred_check_branch
          %374 = sbr.rel (%p372) target = $region48
        $region47: #{tpu_custom_call.1} parent=39 // pred_region
          %s375 = sand.u32 %s72, 1
          %s376 = scalar_lea.sflag [#allocation5], %s375
          %s377 = sand.u32 %s72, 1
          %s378 = smul.addr %s377, 16
          %s379 = scalar_lea.vmem [#allocation4], %s378
          %s381 = ssub.s32 256, 256
          %382 = vsyncadd %s376, %s381
          %s383 = smul.addr %s31, 2
          %s384 = smul.addr %s383, 128
          %s385 = scalar_lea.hbm %s1, %s384
          %s386 = sshll.u32 %s379, 4
          %s387 = int_to_ptr.vmem [resolvable:$true] %s386
          %392 = dma.hbm_to_vmem [thread:$0]  %s385, 256, %s387, %s376, 128, 128, 8
        $region48: #{tpu_custom_call.1} parent=39 // pred_fallthru
          _
        // Predicated region
        $region49: #{tpu_custom_call.1} parent=39 // pred_check
          %p393 = pneg %p213
        $region50: #{tpu_custom_call.1} parent=39 // pred_check_branch
          %395 = sbr.rel (%p393) target = $region52
        $region51: #{tpu_custom_call.1} parent=39 // pred_region
          %s396 = sand.u32 %s203, 1
          %s397 = sand.u32 %s203, 1
          %s398 = smul.addr %s397, 64
          %s399 = scalar_lea.vmem [#allocation9], %s398
          %s400 = smul.addr %s32, 8
          %s401 = scalar_lea.vmem %s7, %s400
          // Predicated region
          $region53: #{tpu_custom_call.1} parent=51 // pred_check
            _
          $region54: #{tpu_custom_call.1} parent=51 // pred_check_branch
            %403 = sbr.rel (0) target = $region56
          $region55: #{tpu_custom_call.1} parent=51 // pred_region
            // Predicated region
            $region57: #{tpu_custom_call.1} parent=55 // pred_check
              _
            $region58: #{tpu_custom_call.1} parent=55 // pred_check_branch
              %405 = sbr.rel (0) target = $region60
            $region59: #{tpu_custom_call.1} parent=55 // pred_region
              // Predicated region
              $region72: #{tpu_custom_call.1} parent=59 // pred_check
                _
              $region73: #{tpu_custom_call.1} parent=59 // pred_check_branch
                %434 = sbr.rel (0) target = $region75
              $region74: #{tpu_custom_call.1} parent=59 // pred_region
                loop: start=0, step=1, limit=1
                $region76: #{tpu_custom_call.1} parent=74 // loop_pre_header
                  _
                $region77: #{tpu_custom_call.1} parent=74 // loop_header
                  %s436 = sphi 0, %s440
                  %p437 = scmp.ge.s32.totalorder %s436, 1
                  %s441 = sphi %s401, %s401
                  %s442 = sphi %s399, %s399
                $region78: #{tpu_custom_call.1} parent=74 // loop_header_branch
                  %439 = sbr.rel (%p437) target = $region82
                $region79: #{tpu_custom_call.1} parent=74 // loop_body
                  %v443 = vld [vmem:[%s441] sm:$0xff]
                  %444 = vst [vmem:[%s442] sm:$0xff] %v443
                  %v445 = vld [vmem:[%s441 + $0x10] sm:$0xff]
                  %446 = vst [vmem:[%s442 + $0x8] sm:$0xff] %v445
                  %v447 = vld [vmem:[%s441 + $0x20] sm:$0xff]
                  %448 = vst [vmem:[%s442 + $0x10] sm:$0xff] %v447
                  %v449 = vld [vmem:[%s441 + $0x30] sm:$0xff]
                  %450 = vst [vmem:[%s442 + $0x18] sm:$0xff] %v449
                  %v451 = vld [vmem:[%s441 + $0x40] sm:$0xff]
                  %452 = vst [vmem:[%s442 + $0x20] sm:$0xff] %v451
                  %v453 = vld [vmem:[%s441 + $0x50] sm:$0xff]
                  %454 = vst [vmem:[%s442 + $0x28] sm:$0xff] %v453
                  %v455 = vld [vmem:[%s441 + $0x60] sm:$0xff]
                  %456 = vst [vmem:[%s442 + $0x30] sm:$0xff] %v455
                  %v457 = vld [vmem:[%s441 + $0x70] sm:$0xff]
                  %458 = vst [vmem:[%s442 + $0x38] sm:$0xff] %v457
                $region80: #{tpu_custom_call.1} parent=74 // loop_footer
                  %s440 = sadd.s32 1, %s436
                $region81: #{tpu_custom_call.1} parent=74 // loop_footer_branch
                  %435 = sbr.rel target = $region77
                $region82: #{tpu_custom_call.1} parent=74 // loop_exit
                  _
              $region75: #{tpu_custom_call.1} parent=59 // pred_fallthru
                _
              // Predicated region
              $region83: #{tpu_custom_call.1} parent=59 // pred_check
                _
              $region84: #{tpu_custom_call.1} parent=59 // pred_check_branch
                %460 = sbr.rel target = $region86
              $region85: #{tpu_custom_call.1} parent=59 // pred_region
                _
              $region86: #{tpu_custom_call.1} parent=59 // pred_fallthru
                _
            $region60: #{tpu_custom_call.1} parent=55 // pred_fallthru
              _
            // Predicated region
            $region61: #{tpu_custom_call.1} parent=55 // pred_check
              _
            $region62: #{tpu_custom_call.1} parent=55 // pred_check_branch
              %407 = sbr.rel target = $region64
            $region63: #{tpu_custom_call.1} parent=55 // pred_region
              loop: start=0, step=1, limit=1
              $region65: #{tpu_custom_call.1} parent=63 // loop_pre_header
                _
              $region66: #{tpu_custom_call.1} parent=63 // loop_header
                %s410 = sphi 0, %s414
                %p411 = scmp.ge.s32.totalorder %s410, 1
                %s415 = sphi %s401, %s401
                %s416 = sphi %s399, %s399
              $region67: #{tpu_custom_call.1} parent=63 // loop_header_branch
                %413 = sbr.rel (%p411) target = $region71
              $region68: #{tpu_custom_call.1} parent=63 // loop_body
                %v417 = vld [vmem:[%s415] sm:$0xff]
                %418 = vst [vmem:[%s416] sm:$0xff] %v417
                %v419 = vld [vmem:[%s415 + $0x10] sm:$0xff]
                %420 = vst [vmem:[%s416 + $0x8] sm:$0xff] %v419
                %v421 = vld [vmem:[%s415 + $0x20] sm:$0xff]
                %422 = vst [vmem:[%s416 + $0x10] sm:$0xff] %v421
                %v423 = vld [vmem:[%s415 + $0x30] sm:$0xff]
                %424 = vst [vmem:[%s416 + $0x18] sm:$0xff] %v423
                %v425 = vld [vmem:[%s415 + $0x40] sm:$0xff]
                %426 = vst [vmem:[%s416 + $0x20] sm:$0xff] %v425
                %v427 = vld [vmem:[%s415 + $0x50] sm:$0xff]
                %428 = vst [vmem:[%s416 + $0x28] sm:$0xff] %v427
                %v429 = vld [vmem:[%s415 + $0x60] sm:$0xff]
                %430 = vst [vmem:[%s416 + $0x30] sm:$0xff] %v429
                %v431 = vld [vmem:[%s415 + $0x70] sm:$0xff]
                %432 = vst [vmem:[%s416 + $0x38] sm:$0xff] %v431
              $region69: #{tpu_custom_call.1} parent=63 // loop_footer
                %s414 = sadd.s32 1, %s410
              $region70: #{tpu_custom_call.1} parent=63 // loop_footer_branch
                %409 = sbr.rel target = $region66
              $region71: #{tpu_custom_call.1} parent=63 // loop_exit
                _
            $region64: #{tpu_custom_call.1} parent=55 // pred_fallthru
              _
          $region56: #{tpu_custom_call.1} parent=51 // pred_fallthru
            _
          %461 = vnop
        $region52: #{tpu_custom_call.1} parent=39 // pred_fallthru
          _
        // Predicated region
        $region87: #{tpu_custom_call.1} parent=39 // pred_check
          %p462 = pneg %p239
        $region88: #{tpu_custom_call.1} parent=39 // pred_check_branch
          %464 = sbr.rel (%p462) target = $region90
        $region89: #{tpu_custom_call.1} parent=39 // pred_region
          %s465 = smul.u32 16, %s32
          %p466 = scmp.lt.s32.totalorder %s465, 31
          %s467 = scalar_select %p466, %s465, 31
          %s468 = smul.addr %s467, 8
          %s469 = scalar_lea.vmem %s8, %s468
          %s470 = smul.u32 16, %s32
        $region90: #{tpu_custom_call.1} parent=39 // pred_fallthru
          _
        // Predicated region
        $region91: #{tpu_custom_call.1} parent=39 // pred_check
          %p471 = pneg %p286
        $region92: #{tpu_custom_call.1} parent=39 // pred_check_branch
          %473 = sbr.rel (%p471) target = $region94
        $region93: #{tpu_custom_call.1} parent=39 // pred_region
          %p474 = scmp.lt.s32.totalorder %s32, 1
          %s475 = scalar_select %p474, %s32, 1
          %s476 = scalar_lea.vmem %s10, %s475
        $region94: #{tpu_custom_call.1} parent=39 // pred_fallthru
          _
      $region40: #{tpu_custom_call.1} parent=5 // pred_fallthru
        _
      %p477 = scmp.le.s32.totalorder 1, %s24
      %p478 = scmp.lt.s32.totalorder %s24, 5
      %p479 = pnand %p477, %p478
      %p480 = pneg %p479
      // Predicated region
      $region95: #{tpu_custom_call.1} parent=5 // pred_check
        _
      $region96: #{tpu_custom_call.1} parent=5 // pred_check_branch
        %482 = sbr.rel (%p479) target = $region98
      $region97: #{tpu_custom_call.1} parent=5 // pred_region
        %s483 = ssub.s32 %s24, 1
        %s484 = sand.u32 %s75, 1
        %s485 = scalar_lea.sflag [#allocation5], %s484
        %s486 = sand.u32 %s75, 1
        %s487 = smul.addr %s486, 16
        %s488 = scalar_lea.vmem [#allocation4], %s487
        // Predicated region
        $region99: #{tpu_custom_call.1} parent=97 // pred_check
          %p489 = pneg %p88
        $region100: #{tpu_custom_call.1} parent=97 // pred_check_branch
          %491 = sbr.rel (%p489) target = $region102
        $region101: #{tpu_custom_call.1} parent=97 // pred_region
          %492 = dma.done %s485, 256
        $region102: #{tpu_custom_call.1} parent=97 // pred_fallthru
          _
        // Predicated region
        $region103: #{tpu_custom_call.1} parent=97 // pred_check
          %p493 = pneg %p109
        $region104: #{tpu_custom_call.1} parent=97 // pred_check_branch
          %495 = sbr.rel (%p493) target = $region106
        $region105: #{tpu_custom_call.1} parent=97 // pred_region
          %496 = dma.done [#allocation8], 512
        $region106: #{tpu_custom_call.1} parent=97 // pred_fallthru
          _
        %s497 = sand.u32 %s206, 1
        %s498 = sand.u32 %s206, 1
        %s499 = smul.addr %s498, 64
        %s500 = scalar_lea.vmem [#allocation9], %s499
        // Predicated region
        $region107: #{tpu_custom_call.1} parent=97 // pred_check
          %p501 = pneg %p219
        $region108: #{tpu_custom_call.1} parent=97 // pred_check_branch
          %503 = sbr.rel (%p501) target = $region110
        $region109: #{tpu_custom_call.1} parent=97 // pred_region
          _
        $region110: #{tpu_custom_call.1} parent=97 // pred_fallthru
          _
        %p504 = scmp.lt.s32.totalorder %s33, 1
        %s505 = scalar_select %p504, %s33, 1
        %s506 = smul.addr %s505, 8
        %s507 = scalar_lea.vmem %s0, %s506
        %p508 = pneg %p62
        %p509 = pneg %p59
        %s510 = sand.u32 %s75, 1
        %s511 = scalar_lea.sflag [#allocation5], %s510
        %s512 = sand.u32 %s75, 1
        %s513 = smul.addr %s512, 16
        %s514 = scalar_lea.vmem [#allocation4], %s513
        %p515 = pneg %p88
        %p516 = pneg %p85
        %p517 = pneg %p109
        %p518 = pneg %p106
        %p519 = pneg %p130
        %p520 = pneg %p127
        %p521 = pneg %p151
        %p522 = pneg %p148
        %p523 = pneg %p172
        %p524 = pneg %p169
        %p525 = pneg %p193
        %p526 = pneg %p190
        %s527 = sand.u32 %s206, 1
        %s528 = sand.u32 %s206, 1
        %s529 = smul.addr %s528, 64
        %s530 = scalar_lea.vmem [#allocation9], %s529
        %p531 = pneg %p219
        %p532 = pneg %p216
        %s533 = smul.u32 16, %s34
        %p534 = scmp.lt.s32.totalorder %s533, 31
        %s535 = scalar_select %p534, %s533, 31
        %s536 = smul.addr %s535, 8
        %s537 = scalar_lea.vmem %s8, %s536
        %p538 = pneg %p245
        %p539 = pneg %p242
        %p540 = pneg %p266
        %p541 = pneg %p263
        %p542 = scmp.lt.s32.totalorder %s34, 1
        %s543 = scalar_select %p542, %s34, 1
        %s544 = scalar_lea.vmem %s10, %s543
        %p545 = pneg %p292
        %p546 = pneg %p289
        %p547 = pneg %p318
        %p548 = pneg %p315
        %s549 = sand.u32 %s305, 1
        %s550 = scalar_lea.sflag [#allocation6], %s549
        %s551 = sand.u32 %s305, 1
        %s552 = smul.addr %s551, 8
        %s553 = scalar_lea.vmem [#allocation10], %s552
        %p554 = scmp.lt.s32.totalorder %s33, 1
        %s555 = scalar_select %p554, %s33, 1
        %s556 = smul.addr %s555, 8
        %s557 = scalar_lea.vmem %s0, %s556
        %s558 = smul.u32 16, %s34
        %p559 = scmp.lt.s32.totalorder %s558, 31
        %s560 = scalar_select %p559, %s558, 31
        %s561 = smul.addr %s560, 8
        %s562 = scalar_lea.vmem %s8, %s561
        %s563 = smul.u32 16, %s34
        %p564 = scmp.lt.s32.totalorder %s34, 1
        %s565 = scalar_select %p564, %s34, 1
        %s566 = scalar_lea.vmem %s10, %s565
        %v567 = vld [vmem:[%s9] sm:$0xff]
        %v568 = vld [vmem:[%s9 + $0x8] sm:$0x7]
        %p569 = scmp.eq.s32.totalorder %s34, 0
        // Predicated region
        $region111: #{tpu_custom_call.1} parent=97 // pred_check
          %p570 = pneg %p569
        $region112: #{tpu_custom_call.1} parent=97 // pred_check_branch
          %572 = sbr.rel (%p570) target = $region114
        $region113: #{tpu_custom_call.1} parent=97 // pred_region
          %v573 = vld [vmem:[%s557] sm:$0xff]
          %v574 = vld [vmem:[%s488] sm:$0xff]
          %v575 = vld [vmem:[%s488 + $0x8] sm:$0xff]
          %v576 = vld [vmem:[#allocation7] sm:$0xff]
          %v577 = vld [vmem:[#allocation7 + $0x8] sm:$0xff]
          %v578 = vld [vmem:[#allocation7 + $0x10] sm:$0xff]
          %v579 = vld [vmem:[#allocation7 + $0x18] sm:$0xff]
          %v580 = vlaneseq
          %v581 = vshrl.u32 %v580, 7
          %v582 = vsub.s32 0, %v581
          %v583 = vrot.slane %v567, %v582
          %vm584 = vcmask 261120
          %v586 = vsel %vm584, %v573, 0
          %588 = vmatprep.subr.mxu0 0.0
          %589 = vmatpush1.msra.mxu0 %v576
          %590 = vmatprep.subr.mxu0 0.0
          %591 = vmatpush1.msra.mxu0 %v577
          %592 = vmatprep.subr.mxu0 0.0
          %593 = vmatpush1.msra.mxu0 %v578
          %594 = vmatprep.subr.mxu0 0.0
          %595 = vmatpush1.msra.mxu0 %v579
          %596 = vmatprep.subr.mxu0 0.0
          %597 = vmatpush1.msra.mxu0 0.0
          %598 = vmatprep.subr.mxu0 0.0
          %599 = vmatpush1.msra.mxu0 0.0
          %600 = vmatprep.subr.mxu0 0.0
          %601 = vmatpush1.msra.mxu0 0.0
          %602 = vmatprep.subr.mxu0 0.0
          %603 = vmatpush1.msra.mxu0 0.0
          %604 = vmatprep.subr.mxu0 0.0
          %605 = vmatpush1.msra.mxu0 0.0
          %606 = vmatprep.subr.mxu0 0.0
          %607 = vmatpush1.msra.mxu0 0.0
          %608 = vmatprep.subr.mxu0 0.0
          %609 = vmatpush1.msra.mxu0 0.0
          %610 = vmatprep.subr.mxu0 0.0
          %611 = vmatpush1.msra.mxu0 0.0
          %612 = vmatprep.subr.mxu0 0.0
          %613 = vmatpush1.msra.mxu0 0.0
          %614 = vmatprep.subr.mxu0 0.0
          %615 = vmatpush1.msra.mxu0 0.0
          %616 = vmatprep.subr.mxu0 0.0
          %617 = vmatpush1.msra.mxu0 0.0
          %618 = vmatprep.subr.mxu0 0.0
          %619 = vmatpush1.msra.mxu0 0.0
          %620 = vmatprep.subr.mxu0 0.0
          %621 = vmatpush1.msra.mxu0 0.0
          %622 = vmatprep.subr.mxu0 0.0
          %623 = vmatpush1.msra.mxu0 0.0
          %624 = vmatprep.subr.mxu0 0.0
          %625 = vmatpush1.msra.mxu0 0.0
          %626 = vmatprep.subr.mxu0 0.0
          %627 = vmatpush1.msra.mxu0 0.0
          %628 = vmatprep.subr.mxu0 0.0
          %629 = vmatpush1.msra.mxu0 0.0
          %630 = vmatprep.subr.mxu0 0.0
          %631 = vmatpush1.msra.mxu0 0.0
          %632 = vmatprep.subr.mxu0 0.0
          %633 = vmatpush1.msra.mxu0 0.0
          %634 = vmatprep.subr.mxu0 0.0
          %635 = vmatpush1.msra.mxu0 0.0
          %636 = vmatprep.subr.mxu0 0.0
          %637 = vmatpush1.msra.mxu0 0.0
          %638 = vmatprep.subr.mxu0 0.0
          %639 = vmatpush1.msra.mxu0 0.0
          %640 = vmatprep.subr.mxu0 0.0
          %641 = vmatpush1.msra.mxu0 0.0
          %642 = vmatprep.subr.mxu0 0.0
          %643 = vmatpush1.msra.mxu0 0.0
          %644 = vmatprep.subr.mxu0 0.0
          %645 = vmatpush1.msra.mxu0 0.0
          %646 = vmatprep.subr.mxu0 0.0
          %647 = vmatpush1.msra.mxu0 0.0
          %648 = vmatprep.subr.mxu0 0.0
          %649 = vmatpush1.msra.mxu0 0.0
          %650 = vmatprep.subr.mxu0 0.0
          %651 = vmatpush1.msra.mxu0 0.0
          %652 = vmatprep.mubr.f32.mxu0 0.0
          %653 = vmatmul.mubr.f32.gmra.mrb[0].mxu0 %v586
          %v654 = vpop.f32.mrb[0].mxu0
          %v655 = vadd.f32 %v583, %v654
          %v656 = vpop.f32.mrb[0].mxu0
          %657 = vdwg.mxu0
          %v658 = vld [vmem:[%s3] sm:$0xff]
          %v659 = vld [vmem:[%s3 + $0x8] sm:$0xff]
          %v660 = vld [vmem:[%s3 + $0x10] sm:$0xff]
          %v661 = vld [vmem:[%s3 + $0x18] sm:$0xff]
          %v662 = vld [vmem:[%s3 + $0x20] sm:$0xff]
          %v663 = vld [vmem:[%s3 + $0x28] sm:$0xff]
          %v664 = vlaneseq
          %v665 = vshrl.u32 %v664, 7
          %v666 = vsub.s32 1, %v665
          %v667 = vrot.slane %v567, %v666
          %vm668 = vcmask 392192
          %v670 = vsel %vm668, %v574, 0
          %v673 = vsel %vm668, %v575, 0
          %675 = vmatprep.subr.mxu0 0.0
          %676 = vmatpush1.msra.mxu0 %v658
          %677 = vmatprep.subr.mxu0 0.0
          %678 = vmatpush1.msra.mxu0 %v659
          %679 = vmatprep.subr.mxu0 0.0
          %680 = vmatpush1.msra.mxu0 %v660
          %681 = vmatprep.subr.mxu0 0.0
          %682 = vmatpush1.msra.mxu0 %v661
          %683 = vmatprep.subr.mxu0 0.0
          %684 = vmatpush1.msra.mxu0 %v662
          %685 = vmatprep.subr.mxu0 0.0
          %686 = vmatpush1.msra.mxu0 %v663
          %687 = vmatprep.subr.mxu0 0.0
          %688 = vmatpush1.msra.mxu0 0.0
          %689 = vmatprep.subr.mxu0 0.0
          %690 = vmatpush1.msra.mxu0 0.0
          %691 = vmatprep.subr.mxu0 0.0
          %692 = vmatpush1.msra.mxu0 0.0
          %693 = vmatprep.subr.mxu0 0.0
          %694 = vmatpush1.msra.mxu0 0.0
          %695 = vmatprep.subr.mxu0 0.0
          %696 = vmatpush1.msra.mxu0 0.0
          %697 = vmatprep.subr.mxu0 0.0
          %698 = vmatpush1.msra.mxu0 0.0
          %699 = vmatprep.subr.mxu0 0.0
          %700 = vmatpush1.msra.mxu0 0.0
          %701 = vmatprep.subr.mxu0 0.0
          %702 = vmatpush1.msra.mxu0 0.0
          %703 = vmatprep.subr.mxu0 0.0
          %704 = vmatpush1.msra.mxu0 0.0
          %705 = vmatprep.subr.mxu0 0.0
          %706 = vmatpush1.msra.mxu0 0.0
          %707 = vmatprep.subr.mxu0 0.0
          %708 = vmatpush1.msra.mxu0 0.0
          %709 = vmatprep.subr.mxu0 0.0
          %710 = vmatpush1.msra.mxu0 0.0
          %711 = vmatprep.subr.mxu0 0.0
          %712 = vmatpush1.msra.mxu0 0.0
          %713 = vmatprep.subr.mxu0 0.0
          %714 = vmatpush1.msra.mxu0 0.0
          %715 = vmatprep.subr.mxu0 0.0
          %716 = vmatpush1.msra.mxu0 0.0
          %717 = vmatprep.subr.mxu0 0.0
          %718 = vmatpush1.msra.mxu0 0.0
          %719 = vmatprep.subr.mxu0 0.0
          %720 = vmatpush1.msra.mxu0 0.0
          %721 = vmatprep.subr.mxu0 0.0
          %722 = vmatpush1.msra.mxu0 0.0
          %723 = vmatprep.subr.mxu0 0.0
          %724 = vmatpush1.msra.mxu0 0.0
          %725 = vmatprep.subr.mxu0 0.0
          %726 = vmatpush1.msra.mxu0 0.0
          %727 = vmatprep.subr.mxu0 0.0
          %728 = vmatpush1.msra.mxu0 0.0
          %729 = vmatprep.subr.mxu0 0.0
          %730 = vmatpush1.msra.mxu0 0.0
          %731 = vmatprep.subr.mxu0 0.0
          %732 = vmatpush1.msra.mxu0 0.0
          %733 = vmatprep.subr.mxu0 0.0
          %734 = vmatpush1.msra.mxu0 0.0
          %735 = vmatprep.subr.mxu0 0.0
          %736 = vmatpush1.msra.mxu0 0.0
          %737 = vmatprep.subr.mxu0 0.0
          %738 = vmatpush1.msra.mxu0 0.0
          %739 = vmatprep.mubr.f32.mxu0 0.0
          %740 = vmatmul.mubr.f32.gmra.mrb[0].mxu0 %v670
          %v741 = vpop.f32.mrb[0].mxu0
          %v742 = vadd.f32 %v667, %v741
          %v743 = vpop.f32.mrb[0].mxu0
          %744 = vmatprep.mubr.f32.mxu0 0.0
          %745 = vmatmul.mubr.f32.gmra.mrb[0].mxu0 %v673
          %v746 = vpop.f32.mrb[0].mxu0
          %v747 = vadd.f32 %v667, %v746
          %v748 = vpop.f32.mrb[0].mxu0
          %749 = vdwg.mxu0
          %v750 = vld [vmem:[%s4] sm:$0xff]
          %v751 = vld [vmem:[%s4 + $0x8] sm:$0xff]
          %v752 = vld [vmem:[%s4 + $0x10] sm:$0xff]
          %v753 = vld [vmem:[%s4 + $0x18] sm:$0xff]
          %v754 = vld [vmem:[%s4 + $0x20] sm:$0xff]
          %v755 = vld [vmem:[%s4 + $0x28] sm:$0xff]
          %v756 = vld [vmem:[%s4 + $0x30] sm:$0xff]
          %v757 = vld [vmem:[%s4 + $0x38] sm:$0xff]
          %v758 = vlaneseq
          %v759 = vshrl.u32 %v758, 7
          %v760 = vsub.s32 2, %v759
          %v761 = vrot.slane %v567, %v760
          %vm762 = vcmask 523264
          %v764 = vsel %vm762, %v655, 0
          %766 = vmatprep.subr.mxu0 0.0
          %767 = vmatpush1.msra.mxu0 %v750
          %768 = vmatprep.subr.mxu0 0.0
          %769 = vmatpush1.msra.mxu0 %v751
          %770 = vmatprep.subr.mxu0 0.0
          %771 = vmatpush1.msra.mxu0 %v752
          %772 = vmatprep.subr.mxu0 0.0
          %773 = vmatpush1.msra.mxu0 %v753
          %774 = vmatprep.subr.mxu0 0.0
          %775 = vmatpush1.msra.mxu0 %v754
          %776 = vmatprep.subr.mxu0 0.0
          %777 = vmatpush1.msra.mxu0 %v755
          %778 = vmatprep.subr.mxu0 0.0
          %779 = vmatpush1.msra.mxu0 %v756
          %780 = vmatprep.subr.mxu0 0.0
          %781 = vmatpush1.msra.mxu0 %v757
          %782 = vmatprep.subr.mxu0 0.0
          %783 = vmatpush1.msra.mxu0 0.0
          %784 = vmatprep.subr.mxu0 0.0
          %785 = vmatpush1.msra.mxu0 0.0
          %786 = vmatprep.subr.mxu0 0.0
          %787 = vmatpush1.msra.mxu0 0.0
          %788 = vmatprep.subr.mxu0 0.0
          %789 = vmatpush1.msra.mxu0 0.0
          %790 = vmatprep.subr.mxu0 0.0
          %791 = vmatpush1.msra.mxu0 0.0
          %792 = vmatprep.subr.mxu0 0.0
          %793 = vmatpush1.msra.mxu0 0.0
          %794 = vmatprep.subr.mxu0 0.0
          %795 = vmatpush1.msra.mxu0 0.0
          %796 = vmatprep.subr.mxu0 0.0
          %797 = vmatpush1.msra.mxu0 0.0
          %798 = vmatprep.subr.mxu0 0.0
          %799 = vmatpush1.msra.mxu0 0.0
          %800 = vmatprep.subr.mxu0 0.0
          %801 = vmatpush1.msra.mxu0 0.0
          %802 = vmatprep.subr.mxu0 0.0
          %803 = vmatpush1.msra.mxu0 0.0
          %804 = vmatprep.subr.mxu0 0.0
          %805 = vmatpush1.msra.mxu0 0.0
          %806 = vmatprep.subr.mxu0 0.0
          %807 = vmatpush1.msra.mxu0 0.0
          %808 = vmatprep.subr.mxu0 0.0
          %809 = vmatpush1.msra.mxu0 0.0
          %810 = vmatprep.subr.mxu0 0.0
          %811 = vmatpush1.msra.mxu0 0.0
          %812 = vmatprep.subr.mxu0 0.0
          %813 = vmatpush1.msra.mxu0 0.0
          %814 = vmatprep.subr.mxu0 0.0
          %815 = vmatpush1.msra.mxu0 0.0
          %816 = vmatprep.subr.mxu0 0.0
          %817 = vmatpush1.msra.mxu0 0.0
          %818 = vmatprep.subr.mxu0 0.0
          %819 = vmatpush1.msra.mxu0 0.0
          %820 = vmatprep.subr.mxu0 0.0
          %821 = vmatpush1.msra.mxu0 0.0
          %822 = vmatprep.subr.mxu0 0.0
          %823 = vmatpush1.msra.mxu0 0.0
          %824 = vmatprep.subr.mxu0 0.0
          %825 = vmatpush1.msra.mxu0 0.0
          %826 = vmatprep.subr.mxu0 0.0
          %827 = vmatpush1.msra.mxu0 0.0
          %828 = vmatprep.subr.mxu0 0.0
          %829 = vmatpush1.msra.mxu0 0.0
          %830 = vmatprep.mubr.f32.mxu0 0.0
          %831 = vmatmul.mubr.f32.gmra.mrb[0].mxu0 %v764
          %v832 = vpop.f32.mrb[0].mxu0
          %v833 = vadd.f32 %v761, %v832
          %v834 = vpop.f32.mrb[0].mxu0
          %835 = vdwg.mxu0
          %v836 = vmul.f32 %v833, 0.25
          %v837 = vld [vmem:[%s5] sm:$0xff]
          %v838 = vld [vmem:[%s5 + $0x8] sm:$0xff]
          %v839 = vld [vmem:[%s5 + $0x10] sm:$0xff]
          %v840 = vld [vmem:[%s5 + $0x18] sm:$0xff]
          %v841 = vld [vmem:[%s5 + $0x20] sm:$0xff]
          %v842 = vld [vmem:[%s5 + $0x28] sm:$0xff]
          %v843 = vld [vmem:[%s5 + $0x30] sm:$0xff]
          %v844 = vld [vmem:[%s5 + $0x38] sm:$0xff]
          %v846 = vsel %vm762, %v742, 0
          %v849 = vsel %vm762, %v747, 0
          %851 = vmatprep.subr.mxu0 0.0
          %852 = vmatpush1.msra.mxu0 %v837
          %853 = vmatprep.subr.mxu0 0.0
          %854 = vmatpush1.msra.mxu0 %v838
          %855 = vmatprep.subr.mxu0 0.0
          %856 = vmatpush1.msra.mxu0 %v839
          %857 = vmatprep.subr.mxu0 0.0
          %858 = vmatpush1.msra.mxu0 %v840
          %859 = vmatprep.subr.mxu0 0.0
          %860 = vmatpush1.msra.mxu0 %v841
          %861 = vmatprep.subr.mxu0 0.0
          %862 = vmatpush1.msra.mxu0 %v842
          %863 = vmatprep.subr.mxu0 0.0
          %864 = vmatpush1.msra.mxu0 %v843
          %865 = vmatprep.subr.mxu0 0.0
          %866 = vmatpush1.msra.mxu0 %v844
          %867 = vmatprep.subr.mxu0 0.0
          %868 = vmatpush1.msra.mxu0 0.0
          %869 = vmatprep.subr.mxu0 0.0
          %870 = vmatpush1.msra.mxu0 0.0
          %871 = vmatprep.subr.mxu0 0.0
          %872 = vmatpush1.msra.mxu0 0.0
          %873 = vmatprep.subr.mxu0 0.0
          %874 = vmatpush1.msra.mxu0 0.0
          %875 = vmatprep.subr.mxu0 0.0
          %876 = vmatpush1.msra.mxu0 0.0
          %877 = vmatprep.subr.mxu0 0.0
          %878 = vmatpush1.msra.mxu0 0.0
          %879 = vmatprep.subr.mxu0 0.0
          %880 = vmatpush1.msra.mxu0 0.0
          %881 = vmatprep.subr.mxu0 0.0
          %882 = vmatpush1.msra.mxu0 0.0
          %883 = vmatprep.subr.mxu0 0.0
          %884 = vmatpush1.msra.mxu0 0.0
          %885 = vmatprep.subr.mxu0 0.0
          %886 = vmatpush1.msra.mxu0 0.0
          %887 = vmatprep.subr.mxu0 0.0
          %888 = vmatpush1.msra.mxu0 0.0
          %889 = vmatprep.subr.mxu0 0.0
          %890 = vmatpush1.msra.mxu0 0.0
          %891 = vmatprep.subr.mxu0 0.0
          %892 = vmatpush1.msra.mxu0 0.0
          %893 = vmatprep.subr.mxu0 0.0
          %894 = vmatpush1.msra.mxu0 0.0
          %895 = vmatprep.subr.mxu0 0.0
          %896 = vmatpush1.msra.mxu0 0.0
          %897 = vmatprep.subr.mxu0 0.0
          %898 = vmatpush1.msra.mxu0 0.0
          %899 = vmatprep.subr.mxu0 0.0
          %900 = vmatpush1.msra.mxu0 0.0
          %901 = vmatprep.subr.mxu0 0.0
          %902 = vmatpush1.msra.mxu0 0.0
          %903 = vmatprep.subr.mxu0 0.0
          %904 = vmatpush1.msra.mxu0 0.0
          %905 = vmatprep.subr.mxu0 0.0
          %906 = vmatpush1.msra.mxu0 0.0
          %907 = vmatprep.subr.mxu0 0.0
          %908 = vmatpush1.msra.mxu0 0.0
          %909 = vmatprep.subr.mxu0 0.0
          %910 = vmatpush1.msra.mxu0 0.0
          %911 = vmatprep.subr.mxu0 0.0
          %912 = vmatpush1.msra.mxu0 0.0
          %913 = vmatprep.subr.mxu0 0.0
          %914 = vmatpush1.msra.mxu0 0.0
          %915 = vmatprep.mubr.f32.mxu0 0.0
          %916 = vmatmul.mubr.f32.gmra.mrb[0].mxu0 %v846
          %v917 = vpop.f32.mrb[0].mxu0
          %v918 = vadd.f32 0.0, %v917
          %v919 = vpop.f32.mrb[0].mxu0
          %920 = vmatprep.mubr.f32.mxu0 0.0
          %921 = vmatmul.mubr.f32.gmra.mrb[0].mxu0 %v849
          %v922 = vpop.f32.mrb[0].mxu0
          %v923 = vadd.f32 0.0, %v922
          %v924 = vpop.f32.mrb[0].mxu0
          %925 = vdwg.mxu0
          %v926 = vlaneseq
          %v927 = vshrl.u32 %v926, 7
          %v928 = vsub.s32 3, %v927
          %v929 = vrot.slane %v567, %v928
          %v930 = vadd.f32 %v918, %v929
          %v931 = vadd.f32 %v923, %v929
          %v932 = vlaneseq
          %v933 = vshrl.u32 %v932, 7
          %v934 = vsub.s32 4, %v933
          %v935 = vrot.slane %v567, %v934
          %937 = vrot.lane.b32.xlu0 %v935, 64
          %v938 = vpop.permute.xlu0 %937
          %v940 = vadd.f32 %v918, %v938
          %v941 = vadd.f32 %v923, %v938
          %943 = vrot.lane.b32.xlu0 %v836, 112
          %v944 = vpop.permute.xlu0 %943
          %946 = vrot.lane.b32.xlu0 %v836, 96
          %v947 = vpop.permute.xlu0 %946
          %949 = vrot.lane.b32.xlu0 %v836, 80
          %v950 = vpop.permute.xlu0 %949
          %v952 = vcombine.low %v836, %v947
          %v953 = vcombine.high %v836, %v947
          %v955 = vunpack.c.l.s4 1983009808
          %v956 = vunpack.c.0.s8 %v955
          %v957 = vlaneseq
          %v958 = vshrl.u32 %v957, 7
          %v959 = vsub.s32 %v956, %v958
          %v960 = vrot.slane %v952, %v959
          %v962 = vunpack.c.l.s4 1983009808
          %v963 = vunpack.c.0.s8 %v962
          %v964 = vlaneseq
          %v965 = vshrl.u32 %v964, 7
          %v966 = vsub.s32 %v963, %v965
          %v967 = vrot.slane %v953, %v966
          %v968 = vcombine.low %v944, %v950
          %v969 = vcombine.high %v944, %v950
          %v971 = vunpack.c.l.s4 1983009808
          %v972 = vunpack.c.0.s8 %v971
          %v973 = vlaneseq
          %v974 = vshrl.u32 %v973, 7
          %v975 = vsub.s32 %v972, %v974
          %v976 = vrot.slane %v968, %v975
          %v978 = vunpack.c.l.s4 1983009808
          %v979 = vunpack.c.0.s8 %v978
          %v980 = vlaneseq
          %v981 = vshrl.u32 %v980, 7
          %v982 = vsub.s32 %v979, %v981
          %v983 = vrot.slane %v969, %v982
          %v984 = vcombine.low %v960, %v976
          %v985 = vcombine.high %v960, %v976
          %v987 = vunpack.c.l.s4 1934713408
          %v988 = vunpack.c.0.s8 %v987
          %v989 = vlaneseq
          %v990 = vshrl.u32 %v989, 7
          %v991 = vsub.s32 %v988, %v990
          %v992 = vrot.slane %v984, %v991
          %v994 = vunpack.c.l.s4 1934713408
          %v995 = vunpack.c.0.s8 %v994
          %v996 = vlaneseq
          %v997 = vshrl.u32 %v996, 7
          %v998 = vsub.s32 %v995, %v997
          %v999 = vrot.slane %v985, %v998
          %v1000 = vcombine.low %v967, %v983
          %v1001 = vcombine.high %v967, %v983
          %v1003 = vunpack.c.l.s4 1934713408
          %v1004 = vunpack.c.0.s8 %v1003
          %v1005 = vlaneseq
          %v1006 = vshrl.u32 %v1005, 7
          %v1007 = vsub.s32 %v1004, %v1006
          %v1008 = vrot.slane %v1000, %v1007
          %v1010 = vunpack.c.l.s4 1934713408
          %v1011 = vunpack.c.0.s8 %v1010
          %v1012 = vlaneseq
          %v1013 = vshrl.u32 %v1012, 7
          %v1014 = vsub.s32 %v1011, %v1013
          %v1015 = vrot.slane %v1001, %v1014
          %v1016 = vcombine.high %v992, 0.0
          %v1017 = vcombine.high %v999, 0.0
          %v1018 = vcombine.high %v1008, 0.0
          %v1019 = vcombine.high %v1015, 0.0
          %v1020 = vcombine.low %v992, %v999
          %v1022 = vunpack.c.l.s4 1983009808
          %v1023 = vunpack.c.0.s8 %v1022
          %v1024 = vlaneseq
          %v1025 = vshrl.u32 %v1024, 7
          %v1026 = vsub.s32 %v1023, %v1025
          %v1027 = vrot.slane %v1020, %v1026
          %v1028 = vcombine.low %v1016, %v1017
          %v1030 = vunpack.c.l.s4 1983009808
          %v1031 = vunpack.c.0.s8 %v1030
          %v1032 = vlaneseq
          %v1033 = vshrl.u32 %v1032, 7
          %v1034 = vsub.s32 %v1031, %v1033
          %v1035 = vrot.slane %v1028, %v1034
          %v1036 = vcombine.low %v1008, %v1015
          %v1038 = vunpack.c.l.s4 1983009808
          %v1039 = vunpack.c.0.s8 %v1038
          %v1040 = vlaneseq
          %v1041 = vshrl.u32 %v1040, 7
          %v1042 = vsub.s32 %v1039, %v1041
          %v1043 = vrot.slane %v1036, %v1042
          %v1044 = vcombine.low %v1018, %v1019
          %v1046 = vunpack.c.l.s4 1983009808
          %v1047 = vunpack.c.0.s8 %v1046
          %v1048 = vlaneseq
          %v1049 = vshrl.u32 %v1048, 7
          %v1050 = vsub.s32 %v1047, %v1049
          %v1051 = vrot.slane %v1044, %v1050
          %v1052 = vcombine.low %v1027, %v1035
          %v1053 = vcombine.high %v1027, %v1035
          %v1055 = vunpack.c.l.s4 1934713408
          %v1056 = vunpack.c.0.s8 %v1055
          %v1057 = vlaneseq
          %v1058 = vshrl.u32 %v1057, 7
          %v1059 = vsub.s32 %v1056, %v1058
          %v1060 = vrot.slane %v1052, %v1059
          %v1062 = vunpack.c.l.s4 1934713408
          %v1063 = vunpack.c.0.s8 %v1062
          %v1064 = vlaneseq
          %v1065 = vshrl.u32 %v1064, 7
          %v1066 = vsub.s32 %v1063, %v1065
          %v1067 = vrot.slane %v1053, %v1066
          %v1068 = vcombine.low %v1043, %v1051
          %v1069 = vcombine.high %v1043, %v1051
          %v1071 = vunpack.c.l.s4 1934713408
          %v1072 = vunpack.c.0.s8 %v1071
          %v1073 = vlaneseq
          %v1074 = vshrl.u32 %v1073, 7
          %v1075 = vsub.s32 %v1072, %v1074
          %v1076 = vrot.slane %v1068, %v1075
          %v1078 = vunpack.c.l.s4 1934713408
          %v1079 = vunpack.c.0.s8 %v1078
          %v1080 = vlaneseq
          %v1081 = vshrl.u32 %v1080, 7
          %v1082 = vsub.s32 %v1079, %v1081
          %v1083 = vrot.slane %v1069, %v1082
          %v1084 = vcombine.low %v1060, %v1076
          %v1085 = vcombine.high %v1060, %v1076
          %v1086 = vcombine.low %v1067, %v1083
          %v1087 = vcombine.high %v1067, %v1083
          %1090 = vrot.lane.b32.xlu0 %v930, 112
          %v1091 = vpop.permute.xlu0 %1090
          %1092 = vrot.lane.b32.xlu0 %v931, 112
          %v1093 = vpop.permute.xlu0 %1092
          %1096 = vrot.lane.b32.xlu0 %v930, 96
          %v1097 = vpop.permute.xlu0 %1096
          %1098 = vrot.lane.b32.xlu0 %v931, 96
          %v1099 = vpop.permute.xlu0 %1098
          %1102 = vrot.lane.b32.xlu0 %v930, 80
          %v1103 = vpop.permute.xlu0 %1102
          %1104 = vrot.lane.b32.xlu0 %v931, 80
          %v1105 = vpop.permute.xlu0 %1104
          %v1108 = vcombine.low %v930, %v1097
          %v1109 = vcombine.high %v930, %v1097
          %v1111 = vunpack.c.l.s4 1983009808
          %v1112 = vunpack.c.0.s8 %v1111
          %v1113 = vlaneseq
          %v1114 = vshrl.u32 %v1113, 7
          %v1115 = vsub.s32 %v1112, %v1114
          %v1116 = vrot.slane %v1108, %v1115
          %v1118 = vunpack.c.l.s4 1983009808
          %v1119 = vunpack.c.0.s8 %v1118
          %v1120 = vlaneseq
          %v1121 = vshrl.u32 %v1120, 7
          %v1122 = vsub.s32 %v1119, %v1121
          %v1123 = vrot.slane %v1109, %v1122
          %v1124 = vcombine.low %v1091, %v1103
          %v1125 = vcombine.high %v1091, %v1103
          %v1127 = vunpack.c.l.s4 1983009808
          %v1128 = vunpack.c.0.s8 %v1127
          %v1129 = vlaneseq
          %v1130 = vshrl.u32 %v1129, 7
          %v1131 = vsub.s32 %v1128, %v1130
          %v1132 = vrot.slane %v1124, %v1131
          %v1134 = vunpack.c.l.s4 1983009808
          %v1135 = vunpack.c.0.s8 %v1134
          %v1136 = vlaneseq
          %v1137 = vshrl.u32 %v1136, 7
          %v1138 = vsub.s32 %v1135, %v1137
          %v1139 = vrot.slane %v1125, %v1138
          %v1140 = vcombine.low %v1116, %v1132
          %v1141 = vcombine.high %v1116, %v1132
          %v1143 = vunpack.c.l.s4 1934713408
          %v1144 = vunpack.c.0.s8 %v1143
          %v1145 = vlaneseq
          %v1146 = vshrl.u32 %v1145, 7
          %v1147 = vsub.s32 %v1144, %v1146
          %v1148 = vrot.slane %v1140, %v1147
          %v1150 = vunpack.c.l.s4 1934713408
          %v1151 = vunpack.c.0.s8 %v1150
          %v1152 = vlaneseq
          %v1153 = vshrl.u32 %v1152, 7
          %v1154 = vsub.s32 %v1151, %v1153
          %v1155 = vrot.slane %v1141, %v1154
          %v1156 = vcombine.low %v1123, %v1139
          %v1157 = vcombine.high %v1123, %v1139
          %v1159 = vunpack.c.l.s4 1934713408
          %v1160 = vunpack.c.0.s8 %v1159
          %v1161 = vlaneseq
          %v1162 = vshrl.u32 %v1161, 7
          %v1163 = vsub.s32 %v1160, %v1162
          %v1164 = vrot.slane %v1156, %v1163
          %v1166 = vunpack.c.l.s4 1934713408
          %v1167 = vunpack.c.0.s8 %v1166
          %v1168 = vlaneseq
          %v1169 = vshrl.u32 %v1168, 7
          %v1170 = vsub.s32 %v1167, %v1169
          %v1171 = vrot.slane %v1157, %v1170
          %v1172 = vcombine.high %v1148, 0.0
          %v1173 = vcombine.high %v1155, 0.0
          %v1174 = vcombine.high %v1164, 0.0
          %v1175 = vcombine.high %v1171, 0.0
          %v1176 = vcombine.low %v931, %v1099
          %v1177 = vcombine.high %v931, %v1099
          %v1179 = vunpack.c.l.s4 1983009808
          %v1180 = vunpack.c.0.s8 %v1179
          %v1181 = vlaneseq
          %v1182 = vshrl.u32 %v1181, 7
          %v1183 = vsub.s32 %v1180, %v1182
          %v1184 = vrot.slane %v1176, %v1183
          %v1186 = vunpack.c.l.s4 1983009808
          %v1187 = vunpack.c.0.s8 %v1186
          %v1188 = vlaneseq
          %v1189 = vshrl.u32 %v1188, 7
          %v1190 = vsub.s32 %v1187, %v1189
          %v1191 = vrot.slane %v1177, %v1190
          %v1192 = vcombine.low %v1093, %v1105
          %v1193 = vcombine.high %v1093, %v1105
          %v1195 = vunpack.c.l.s4 1983009808
          %v1196 = vunpack.c.0.s8 %v1195
          %v1197 = vlaneseq
          %v1198 = vshrl.u32 %v1197, 7
          %v1199 = vsub.s32 %v1196, %v1198
          %v1200 = vrot.slane %v1192, %v1199
          %v1202 = vunpack.c.l.s4 1983009808
          %v1203 = vunpack.c.0.s8 %v1202
          %v1204 = vlaneseq
          %v1205 = vshrl.u32 %v1204, 7
          %v1206 = vsub.s32 %v1203, %v1205
          %v1207 = vrot.slane %v1193, %v1206
          %v1208 = vcombine.low %v1184, %v1200
          %v1209 = vcombine.high %v1184, %v1200
          %v1211 = vunpack.c.l.s4 1934713408
          %v1212 = vunpack.c.0.s8 %v1211
          %v1213 = vlaneseq
          %v1214 = vshrl.u32 %v1213, 7
          %v1215 = vsub.s32 %v1212, %v1214
          %v1216 = vrot.slane %v1208, %v1215
          %v1218 = vunpack.c.l.s4 1934713408
          %v1219 = vunpack.c.0.s8 %v1218
          %v1220 = vlaneseq
          %v1221 = vshrl.u32 %v1220, 7
          %v1222 = vsub.s32 %v1219, %v1221
          %v1223 = vrot.slane %v1209, %v1222
          %v1224 = vcombine.low %v1191, %v1207
          %v1225 = vcombine.high %v1191, %v1207
          %v1227 = vunpack.c.l.s4 1934713408
          %v1228 = vunpack.c.0.s8 %v1227
          %v1229 = vlaneseq
          %v1230 = vshrl.u32 %v1229, 7
          %v1231 = vsub.s32 %v1228, %v1230
          %v1232 = vrot.slane %v1224, %v1231
          %v1234 = vunpack.c.l.s4 1934713408
          %v1235 = vunpack.c.0.s8 %v1234
          %v1236 = vlaneseq
          %v1237 = vshrl.u32 %v1236, 7
          %v1238 = vsub.s32 %v1235, %v1237
          %v1239 = vrot.slane %v1225, %v1238
          %v1240 = vcombine.high %v1216, 0.0
          %v1241 = vcombine.high %v1223, 0.0
          %v1242 = vcombine.high %v1232, 0.0
          %v1243 = vcombine.high %v1239, 0.0
          %v1244 = vcombine.low %v1148, %v1155
          %v1246 = vunpack.c.l.s4 1983009808
          %v1247 = vunpack.c.0.s8 %v1246
          %v1248 = vlaneseq
          %v1249 = vshrl.u32 %v1248, 7
          %v1250 = vsub.s32 %v1247, %v1249
          %v1251 = vrot.slane %v1244, %v1250
          %v1252 = vcombine.low %v1172, %v1173
          %v1254 = vunpack.c.l.s4 1983009808
          %v1255 = vunpack.c.0.s8 %v1254
          %v1256 = vlaneseq
          %v1257 = vshrl.u32 %v1256, 7
          %v1258 = vsub.s32 %v1255, %v1257
          %v1259 = vrot.slane %v1252, %v1258
          %v1260 = vcombine.low %v1164, %v1171
          %v1262 = vunpack.c.l.s4 1983009808
          %v1263 = vunpack.c.0.s8 %v1262
          %v1264 = vlaneseq
          %v1265 = vshrl.u32 %v1264, 7
          %v1266 = vsub.s32 %v1263, %v1265
          %v1267 = vrot.slane %v1260, %v1266
          %v1268 = vcombine.low %v1174, %v1175
          %v1270 = vunpack.c.l.s4 1983009808
          %v1271 = vunpack.c.0.s8 %v1270
          %v1272 = vlaneseq
          %v1273 = vshrl.u32 %v1272, 7
          %v1274 = vsub.s32 %v1271, %v1273
          %v1275 = vrot.slane %v1268, %v1274
          %v1276 = vcombine.low %v1251, %v1259
          %v1277 = vcombine.high %v1251, %v1259
          %v1279 = vunpack.c.l.s4 1934713408
          %v1280 = vunpack.c.0.s8 %v1279
          %v1281 = vlaneseq
          %v1282 = vshrl.u32 %v1281, 7
          %v1283 = vsub.s32 %v1280, %v1282
          %v1284 = vrot.slane %v1276, %v1283
          %v1286 = vunpack.c.l.s4 1934713408
          %v1287 = vunpack.c.0.s8 %v1286
          %v1288 = vlaneseq
          %v1289 = vshrl.u32 %v1288, 7
          %v1290 = vsub.s32 %v1287, %v1289
          %v1291 = vrot.slane %v1277, %v1290
          %v1292 = vcombine.low %v1267, %v1275
          %v1293 = vcombine.high %v1267, %v1275
          %v1295 = vunpack.c.l.s4 1934713408
          %v1296 = vunpack.c.0.s8 %v1295
          %v1297 = vlaneseq
          %v1298 = vshrl.u32 %v1297, 7
          %v1299 = vsub.s32 %v1296, %v1298
          %v1300 = vrot.slane %v1292, %v1299
          %v1302 = vunpack.c.l.s4 1934713408
          %v1303 = vunpack.c.0.s8 %v1302
          %v1304 = vlaneseq
          %v1305 = vshrl.u32 %v1304, 7
          %v1306 = vsub.s32 %v1303, %v1305
          %v1307 = vrot.slane %v1293, %v1306
          %v1308 = vcombine.low %v1284, %v1300
          %v1309 = vcombine.high %v1284, %v1300
          %v1310 = vcombine.low %v1291, %v1307
          %v1311 = vcombine.high %v1291, %v1307
          %v1312 = vcombine.low %v1216, %v1223
          %v1314 = vunpack.c.l.s4 1983009808
          %v1315 = vunpack.c.0.s8 %v1314
          %v1316 = vlaneseq
          %v1317 = vshrl.u32 %v1316, 7
          %v1318 = vsub.s32 %v1315, %v1317
          %v1319 = vrot.slane %v1312, %v1318
          %v1320 = vcombine.low %v1240, %v1241
          %v1322 = vunpack.c.l.s4 1983009808
          %v1323 = vunpack.c.0.s8 %v1322
          %v1324 = vlaneseq
          %v1325 = vshrl.u32 %v1324, 7
          %v1326 = vsub.s32 %v1323, %v1325
          %v1327 = vrot.slane %v1320, %v1326
          %v1328 = vcombine.low %v1232, %v1239
          %v1330 = vunpack.c.l.s4 1983009808
          %v1331 = vunpack.c.0.s8 %v1330
          %v1332 = vlaneseq
          %v1333 = vshrl.u32 %v1332, 7
          %v1334 = vsub.s32 %v1331, %v1333
          %v1335 = vrot.slane %v1328, %v1334
          %v1336 = vcombine.low %v1242, %v1243
          %v1338 = vunpack.c.l.s4 1983009808
          %v1339 = vunpack.c.0.s8 %v1338
          %v1340 = vlaneseq
          %v1341 = vshrl.u32 %v1340, 7
          %v1342 = vsub.s32 %v1339, %v1341
          %v1343 = vrot.slane %v1336, %v1342
          %v1344 = vcombine.low %v1319, %v1327
          %v1345 = vcombine.high %v1319, %v1327
          %v1347 = vunpack.c.l.s4 1934713408
          %v1348 = vunpack.c.0.s8 %v1347
          %v1349 = vlaneseq
          %v1350 = vshrl.u32 %v1349, 7
          %v1351 = vsub.s32 %v1348, %v1350
          %v1352 = vrot.slane %v1344, %v1351
          %v1354 = vunpack.c.l.s4 1934713408
          %v1355 = vunpack.c.0.s8 %v1354
          %v1356 = vlaneseq
          %v1357 = vshrl.u32 %v1356, 7
          %v1358 = vsub.s32 %v1355, %v1357
          %v1359 = vrot.slane %v1345, %v1358
          %v1360 = vcombine.low %v1335, %v1343
          %v1361 = vcombine.high %v1335, %v1343
          %v1363 = vunpack.c.l.s4 1934713408
          %v1364 = vunpack.c.0.s8 %v1363
          %v1365 = vlaneseq
          %v1366 = vshrl.u32 %v1365, 7
          %v1367 = vsub.s32 %v1364, %v1366
          %v1368 = vrot.slane %v1360, %v1367
          %v1370 = vunpack.c.l.s4 1934713408
          %v1371 = vunpack.c.0.s8 %v1370
          %v1372 = vlaneseq
          %v1373 = vshrl.u32 %v1372, 7
          %v1374 = vsub.s32 %v1371, %v1373
          %v1375 = vrot.slane %v1361, %v1374
          %v1376 = vcombine.low %v1352, %v1368
          %v1377 = vcombine.high %v1352, %v1368
          %v1378 = vcombine.low %v1359, %v1375
          %v1379 = vcombine.high %v1359, %v1375
          %1382 = vrot.lane.b32.xlu0 %v940, 112
          %v1383 = vpop.permute.xlu0 %1382
          %1384 = vrot.lane.b32.xlu0 %v941, 112
          %v1385 = vpop.permute.xlu0 %1384
          %1386 = vrot.lane.b32.xlu0 %v940, 96
          %v1387 = vpop.permute.xlu0 %1386
          %1388 = vrot.lane.b32.xlu0 %v941, 96
          %v1389 = vpop.permute.xlu0 %1388
          %1390 = vrot.lane.b32.xlu0 %v940, 80
          %v1391 = vpop.permute.xlu0 %1390
          %1392 = vrot.lane.b32.xlu0 %v941, 80
          %v1393 = vpop.permute.xlu0 %1392
          %1394 = vrot.lane.b32.xlu0 %v940, 64
          %v1395 = vpop.permute.xlu0 %1394
          %1396 = vrot.lane.b32.xlu0 %v941, 64
          %v1397 = vpop.permute.xlu0 %1396
          %1398 = vrot.lane.b32.xlu0 %v1383, 64
          %v1399 = vpop.permute.xlu0 %1398
          %1400 = vrot.lane.b32.xlu0 %v1385, 64
          %v1401 = vpop.permute.xlu0 %1400
          %1402 = vrot.lane.b32.xlu0 %v1387, 64
          %v1403 = vpop.permute.xlu0 %1402
          %1404 = vrot.lane.b32.xlu0 %v1389, 64
          %v1405 = vpop.permute.xlu0 %1404
          %1406 = vrot.lane.b32.xlu0 %v1391, 64
          %v1407 = vpop.permute.xlu0 %1406
          %1408 = vrot.lane.b32.xlu0 %v1393, 64
          %v1409 = vpop.permute.xlu0 %1408
          %v1418 = vcombine.low %v1395, %v1403
          %v1419 = vcombine.high %v1395, %v1403
          %v1421 = vunpack.c.l.s4 1983009808
          %v1422 = vunpack.c.0.s8 %v1421
          %v1423 = vlaneseq
          %v1424 = vshrl.u32 %v1423, 7
          %v1425 = vsub.s32 %v1422, %v1424
          %v1426 = vrot.slane %v1418, %v1425
          %v1428 = vunpack.c.l.s4 1983009808
          %v1429 = vunpack.c.0.s8 %v1428
          %v1430 = vlaneseq
          %v1431 = vshrl.u32 %v1430, 7
          %v1432 = vsub.s32 %v1429, %v1431
          %v1433 = vrot.slane %v1419, %v1432
          %v1434 = vcombine.low %v1399, %v1407
          %v1435 = vcombine.high %v1399, %v1407
          %v1437 = vunpack.c.l.s4 1983009808
          %v1438 = vunpack.c.0.s8 %v1437
          %v1439 = vlaneseq
          %v1440 = vshrl.u32 %v1439, 7
          %v1441 = vsub.s32 %v1438, %v1440
          %v1442 = vrot.slane %v1434, %v1441
          %v1444 = vunpack.c.l.s4 1983009808
          %v1445 = vunpack.c.0.s8 %v1444
          %v1446 = vlaneseq
          %v1447 = vshrl.u32 %v1446, 7
          %v1448 = vsub.s32 %v1445, %v1447
          %v1449 = vrot.slane %v1435, %v1448
          %v1450 = vcombine.low %v1426, %v1442
          %v1451 = vcombine.high %v1426, %v1442
          %v1453 = vunpack.c.l.s4 1934713408
          %v1454 = vunpack.c.0.s8 %v1453
          %v1455 = vlaneseq
          %v1456 = vshrl.u32 %v1455, 7
          %v1457 = vsub.s32 %v1454, %v1456
          %v1458 = vrot.slane %v1450, %v1457
          %v1460 = vunpack.c.l.s4 1934713408
          %v1461 = vunpack.c.0.s8 %v1460
          %v1462 = vlaneseq
          %v1463 = vshrl.u32 %v1462, 7
          %v1464 = vsub.s32 %v1461, %v1463
          %v1465 = vrot.slane %v1451, %v1464
          %v1466 = vcombine.low %v1433, %v1449
          %v1467 = vcombine.high %v1433, %v1449
          %v1469 = vunpack.c.l.s4 1934713408
          %v1470 = vunpack.c.0.s8 %v1469
          %v1471 = vlaneseq
          %v1472 = vshrl.u32 %v1471, 7
          %v1473 = vsub.s32 %v1470, %v1472
          %v1474 = vrot.slane %v1466, %v1473
          %v1476 = vunpack.c.l.s4 1934713408
          %v1477 = vunpack.c.0.s8 %v1476
          %v1478 = vlaneseq
          %v1479 = vshrl.u32 %v1478, 7
          %v1480 = vsub.s32 %v1477, %v1479
          %v1481 = vrot.slane %v1467, %v1480
          %v1482 = vcombine.high %v1458, 0.0
          %v1483 = vcombine.high %v1465, 0.0
          %v1484 = vcombine.high %v1474, 0.0
          %v1485 = vcombine.high %v1481, 0.0
          %v1486 = vcombine.low %v1397, %v1405
          %v1487 = vcombine.high %v1397, %v1405
          %v1489 = vunpack.c.l.s4 1983009808
          %v1490 = vunpack.c.0.s8 %v1489
          %v1491 = vlaneseq
          %v1492 = vshrl.u32 %v1491, 7
          %v1493 = vsub.s32 %v1490, %v1492
          %v1494 = vrot.slane %v1486, %v1493
          %v1496 = vunpack.c.l.s4 1983009808
          %v1497 = vunpack.c.0.s8 %v1496
          %v1498 = vlaneseq
          %v1499 = vshrl.u32 %v1498, 7
          %v1500 = vsub.s32 %v1497, %v1499
          %v1501 = vrot.slane %v1487, %v1500
          %v1502 = vcombine.low %v1401, %v1409
          %v1503 = vcombine.high %v1401, %v1409
          %v1505 = vunpack.c.l.s4 1983009808
          %v1506 = vunpack.c.0.s8 %v1505
          %v1507 = vlaneseq
          %v1508 = vshrl.u32 %v1507, 7
          %v1509 = vsub.s32 %v1506, %v1508
          %v1510 = vrot.slane %v1502, %v1509
          %v1512 = vunpack.c.l.s4 1983009808
          %v1513 = vunpack.c.0.s8 %v1512
          %v1514 = vlaneseq
          %v1515 = vshrl.u32 %v1514, 7
          %v1516 = vsub.s32 %v1513, %v1515
          %v1517 = vrot.slane %v1503, %v1516
          %v1518 = vcombine.low %v1494, %v1510
          %v1519 = vcombine.high %v1494, %v1510
          %v1521 = vunpack.c.l.s4 1934713408
          %v1522 = vunpack.c.0.s8 %v1521
          %v1523 = vlaneseq
          %v1524 = vshrl.u32 %v1523, 7
          %v1525 = vsub.s32 %v1522, %v1524
          %v1526 = vrot.slane %v1518, %v1525
          %v1528 = vunpack.c.l.s4 1934713408
          %v1529 = vunpack.c.0.s8 %v1528
          %v1530 = vlaneseq
          %v1531 = vshrl.u32 %v1530, 7
          %v1532 = vsub.s32 %v1529, %v1531
          %v1533 = vrot.slane %v1519, %v1532
          %v1534 = vcombine.low %v1501, %v1517
          %v1535 = vcombine.high %v1501, %v1517
          %v1537 = vunpack.c.l.s4 1934713408
          %v1538 = vunpack.c.0.s8 %v1537
          %v1539 = vlaneseq
          %v1540 = vshrl.u32 %v1539, 7
          %v1541 = vsub.s32 %v1538, %v1540
          %v1542 = vrot.slane %v1534, %v1541
          %v1544 = vunpack.c.l.s4 1934713408
          %v1545 = vunpack.c.0.s8 %v1544
          %v1546 = vlaneseq
          %v1547 = vshrl.u32 %v1546, 7
          %v1548 = vsub.s32 %v1545, %v1547
          %v1549 = vrot.slane %v1535, %v1548
          %v1550 = vcombine.high %v1526, 0.0
          %v1551 = vcombine.high %v1533, 0.0
          %v1552 = vcombine.high %v1542, 0.0
          %v1553 = vcombine.high %v1549, 0.0
          %v1554 = vcombine.low %v1458, %v1465
          %v1556 = vunpack.c.l.s4 1983009808
          %v1557 = vunpack.c.0.s8 %v1556
          %v1558 = vlaneseq
          %v1559 = vshrl.u32 %v1558, 7
          %v1560 = vsub.s32 %v1557, %v1559
          %v1561 = vrot.slane %v1554, %v1560
          %v1562 = vcombine.low %v1482, %v1483
          %v1564 = vunpack.c.l.s4 1983009808
          %v1565 = vunpack.c.0.s8 %v1564
          %v1566 = vlaneseq
          %v1567 = vshrl.u32 %v1566, 7
          %v1568 = vsub.s32 %v1565, %v1567
          %v1569 = vrot.slane %v1562, %v1568
          %v1570 = vcombine.low %v1474, %v1481
          %v1572 = vunpack.c.l.s4 1983009808
          %v1573 = vunpack.c.0.s8 %v1572
          %v1574 = vlaneseq
          %v1575 = vshrl.u32 %v1574, 7
          %v1576 = vsub.s32 %v1573, %v1575
          %v1577 = vrot.slane %v1570, %v1576
          %v1578 = vcombine.low %v1484, %v1485
          %v1580 = vunpack.c.l.s4 1983009808
          %v1581 = vunpack.c.0.s8 %v1580
          %v1582 = vlaneseq
          %v1583 = vshrl.u32 %v1582, 7
          %v1584 = vsub.s32 %v1581, %v1583
          %v1585 = vrot.slane %v1578, %v1584
          %v1586 = vcombine.low %v1561, %v1569
          %v1587 = vcombine.high %v1561, %v1569
          %v1589 = vunpack.c.l.s4 1934713408
          %v1590 = vunpack.c.0.s8 %v1589
          %v1591 = vlaneseq
          %v1592 = vshrl.u32 %v1591, 7
          %v1593 = vsub.s32 %v1590, %v1592
          %v1594 = vrot.slane %v1586, %v1593
          %v1596 = vunpack.c.l.s4 1934713408
          %v1597 = vunpack.c.0.s8 %v1596
          %v1598 = vlaneseq
          %v1599 = vshrl.u32 %v1598, 7
          %v1600 = vsub.s32 %v1597, %v1599
          %v1601 = vrot.slane %v1587, %v1600
          %v1602 = vcombine.low %v1577, %v1585
          %v1603 = vcombine.high %v1577, %v1585
          %v1605 = vunpack.c.l.s4 1934713408
          %v1606 = vunpack.c.0.s8 %v1605
          %v1607 = vlaneseq
          %v1608 = vshrl.u32 %v1607, 7
          %v1609 = vsub.s32 %v1606, %v1608
          %v1610 = vrot.slane %v1602, %v1609
          %v1612 = vunpack.c.l.s4 1934713408
          %v1613 = vunpack.c.0.s8 %v1612
          %v1614 = vlaneseq
          %v1615 = vshrl.u32 %v1614, 7
          %v1616 = vsub.s32 %v1613, %v1615
          %v1617 = vrot.slane %v1603, %v1616
          %v1618 = vcombine.low %v1594, %v1610
          %v1619 = vcombine.high %v1594, %v1610
          %v1620 = vcombine.low %v1601, %v1617
          %v1621 = vcombine.high %v1601, %v1617
          %v1622 = vcombine.low %v1526, %v1533
          %v1624 = vunpack.c.l.s4 1983009808
          %v1625 = vunpack.c.0.s8 %v1624
          %v1626 = vlaneseq
          %v1627 = vshrl.u32 %v1626, 7
          %v1628 = vsub.s32 %v1625, %v1627
          %v1629 = vrot.slane %v1622, %v1628
          %v1630 = vcombine.low %v1550, %v1551
          %v1632 = vunpack.c.l.s4 1983009808
          %v1633 = vunpack.c.0.s8 %v1632
          %v1634 = vlaneseq
          %v1635 = vshrl.u32 %v1634, 7
          %v1636 = vsub.s32 %v1633, %v1635
          %v1637 = vrot.slane %v1630, %v1636
          %v1638 = vcombine.low %v1542, %v1549
          %v1640 = vunpack.c.l.s4 1983009808
          %v1641 = vunpack.c.0.s8 %v1640
          %v1642 = vlaneseq
          %v1643 = vshrl.u32 %v1642, 7
          %v1644 = vsub.s32 %v1641, %v1643
          %v1645 = vrot.slane %v1638, %v1644
          %v1646 = vcombine.low %v1552, %v1553
          %v1648 = vunpack.c.l.s4 1983009808
          %v1649 = vunpack.c.0.s8 %v1648
          %v1650 = vlaneseq
          %v1651 = vshrl.u32 %v1650, 7
          %v1652 = vsub.s32 %v1649, %v1651
          %v1653 = vrot.slane %v1646, %v1652
          %v1654 = vcombine.low %v1629, %v1637
          %v1655 = vcombine.high %v1629, %v1637
          %v1657 = vunpack.c.l.s4 1934713408
          %v1658 = vunpack.c.0.s8 %v1657
          %v1659 = vlaneseq
          %v1660 = vshrl.u32 %v1659, 7
          %v1661 = vsub.s32 %v1658, %v1660
          %v1662 = vrot.slane %v1654, %v1661
          %v1664 = vunpack.c.l.s4 1934713408
          %v1665 = vunpack.c.0.s8 %v1664
          %v1666 = vlaneseq
          %v1667 = vshrl.u32 %v1666, 7
          %v1668 = vsub.s32 %v1665, %v1667
          %v1669 = vrot.slane %v1655, %v1668
          %v1670 = vcombine.low %v1645, %v1653
          %v1671 = vcombine.high %v1645, %v1653
          %v1673 = vunpack.c.l.s4 1934713408
          %v1674 = vunpack.c.0.s8 %v1673
          %v1675 = vlaneseq
          %v1676 = vshrl.u32 %v1675, 7
          %v1677 = vsub.s32 %v1674, %v1676
          %v1678 = vrot.slane %v1670, %v1677
          %v1680 = vunpack.c.l.s4 1934713408
          %v1681 = vunpack.c.0.s8 %v1680
          %v1682 = vlaneseq
          %v1683 = vshrl.u32 %v1682, 7
          %v1684 = vsub.s32 %v1681, %v1683
          %v1685 = vrot.slane %v1671, %v1684
          %v1686 = vcombine.low %v1662, %v1678
          %v1687 = vcombine.high %v1662, %v1678
          %v1688 = vcombine.low %v1669, %v1685
          %v1689 = vcombine.high %v1669, %v1685
          %vm1690 = vcmask 130048
          %v1692 = vsel %vm1690, %v1084, 0
          %v1695 = vsel %vm1690, %v1308, 0
          %v1698 = vsel %vm1690, %v1376, 0
          %1700 = vmatprep.subr.mxu0 0.0
          %1701 = vmatpush1.xpose.msra.mxu0 %v1695
          %1702 = vmatprep.subr.mxu0 0.0
          %1703 = vmatpush1.xpose.msra.mxu0 %v1698
          %1704 = vmatprep.subr.mxu0 0.0
          %1705 = vmatpush1.xpose.msra.mxu0 0.0
          %1706 = vmatprep.subr.mxu0 0.0
          %1707 = vmatpush1.xpose.msra.mxu0 0.0
          %1708 = vmatprep.subr.mxu0 0.0
          %1709 = vmatpush1.xpose.msra.mxu0 0.0
          %1710 = vmatprep.subr.mxu0 0.0
          %1711 = vmatpush1.xpose.msra.mxu0 0.0
          %1712 = vmatprep.subr.mxu0 0.0
          %1713 = vmatpush1.xpose.msra.mxu0 0.0
          %1714 = vmatprep.subr.mxu0 0.0
          %1715 = vmatpush1.xpose.msra.mxu0 0.0
          %1716 = vmatprep.subr.mxu0 0.0
          %1717 = vmatpush1.xpose.msra.mxu0 0.0
          %1718 = vmatprep.subr.mxu0 0.0
          %1719 = vmatpush1.xpose.msra.mxu0 0.0
          %1720 = vmatprep.subr.mxu0 0.0
          %1721 = vmatpush1.xpose.msra.mxu0 0.0
          %1722 = vmatprep.subr.mxu0 0.0
          %1723 = vmatpush1.xpose.msra.mxu0 0.0
          %1724 = vmatprep.subr.mxu0 0.0
          %1725 = vmatpush1.xpose.msra.mxu0 0.0
          %1726 = vmatprep.subr.mxu0 0.0
          %1727 = vmatpush1.xpose.msra.mxu0 0.0
          %1728 = vmatprep.subr.mxu0 0.0
          %1729 = vmatpush1.xpose.msra.mxu0 0.0
          %1730 = vmatprep.subr.mxu0 0.0
          %1731 = vmatpush1.xpose.msra.mxu0 0.0
          %1732 = vmatprep.subr.mxu0 0.0
          %1733 = vmatpush1.xpose.msra.mxu0 0.0
          %1734 = vmatprep.subr.mxu0 0.0
          %1735 = vmatpush1.xpose.msra.mxu0 0.0
          %1736 = vmatprep.subr.mxu0 0.0
          %1737 = vmatpush1.xpose.msra.mxu0 0.0
          %1738 = vmatprep.subr.mxu0 0.0
          %1739 = vmatpush1.xpose.msra.mxu0 0.0
          %1740 = vmatprep.subr.mxu0 0.0
          %1741 = vmatpush1.xpose.msra.mxu0 0.0
          %1742 = vmatprep.subr.mxu0 0.0
          %1743 = vmatpush1.xpose.msra.mxu0 0.0
          %1744 = vmatprep.subr.mxu0 0.0
          %1745 = vmatpush1.xpose.msra.mxu0 0.0
          %1746 = vmatprep.subr.mxu0 0.0
          %1747 = vmatpush1.xpose.msra.mxu0 0.0
          %1748 = vmatprep.subr.mxu0 0.0
          %1749 = vmatpush1.xpose.msra.mxu0 0.0
          %1750 = vmatprep.subr.mxu0 0.0
          %1751 = vmatpush1.xpose.msra.mxu0 0.0
          %1752 = vmatprep.subr.mxu0 0.0
          %1753 = vmatpush1.xpose.msra.mxu0 0.0
          %1754 = vmatprep.subr.mxu0 0.0
          %1755 = vmatpush1.xpose.msra.mxu0 0.0
          %1756 = vmatprep.subr.mxu0 0.0
          %1757 = vmatpush1.xpose.msra.mxu0 0.0
          %1758 = vmatprep.subr.mxu0 0.0
          %1759 = vmatpush1.xpose.msra.mxu0 0.0
          %1760 = vmatprep.subr.mxu0 0.0
          %1761 = vmatpush1.xpose.msra.mxu0 0.0
          %1762 = vmatprep.subr.mxu0 0.0
          %1763 = vmatpush1.xpose.msra.mxu0 0.0
          %1764 = vmatprep.mubr.f32.mxu0 0.0
          %1765 = vmatmul.mubr.f32.gmra.mrb[0].mxu0 %v1692
          %v1766 = vpop.f32.mrb[0].mxu0
          %v1767 = vadd.f32 0.0, %v1766
          %v1768 = vpop.f32.mrb[0].mxu0
          %1769 = vdwg.mxu0
          %v1771 = vsel %vm1690, %v1085, 0
          %v1774 = vsel %vm1690, %v1309, 0
          %v1777 = vsel %vm1690, %v1377, 0
          %1779 = vmatprep.subr.mxu0 0.0
          %1780 = vmatpush1.xpose.msra.mxu0 %v1774
          %1781 = vmatprep.subr.mxu0 0.0
          %1782 = vmatpush1.xpose.msra.mxu0 %v1777
          %1783 = vmatprep.subr.mxu0 0.0
          %1784 = vmatpush1.xpose.msra.mxu0 0.0
          %1785 = vmatprep.subr.mxu0 0.0
          %1786 = vmatpush1.xpose.msra.mxu0 0.0
          %1787 = vmatprep.subr.mxu0 0.0
          %1788 = vmatpush1.xpose.msra.mxu0 0.0
          %1789 = vmatprep.subr.mxu0 0.0
          %1790 = vmatpush1.xpose.msra.mxu0 0.0
          %1791 = vmatprep.subr.mxu0 0.0
          %1792 = vmatpush1.xpose.msra.mxu0 0.0
          %1793 = vmatprep.subr.mxu0 0.0
          %1794 = vmatpush1.xpose.msra.mxu0 0.0
          %1795 = vmatprep.subr.mxu0 0.0
          %1796 = vmatpush1.xpose.msra.mxu0 0.0
          %1797 = vmatprep.subr.mxu0 0.0
          %1798 = vmatpush1.xpose.msra.mxu0 0.0
          %1799 = vmatprep.subr.mxu0 0.0
          %1800 = vmatpush1.xpose.msra.mxu0 0.0
          %1801 = vmatprep.subr.mxu0 0.0
          %1802 = vmatpush1.xpose.msra.mxu0 0.0
          %1803 = vmatprep.subr.mxu0 0.0
          %1804 = vmatpush1.xpose.msra.mxu0 0.0
          %1805 = vmatprep.subr.mxu0 0.0
          %1806 = vmatpush1.xpose.msra.mxu0 0.0
          %1807 = vmatprep.subr.mxu0 0.0
          %1808 = vmatpush1.xpose.msra.mxu0 0.0
          %1809 = vmatprep.subr.mxu0 0.0
          %1810 = vmatpush1.xpose.msra.mxu0 0.0
          %1811 = vmatprep.subr.mxu0 0.0
          %1812 = vmatpush1.xpose.msra.mxu0 0.0
          %1813 = vmatprep.subr.mxu0 0.0
          %1814 = vmatpush1.xpose.msra.mxu0 0.0
          %1815 = vmatprep.subr.mxu0 0.0
          %1816 = vmatpush1.xpose.msra.mxu0 0.0
          %1817 = vmatprep.subr.mxu0 0.0
          %1818 = vmatpush1.xpose.msra.mxu0 0.0
          %1819 = vmatprep.subr.mxu0 0.0
          %1820 = vmatpush1.xpose.msra.mxu0 0.0
          %1821 = vmatprep.subr.mxu0 0.0
          %1822 = vmatpush1.xpose.msra.mxu0 0.0
          %1823 = vmatprep.subr.mxu0 0.0
          %1824 = vmatpush1.xpose.msra.mxu0 0.0
          %1825 = vmatprep.subr.mxu0 0.0
          %1826 = vmatpush1.xpose.msra.mxu0 0.0
          %1827 = vmatprep.subr.mxu0 0.0
          %1828 = vmatpush1.xpose.msra.mxu0 0.0
          %1829 = vmatprep.subr.mxu0 0.0
          %1830 = vmatpush1.xpose.msra.mxu0 0.0
          %1831 = vmatprep.subr.mxu0 0.0
          %1832 = vmatpush1.xpose.msra.mxu0 0.0
          %1833 = vmatprep.subr.mxu0 0.0
          %1834 = vmatpush1.xpose.msra.mxu0 0.0
          %1835 = vmatprep.subr.mxu0 0.0
          %1836 = vmatpush1.xpose.msra.mxu0 0.0
          %1837 = vmatprep.subr.mxu0 0.0
          %1838 = vmatpush1.xpose.msra.mxu0 0.0
          %1839 = vmatprep.subr.mxu0 0.0
          %1840 = vmatpush1.xpose.msra.mxu0 0.0
          %1841 = vmatprep.subr.mxu0 0.0
          %1842 = vmatpush1.xpose.msra.mxu0 0.0
          %1843 = vmatprep.mubr.f32.mxu0 0.0
          %1844 = vmatmul.mubr.f32.gmra.mrb[0].mxu0 %v1771
          %v1845 = vpop.f32.mrb[0].mxu0
          %v1846 = vadd.f32 0.0, %v1845
          %v1847 = vpop.f32.mrb[0].mxu0
          %1848 = vdwg.mxu0
          %v1850 = vsel %vm1690, %v1086, 0
          %v1853 = vsel %vm1690, %v1310, 0
          %v1856 = vsel %vm1690, %v1378, 0
          %1858 = vmatprep.subr.mxu0 0.0
          %1859 = vmatpush1.xpose.msra.mxu0 %v1853
          %1860 = vmatprep.subr.mxu0 0.0
          %1861 = vmatpush1.xpose.msra.mxu0 %v1856
          %1862 = vmatprep.subr.mxu0 0.0
          %1863 = vmatpush1.xpose.msra.mxu0 0.0
          %1864 = vmatprep.subr.mxu0 0.0
          %1865 = vmatpush1.xpose.msra.mxu0 0.0
          %1866 = vmatprep.subr.mxu0 0.0
          %1867 = vmatpush1.xpose.msra.mxu0 0.0
          %1868 = vmatprep.subr.mxu0 0.0
          %1869 = vmatpush1.xpose.msra.mxu0 0.0
          %1870 = vmatprep.subr.mxu0 0.0
          %1871 = vmatpush1.xpose.msra.mxu0 0.0
          %1872 = vmatprep.subr.mxu0 0.0
          %1873 = vmatpush1.xpose.msra.mxu0 0.0
          %1874 = vmatprep.subr.mxu0 0.0
          %1875 = vmatpush1.xpose.msra.mxu0 0.0
          %1876 = vmatprep.subr.mxu0 0.0
          %1877 = vmatpush1.xpose.msra.mxu0 0.0
          %1878 = vmatprep.subr.mxu0 0.0
          %1879 = vmatpush1.xpose.msra.mxu0 0.0
          %1880 = vmatprep.subr.mxu0 0.0
          %1881 = vmatpush1.xpose.msra.mxu0 0.0
          %1882 = vmatprep.subr.mxu0 0.0
          %1883 = vmatpush1.xpose.msra.mxu0 0.0
          %1884 = vmatprep.subr.mxu0 0.0
          %1885 = vmatpush1.xpose.msra.mxu0 0.0
          %1886 = vmatprep.subr.mxu0 0.0
          %1887 = vmatpush1.xpose.msra.mxu0 0.0
          %1888 = vmatprep.subr.mxu0 0.0
          %1889 = vmatpush1.xpose.msra.mxu0 0.0
          %1890 = vmatprep.subr.mxu0 0.0
          %1891 = vmatpush1.xpose.msra.mxu0 0.0
          %1892 = vmatprep.subr.mxu0 0.0
          %1893 = vmatpush1.xpose.msra.mxu0 0.0
          %1894 = vmatprep.subr.mxu0 0.0
          %1895 = vmatpush1.xpose.msra.mxu0 0.0
          %1896 = vmatprep.subr.mxu0 0.0
          %1897 = vmatpush1.xpose.msra.mxu0 0.0
          %1898 = vmatprep.subr.mxu0 0.0
          %1899 = vmatpush1.xpose.msra.mxu0 0.0
          %1900 = vmatprep.subr.mxu0 0.0
          %1901 = vmatpush1.xpose.msra.mxu0 0.0
          %1902 = vmatprep.subr.mxu0 0.0
          %1903 = vmatpush1.xpose.msra.mxu0 0.0
          %1904 = vmatprep.subr.mxu0 0.0
          %1905 = vmatpush1.xpose.msra.mxu0 0.0
          %1906 = vmatprep.subr.mxu0 0.0
          %1907 = vmatpush1.xpose.msra.mxu0 0.0
          %1908 = vmatprep.subr.mxu0 0.0
          %1909 = vmatpush1.xpose.msra.mxu0 0.0
          %1910 = vmatprep.subr.mxu0 0.0
          %1911 = vmatpush1.xpose.msra.mxu0 0.0
          %1912 = vmatprep.subr.mxu0 0.0
          %1913 = vmatpush1.xpose.msra.mxu0 0.0
          %1914 = vmatprep.subr.mxu0 0.0
          %1915 = vmatpush1.xpose.msra.mxu0 0.0
          %1916 = vmatprep.subr.mxu0 0.0
          %1917 = vmatpush1.xpose.msra.mxu0 0.0
          %1918 = vmatprep.subr.mxu0 0.0
          %1919 = vmatpush1.xpose.msra.mxu0 0.0
          %1920 = vmatprep.subr.mxu0 0.0
          %1921 = vmatpush1.xpose.msra.mxu0 0.0
          %1922 = vmatprep.mubr.f32.mxu0 0.0
          %1923 = vmatmul.mubr.f32.gmra.mrb[0].mxu0 %v1850
          %v1924 = vpop.f32.mrb[0].mxu0
          %v1925 = vadd.f32 0.0, %v1924
          %v1926 = vpop.f32.mrb[0].mxu0
          %1927 = vdwg.mxu0
          %v1929 = vsel %vm1690, %v1087, 0
          %v1932 = vsel %vm1690, %v1311, 0
          %v1935 = vsel %vm1690, %v1379, 0
          %1937 = vmatprep.subr.mxu0 0.0
          %1938 = vmatpush1.xpose.msra.mxu0 %v1932
          %1939 = vmatprep.subr.mxu0 0.0
          %1940 = vmatpush1.xpose.msra.mxu0 %v1935
          %1941 = vmatprep.subr.mxu0 0.0
          %1942 = vmatpush1.xpose.msra.mxu0 0.0
          %1943 = vmatprep.subr.mxu0 0.0
          %1944 = vmatpush1.xpose.msra.mxu0 0.0
          %1945 = vmatprep.subr.mxu0 0.0
          %1946 = vmatpush1.xpose.msra.mxu0 0.0
          %1947 = vmatprep.subr.mxu0 0.0
          %1948 = vmatpush1.xpose.msra.mxu0 0.0
          %1949 = vmatprep.subr.mxu0 0.0
          %1950 = vmatpush1.xpose.msra.mxu0 0.0
          %1951 = vmatprep.subr.mxu0 0.0
          %1952 = vmatpush1.xpose.msra.mxu0 0.0
          %1953 = vmatprep.subr.mxu0 0.0
          %1954 = vmatpush1.xpose.msra.mxu0 0.0
          %1955 = vmatprep.subr.mxu0 0.0
          %1956 = vmatpush1.xpose.msra.mxu0 0.0
          %1957 = vmatprep.subr.mxu0 0.0
          %1958 = vmatpush1.xpose.msra.mxu0 0.0
          %1959 = vmatprep.subr.mxu0 0.0
          %1960 = vmatpush1.xpose.msra.mxu0 0.0
          %1961 = vmatprep.subr.mxu0 0.0
          %1962 = vmatpush1.xpose.msra.mxu0 0.0
          %1963 = vmatprep.subr.mxu0 0.0
          %1964 = vmatpush1.xpose.msra.mxu0 0.0
          %1965 = vmatprep.subr.mxu0 0.0
          %1966 = vmatpush1.xpose.msra.mxu0 0.0
          %1967 = vmatprep.subr.mxu0 0.0
          %1968 = vmatpush1.xpose.msra.mxu0 0.0
          %1969 = vmatprep.subr.mxu0 0.0
          %1970 = vmatpush1.xpose.msra.mxu0 0.0
          %1971 = vmatprep.subr.mxu0 0.0
          %1972 = vmatpush1.xpose.msra.mxu0 0.0
          %1973 = vmatprep.subr.mxu0 0.0
          %1974 = vmatpush1.xpose.msra.mxu0 0.0
          %1975 = vmatprep.subr.mxu0 0.0
          %1976 = vmatpush1.xpose.msra.mxu0 0.0
          %1977 = vmatprep.subr.mxu0 0.0
          %1978 = vmatpush1.xpose.msra.mxu0 0.0
          %1979 = vmatprep.subr.mxu0 0.0
          %1980 = vmatpush1.xpose.msra.mxu0 0.0
          %1981 = vmatprep.subr.mxu0 0.0
          %1982 = vmatpush1.xpose.msra.mxu0 0.0
          %1983 = vmatprep.subr.mxu0 0.0
          %1984 = vmatpush1.xpose.msra.mxu0 0.0
          %1985 = vmatprep.subr.mxu0 0.0
          %1986 = vmatpush1.xpose.msra.mxu0 0.0
          %1987 = vmatprep.subr.mxu0 0.0
          %1988 = vmatpush1.xpose.msra.mxu0 0.0
          %1989 = vmatprep.subr.mxu0 0.0
          %1990 = vmatpush1.xpose.msra.mxu0 0.0
          %1991 = vmatprep.subr.mxu0 0.0
          %1992 = vmatpush1.xpose.msra.mxu0 0.0
          %1993 = vmatprep.subr.mxu0 0.0
          %1994 = vmatpush1.xpose.msra.mxu0 0.0
          %1995 = vmatprep.subr.mxu0 0.0
          %1996 = vmatpush1.xpose.msra.mxu0 0.0
          %1997 = vmatprep.subr.mxu0 0.0
          %1998 = vmatpush1.xpose.msra.mxu0 0.0
          %1999 = vmatprep.subr.mxu0 0.0
          %2000 = vmatpush1.xpose.msra.mxu0 0.0
          %2001 = vmatprep.mubr.f32.mxu0 0.0
          %2002 = vmatmul.mubr.f32.gmra.mrb[0].mxu0 %v1929
          %v2003 = vpop.f32.mrb[0].mxu0
          %v2004 = vadd.f32 0.0, %v2003
          %v2005 = vpop.f32.mrb[0].mxu0
          %2006 = vdwg.mxu0
          %v2007 = vsel %vm1690, %v1767, -inf
          %2008 = vmax.xlane.f32.xlu0 %v2007
          %v2009 = vpop.xlane.xlu0 %2008
          %v2010 = vsel %vm1690, %v1846, -inf
          %2011 = vmax.xlane.f32.xlu0 %v2010
          %v2012 = vpop.xlane.xlu0 %2011
          %v2013 = vsel %vm1690, %v1925, -inf
          %2014 = vmax.xlane.f32.xlu0 %v2013
          %v2015 = vpop.xlane.xlu0 %2014
          %v2016 = vsel %vm1690, %v2004, -inf
          %2017 = vmax.xlane.f32.xlu0 %v2016
          %v2018 = vpop.xlane.xlu0 %2017
          %v2019 = vsub.f32 %v1767, %v2009
          %v2020 = vsub.f32 %v1846, %v2012
          %v2021 = vsub.f32 %v1925, %v2015
          %v2022 = vsub.f32 %v2004, %v2018
          %v2023 = vmul.f32 %v2019, 1.442695
          %v2024 = vpow.pop %v2023
          %v2025 = vmul.f32 %v2020, 1.442695
          %v2026 = vpow.pop %v2025
          %v2027 = vmul.f32 %v2021, 1.442695
          %v2028 = vpow.pop %v2027
          %v2029 = vmul.f32 %v2022, 1.442695
          %v2030 = vpow.pop %v2029
          %v2031 = vsel %vm1690, %v2024, 0.0
          %2032 = vadd.xlane.f32.xlu0 %v2031
          %v2033 = vpop.xlane.xlu0 %2032
          %v2034 = vsel %vm1690, %v2026, 0.0
          %2035 = vadd.xlane.f32.xlu0 %v2034
          %v2036 = vpop.xlane.xlu0 %2035
          %v2037 = vsel %vm1690, %v2028, 0.0
          %2038 = vadd.xlane.f32.xlu0 %v2037
          %v2039 = vpop.xlane.xlu0 %2038
          %v2040 = vsel %vm1690, %v2030, 0.0
          %2041 = vadd.xlane.f32.xlu0 %v2040
          %v2042 = vpop.xlane.xlu0 %2041
          %v2043 = vrcp.pop %v2033
          %v2044 = vmul.f32 %v2024, %v2043
          %v2045 = vrcp.pop %v2036
          %v2046 = vmul.f32 %v2026, %v2045
          %v2047 = vrcp.pop %v2039
          %v2048 = vmul.f32 %v2028, %v2047
          %v2049 = vrcp.pop %v2042
          %v2050 = vmul.f32 %v2030, %v2049
          %v2052 = vsel %vm1690, %v2044, 0
          %2054 = vmatprep.subr.mxu0 0.0
          %2055 = vmatpush1.msra.mxu0 %v1618
          %2056 = vmatprep.subr.mxu0 0.0
          %2057 = vmatpush1.msra.mxu0 %v1686
          %2058 = vmatprep.subr.mxu0 0.0
          %2059 = vmatpush1.msra.mxu0 0.0
          %2060 = vmatprep.subr.mxu0 0.0
          %2061 = vmatpush1.msra.mxu0 0.0
          %2062 = vmatprep.subr.mxu0 0.0
          %2063 = vmatpush1.msra.mxu0 0.0
          %2064 = vmatprep.subr.mxu0 0.0
          %2065 = vmatpush1.msra.mxu0 0.0
          %2066 = vmatprep.subr.mxu0 0.0
          %2067 = vmatpush1.msra.mxu0 0.0
          %2068 = vmatprep.subr.mxu0 0.0
          %2069 = vmatpush1.msra.mxu0 0.0
          %2070 = vmatprep.subr.mxu0 0.0
          %2071 = vmatpush1.msra.mxu0 0.0
          %2072 = vmatprep.subr.mxu0 0.0
          %2073 = vmatpush1.msra.mxu0 0.0
          %2074 = vmatprep.subr.mxu0 0.0
          %2075 = vmatpush1.msra.mxu0 0.0
          %2076 = vmatprep.subr.mxu0 0.0
          %2077 = vmatpush1.msra.mxu0 0.0
          %2078 = vmatprep.subr.mxu0 0.0
          %2079 = vmatpush1.msra.mxu0 0.0
          %2080 = vmatprep.subr.mxu0 0.0
          %2081 = vmatpush1.msra.mxu0 0.0
          %2082 = vmatprep.subr.mxu0 0.0
          %2083 = vmatpush1.msra.mxu0 0.0
          %2084 = vmatprep.subr.mxu0 0.0
          %2085 = vmatpush1.msra.mxu0 0.0
          %2086 = vmatprep.subr.mxu0 0.0
          %2087 = vmatpush1.msra.mxu0 0.0
          %2088 = vmatprep.subr.mxu0 0.0
          %2089 = vmatpush1.msra.mxu0 0.0
          %2090 = vmatprep.subr.mxu0 0.0
          %2091 = vmatpush1.msra.mxu0 0.0
          %2092 = vmatprep.subr.mxu0 0.0
          %2093 = vmatpush1.msra.mxu0 0.0
          %2094 = vmatprep.subr.mxu0 0.0
          %2095 = vmatpush1.msra.mxu0 0.0
          %2096 = vmatprep.subr.mxu0 0.0
          %2097 = vmatpush1.msra.mxu0 0.0
          %2098 = vmatprep.subr.mxu0 0.0
          %2099 = vmatpush1.msra.mxu0 0.0
          %2100 = vmatprep.subr.mxu0 0.0
          %2101 = vmatpush1.msra.mxu0 0.0
          %2102 = vmatprep.subr.mxu0 0.0
          %2103 = vmatpush1.msra.mxu0 0.0
          %2104 = vmatprep.subr.mxu0 0.0
          %2105 = vmatpush1.msra.mxu0 0.0
          %2106 = vmatprep.subr.mxu0 0.0
          %2107 = vmatpush1.msra.mxu0 0.0
          %2108 = vmatprep.subr.mxu0 0.0
          %2109 = vmatpush1.msra.mxu0 0.0
          %2110 = vmatprep.subr.mxu0 0.0
          %2111 = vmatpush1.msra.mxu0 0.0
          %2112 = vmatprep.subr.mxu0 0.0
          %2113 = vmatpush1.msra.mxu0 0.0
          %2114 = vmatprep.subr.mxu0 0.0
          %2115 = vmatpush1.msra.mxu0 0.0
          %2116 = vmatprep.subr.mxu0 0.0
          %2117 = vmatpush1.msra.mxu0 0.0
          %2118 = vmatprep.mubr.f32.mxu0 0.0
          %2119 = vmatmul.mubr.f32.gmra.mrb[0].mxu0 %v2052
          %v2120 = vpop.f32.mrb[0].mxu0
          %v2121 = vadd.f32 0.0, %v2120
          %v2122 = vpop.f32.mrb[0].mxu0
          %2123 = vdwg.mxu0
          %v2125 = vsel %vm1690, %v2046, 0
          %2127 = vmatprep.subr.mxu0 0.0
          %2128 = vmatpush1.msra.mxu0 %v1619
          %2129 = vmatprep.subr.mxu0 0.0
          %2130 = vmatpush1.msra.mxu0 %v1687
          %2131 = vmatprep.subr.mxu0 0.0
          %2132 = vmatpush1.msra.mxu0 0.0
          %2133 = vmatprep.subr.mxu0 0.0
          %2134 = vmatpush1.msra.mxu0 0.0
          %2135 = vmatprep.subr.mxu0 0.0
          %2136 = vmatpush1.msra.mxu0 0.0
          %2137 = vmatprep.subr.mxu0 0.0
          %2138 = vmatpush1.msra.mxu0 0.0
          %2139 = vmatprep.subr.mxu0 0.0
          %2140 = vmatpush1.msra.mxu0 0.0
          %2141 = vmatprep.subr.mxu0 0.0
          %2142 = vmatpush1.msra.mxu0 0.0
          %2143 = vmatprep.subr.mxu0 0.0
          %2144 = vmatpush1.msra.mxu0 0.0
          %2145 = vmatprep.subr.mxu0 0.0
          %2146 = vmatpush1.msra.mxu0 0.0
          %2147 = vmatprep.subr.mxu0 0.0
          %2148 = vmatpush1.msra.mxu0 0.0
          %2149 = vmatprep.subr.mxu0 0.0
          %2150 = vmatpush1.msra.mxu0 0.0
          %2151 = vmatprep.subr.mxu0 0.0
          %2152 = vmatpush1.msra.mxu0 0.0
          %2153 = vmatprep.subr.mxu0 0.0
          %2154 = vmatpush1.msra.mxu0 0.0
          %2155 = vmatprep.subr.mxu0 0.0
          %2156 = vmatpush1.msra.mxu0 0.0
          %2157 = vmatprep.subr.mxu0 0.0
          %2158 = vmatpush1.msra.mxu0 0.0
          %2159 = vmatprep.subr.mxu0 0.0
          %2160 = vmatpush1.msra.mxu0 0.0
          %2161 = vmatprep.subr.mxu0 0.0
          %2162 = vmatpush1.msra.mxu0 0.0
          %2163 = vmatprep.subr.mxu0 0.0
          %2164 = vmatpush1.msra.mxu0 0.0
          %2165 = vmatprep.subr.mxu0 0.0
          %2166 = vmatpush1.msra.mxu0 0.0
          %2167 = vmatprep.subr.mxu0 0.0
          %2168 = vmatpush1.msra.mxu0 0.0
          %2169 = vmatprep.subr.mxu0 0.0
          %2170 = vmatpush1.msra.mxu0 0.0
          %2171 = vmatprep.subr.mxu0 0.0
          %2172 = vmatpush1.msra.mxu0 0.0
          %2173 = vmatprep.subr.mxu0 0.0
          %2174 = vmatpush1.msra.mxu0 0.0
          %2175 = vmatprep.subr.mxu0 0.0
          %2176 = vmatpush1.msra.mxu0 0.0
          %2177 = vmatprep.subr.mxu0 0.0
          %2178 = vmatpush1.msra.mxu0 0.0
          %2179 = vmatprep.subr.mxu0 0.0
          %2180 = vmatpush1.msra.mxu0 0.0
          %2181 = vmatprep.subr.mxu0 0.0
          %2182 = vmatpush1.msra.mxu0 0.0
          %2183 = vmatprep.subr.mxu0 0.0
          %2184 = vmatpush1.msra.mxu0 0.0
          %2185 = vmatprep.subr.mxu0 0.0
          %2186 = vmatpush1.msra.mxu0 0.0
          %2187 = vmatprep.subr.mxu0 0.0
          %2188 = vmatpush1.msra.mxu0 0.0
          %2189 = vmatprep.subr.mxu0 0.0
          %2190 = vmatpush1.msra.mxu0 0.0
          %2191 = vmatprep.mubr.f32.mxu0 0.0
          %2192 = vmatmul.mubr.f32.gmra.mrb[0].mxu0 %v2125
          %v2193 = vpop.f32.mrb[0].mxu0
          %v2194 = vadd.f32 0.0, %v2193
          %v2195 = vpop.f32.mrb[0].mxu0
          %2196 = vdwg.mxu0
          %v2198 = vsel %vm1690, %v2048, 0
          %2200 = vmatprep.subr.mxu0 0.0
          %2201 = vmatpush1.msra.mxu0 %v1620
          %2202 = vmatprep.subr.mxu0 0.0
          %2203 = vmatpush1.msra.mxu0 %v1688
          %2204 = vmatprep.subr.mxu0 0.0
          %2205 = vmatpush1.msra.mxu0 0.0
          %2206 = vmatprep.subr.mxu0 0.0
          %2207 = vmatpush1.msra.mxu0 0.0
          %2208 = vmatprep.subr.mxu0 0.0
          %2209 = vmatpush1.msra.mxu0 0.0
          %2210 = vmatprep.subr.mxu0 0.0
          %2211 = vmatpush1.msra.mxu0 0.0
          %2212 = vmatprep.subr.mxu0 0.0
          %2213 = vmatpush1.msra.mxu0 0.0
          %2214 = vmatprep.subr.mxu0 0.0
          %2215 = vmatpush1.msra.mxu0 0.0
          %2216 = vmatprep.subr.mxu0 0.0
          %2217 = vmatpush1.msra.mxu0 0.0
          %2218 = vmatprep.subr.mxu0 0.0
          %2219 = vmatpush1.msra.mxu0 0.0
          %2220 = vmatprep.subr.mxu0 0.0
          %2221 = vmatpush1.msra.mxu0 0.0
          %2222 = vmatprep.subr.mxu0 0.0
          %2223 = vmatpush1.msra.mxu0 0.0
          %2224 = vmatprep.subr.mxu0 0.0
          %2225 = vmatpush1.msra.mxu0 0.0
          %2226 = vmatprep.subr.mxu0 0.0
          %2227 = vmatpush1.msra.mxu0 0.0
          %2228 = vmatprep.subr.mxu0 0.0
          %2229 = vmatpush1.msra.mxu0 0.0
          %2230 = vmatprep.subr.mxu0 0.0
          %2231 = vmatpush1.msra.mxu0 0.0
          %2232 = vmatprep.subr.mxu0 0.0
          %2233 = vmatpush1.msra.mxu0 0.0
          %2234 = vmatprep.subr.mxu0 0.0
          %2235 = vmatpush1.msra.mxu0 0.0
          %2236 = vmatprep.subr.mxu0 0.0
          %2237 = vmatpush1.msra.mxu0 0.0
          %2238 = vmatprep.subr.mxu0 0.0
          %2239 = vmatpush1.msra.mxu0 0.0
          %2240 = vmatprep.subr.mxu0 0.0
          %2241 = vmatpush1.msra.mxu0 0.0
          %2242 = vmatprep.subr.mxu0 0.0
          %2243 = vmatpush1.msra.mxu0 0.0
          %2244 = vmatprep.subr.mxu0 0.0
          %2245 = vmatpush1.msra.mxu0 0.0
          %2246 = vmatprep.subr.mxu0 0.0
          %2247 = vmatpush1.msra.mxu0 0.0
          %2248 = vmatprep.subr.mxu0 0.0
          %2249 = vmatpush1.msra.mxu0 0.0
          %2250 = vmatprep.subr.mxu0 0.0
          %2251 = vmatpush1.msra.mxu0 0.0
          %2252 = vmatprep.subr.mxu0 0.0
          %2253 = vmatpush1.msra.mxu0 0.0
          %2254 = vmatprep.subr.mxu0 0.0
          %2255 = vmatpush1.msra.mxu0 0.0
          %2256 = vmatprep.subr.mxu0 0.0
          %2257 = vmatpush1.msra.mxu0 0.0
          %2258 = vmatprep.subr.mxu0 0.0
          %2259 = vmatpush1.msra.mxu0 0.0
          %2260 = vmatprep.subr.mxu0 0.0
          %2261 = vmatpush1.msra.mxu0 0.0
          %2262 = vmatprep.subr.mxu0 0.0
          %2263 = vmatpush1.msra.mxu0 0.0
          %2264 = vmatprep.mubr.f32.mxu0 0.0
          %2265 = vmatmul.mubr.f32.gmra.mrb[0].mxu0 %v2198
          %v2266 = vpop.f32.mrb[0].mxu0
          %v2267 = vadd.f32 0.0, %v2266
          %v2268 = vpop.f32.mrb[0].mxu0
          %2269 = vdwg.mxu0
          %v2271 = vsel %vm1690, %v2050, 0
          %2273 = vmatprep.subr.mxu0 0.0
          %2274 = vmatpush1.msra.mxu0 %v1621
          %2275 = vmatprep.subr.mxu0 0.0
          %2276 = vmatpush1.msra.mxu0 %v1689
          %2277 = vmatprep.subr.mxu0 0.0
          %2278 = vmatpush1.msra.mxu0 0.0
          %2279 = vmatprep.subr.mxu0 0.0
          %2280 = vmatpush1.msra.mxu0 0.0
          %2281 = vmatprep.subr.mxu0 0.0
          %2282 = vmatpush1.msra.mxu0 0.0
          %2283 = vmatprep.subr.mxu0 0.0
          %2284 = vmatpush1.msra.mxu0 0.0
          %2285 = vmatprep.subr.mxu0 0.0
          %2286 = vmatpush1.msra.mxu0 0.0
          %2287 = vmatprep.subr.mxu0 0.0
          %2288 = vmatpush1.msra.mxu0 0.0
          %2289 = vmatprep.subr.mxu0 0.0
          %2290 = vmatpush1.msra.mxu0 0.0
          %2291 = vmatprep.subr.mxu0 0.0
          %2292 = vmatpush1.msra.mxu0 0.0
          %2293 = vmatprep.subr.mxu0 0.0
          %2294 = vmatpush1.msra.mxu0 0.0
          %2295 = vmatprep.subr.mxu0 0.0
          %2296 = vmatpush1.msra.mxu0 0.0
          %2297 = vmatprep.subr.mxu0 0.0
          %2298 = vmatpush1.msra.mxu0 0.0
          %2299 = vmatprep.subr.mxu0 0.0
          %2300 = vmatpush1.msra.mxu0 0.0
          %2301 = vmatprep.subr.mxu0 0.0
          %2302 = vmatpush1.msra.mxu0 0.0
          %2303 = vmatprep.subr.mxu0 0.0
          %2304 = vmatpush1.msra.mxu0 0.0
          %2305 = vmatprep.subr.mxu0 0.0
          %2306 = vmatpush1.msra.mxu0 0.0
          %2307 = vmatprep.subr.mxu0 0.0
          %2308 = vmatpush1.msra.mxu0 0.0
          %2309 = vmatprep.subr.mxu0 0.0
          %2310 = vmatpush1.msra.mxu0 0.0
          %2311 = vmatprep.subr.mxu0 0.0
          %2312 = vmatpush1.msra.mxu0 0.0
          %2313 = vmatprep.subr.mxu0 0.0
          %2314 = vmatpush1.msra.mxu0 0.0
          %2315 = vmatprep.subr.mxu0 0.0
          %2316 = vmatpush1.msra.mxu0 0.0
          %2317 = vmatprep.subr.mxu0 0.0
          %2318 = vmatpush1.msra.mxu0 0.0
          %2319 = vmatprep.subr.mxu0 0.0
          %2320 = vmatpush1.msra.mxu0 0.0
          %2321 = vmatprep.subr.mxu0 0.0
          %2322 = vmatpush1.msra.mxu0 0.0
          %2323 = vmatprep.subr.mxu0 0.0
          %2324 = vmatpush1.msra.mxu0 0.0
          %2325 = vmatprep.subr.mxu0 0.0
          %2326 = vmatpush1.msra.mxu0 0.0
          %2327 = vmatprep.subr.mxu0 0.0
          %2328 = vmatpush1.msra.mxu0 0.0
          %2329 = vmatprep.subr.mxu0 0.0
          %2330 = vmatpush1.msra.mxu0 0.0
          %2331 = vmatprep.subr.mxu0 0.0
          %2332 = vmatpush1.msra.mxu0 0.0
          %2333 = vmatprep.subr.mxu0 0.0
          %2334 = vmatpush1.msra.mxu0 0.0
          %2335 = vmatprep.subr.mxu0 0.0
          %2336 = vmatpush1.msra.mxu0 0.0
          %2337 = vmatprep.mubr.f32.mxu0 0.0
          %2338 = vmatmul.mubr.f32.gmra.mrb[0].mxu0 %v2271
          %v2339 = vpop.f32.mrb[0].mxu0
          %v2340 = vadd.f32 0.0, %v2339
          %v2341 = vpop.f32.mrb[0].mxu0
          %2342 = vdwg.mxu0
          %v2343 = vcombine.low %v2121, %v2267
          %v2344 = vcombine.high %v2121, %v2267
          %v2346 = vunpack.c.l.s4 1983009808
          %v2347 = vunpack.c.0.s8 %v2346
          %v2348 = vlaneseq
          %v2349 = vshrl.u32 %v2348, 7
          %v2350 = vsub.s32 %v2347, %v2349
          %v2351 = vrot.slane %v2343, %v2350
          %v2353 = vunpack.c.l.s4 1983009808
          %v2354 = vunpack.c.0.s8 %v2353
          %v2355 = vlaneseq
          %v2356 = vshrl.u32 %v2355, 7
          %v2357 = vsub.s32 %v2354, %v2356
          %v2358 = vrot.slane %v2344, %v2357
          %v2359 = vcombine.low %v2194, %v2340
          %v2360 = vcombine.high %v2194, %v2340
          %v2362 = vunpack.c.l.s4 1983009808
          %v2363 = vunpack.c.0.s8 %v2362
          %v2364 = vlaneseq
          %v2365 = vshrl.u32 %v2364, 7
          %v2366 = vsub.s32 %v2363, %v2365
          %v2367 = vrot.slane %v2359, %v2366
          %v2369 = vunpack.c.l.s4 1983009808
          %v2370 = vunpack.c.0.s8 %v2369
          %v2371 = vlaneseq
          %v2372 = vshrl.u32 %v2371, 7
          %v2373 = vsub.s32 %v2370, %v2372
          %v2374 = vrot.slane %v2360, %v2373
          %v2375 = vcombine.low %v2351, %v2367
          %v2376 = vcombine.high %v2351, %v2367
          %v2378 = vunpack.c.l.s4 1934713408
          %v2379 = vunpack.c.0.s8 %v2378
          %v2380 = vlaneseq
          %v2381 = vshrl.u32 %v2380, 7
          %v2382 = vsub.s32 %v2379, %v2381
          %v2383 = vrot.slane %v2375, %v2382
          %v2385 = vunpack.c.l.s4 1934713408
          %v2386 = vunpack.c.0.s8 %v2385
          %v2387 = vlaneseq
          %v2388 = vshrl.u32 %v2387, 7
          %v2389 = vsub.s32 %v2386, %v2388
          %v2390 = vrot.slane %v2376, %v2389
          %v2391 = vcombine.low %v2358, %v2374
          %v2392 = vcombine.high %v2358, %v2374
          %v2394 = vunpack.c.l.s4 1934713408
          %v2395 = vunpack.c.0.s8 %v2394
          %v2396 = vlaneseq
          %v2397 = vshrl.u32 %v2396, 7
          %v2398 = vsub.s32 %v2395, %v2397
          %v2399 = vrot.slane %v2391, %v2398
          %v2401 = vunpack.c.l.s4 1934713408
          %v2402 = vunpack.c.0.s8 %v2401
          %v2403 = vlaneseq
          %v2404 = vshrl.u32 %v2403, 7
          %v2405 = vsub.s32 %v2402, %v2404
          %v2406 = vrot.slane %v2392, %v2405
          %v2407 = vcombine.high %v2383, 0.0
          %v2408 = vcombine.high %v2390, 0.0
          %v2409 = vcombine.high %v2399, 0.0
          %v2410 = vcombine.high %v2406, 0.0
          %v2411 = vcombine.low %v2383, %v2390
          %v2413 = vunpack.c.l.s4 1983009808
          %v2414 = vunpack.c.0.s8 %v2413
          %v2415 = vlaneseq
          %v2416 = vshrl.u32 %v2415, 7
          %v2417 = vsub.s32 %v2414, %v2416
          %v2418 = vrot.slane %v2411, %v2417
          %v2419 = vcombine.low %v2407, %v2408
          %v2421 = vunpack.c.l.s4 1983009808
          %v2422 = vunpack.c.0.s8 %v2421
          %v2423 = vlaneseq
          %v2424 = vshrl.u32 %v2423, 7
          %v2425 = vsub.s32 %v2422, %v2424
          %v2426 = vrot.slane %v2419, %v2425
          %v2427 = vcombine.low %v2399, %v2406
          %v2429 = vunpack.c.l.s4 1983009808
          %v2430 = vunpack.c.0.s8 %v2429
          %v2431 = vlaneseq
          %v2432 = vshrl.u32 %v2431, 7
          %v2433 = vsub.s32 %v2430, %v2432
          %v2434 = vrot.slane %v2427, %v2433
          %v2435 = vcombine.low %v2409, %v2410
          %v2437 = vunpack.c.l.s4 1983009808
          %v2438 = vunpack.c.0.s8 %v2437
          %v2439 = vlaneseq
          %v2440 = vshrl.u32 %v2439, 7
          %v2441 = vsub.s32 %v2438, %v2440
          %v2442 = vrot.slane %v2435, %v2441
          %v2443 = vcombine.low %v2418, %v2426
          %v2444 = vcombine.high %v2418, %v2426
          %v2446 = vunpack.c.l.s4 1934713408
          %v2447 = vunpack.c.0.s8 %v2446
          %v2448 = vlaneseq
          %v2449 = vshrl.u32 %v2448, 7
          %v2450 = vsub.s32 %v2447, %v2449
          %v2451 = vrot.slane %v2443, %v2450
          %v2453 = vunpack.c.l.s4 1934713408
          %v2454 = vunpack.c.0.s8 %v2453
          %v2455 = vlaneseq
          %v2456 = vshrl.u32 %v2455, 7
          %v2457 = vsub.s32 %v2454, %v2456
          %v2458 = vrot.slane %v2444, %v2457
          %v2459 = vcombine.low %v2434, %v2442
          %v2460 = vcombine.high %v2434, %v2442
          %v2462 = vunpack.c.l.s4 1934713408
          %v2463 = vunpack.c.0.s8 %v2462
          %v2464 = vlaneseq
          %v2465 = vshrl.u32 %v2464, 7
          %v2466 = vsub.s32 %v2463, %v2465
          %v2467 = vrot.slane %v2459, %v2466
          %v2469 = vunpack.c.l.s4 1934713408
          %v2470 = vunpack.c.0.s8 %v2469
          %v2471 = vlaneseq
          %v2472 = vshrl.u32 %v2471, 7
          %v2473 = vsub.s32 %v2470, %v2472
          %v2474 = vrot.slane %v2460, %v2473
          %v2475 = vcombine.low %v2451, %v2467
          %v2476 = vcombine.high %v2451, %v2467
          %v2477 = vcombine.low %v2458, %v2474
          %v2478 = vcombine.high %v2458, %v2474
          %2480 = vrot.lane.b32.xlu0 %v2476, 16
          %v2481 = vpop.permute.xlu0 %2480
          %2484 = vrot.lane.b32.xlu0 %v2477, 32
          %v2485 = vpop.permute.xlu0 %2484
          %2488 = vrot.lane.b32.xlu0 %v2478, 48
          %v2489 = vpop.permute.xlu0 %2488
          %v2491 = vsel %vm1690, %v2475, %v2481
          %v2492 = vsel %vm584, %v2491, %v2485
          %v2493 = vsel %vm668, %v2492, %v2489
          %v2494 = vld [vmem:[%s6] sm:$0xff]
          %v2495 = vld [vmem:[%s6 + $0x8] sm:$0xff]
          %v2496 = vld [vmem:[%s6 + $0x10] sm:$0xff]
          %v2497 = vld [vmem:[%s6 + $0x18] sm:$0xff]
          %v2498 = vld [vmem:[%s6 + $0x20] sm:$0xff]
          %v2499 = vld [vmem:[%s6 + $0x28] sm:$0xff]
          %v2500 = vld [vmem:[%s6 + $0x30] sm:$0xff]
          %v2501 = vld [vmem:[%s6 + $0x38] sm:$0xff]
          %v2502 = vlaneseq
          %v2503 = vshrl.u32 %v2502, 7
          %v2504 = vsub.s32 5, %v2503
          %v2505 = vrot.slane %v567, %v2504
          %v2507 = vsel %vm762, %v2493, 0
          %2509 = vmatprep.subr.mxu0 0.0
          %2510 = vmatpush1.msra.mxu0 %v2494
          %2511 = vmatprep.subr.mxu0 0.0
          %2512 = vmatpush1.msra.mxu0 %v2495
          %2513 = vmatprep.subr.mxu0 0.0
          %2514 = vmatpush1.msra.mxu0 %v2496
          %2515 = vmatprep.subr.mxu0 0.0
          %2516 = vmatpush1.msra.mxu0 %v2497
          %2517 = vmatprep.subr.mxu0 0.0
          %2518 = vmatpush1.msra.mxu0 %v2498
          %2519 = vmatprep.subr.mxu0 0.0
          %2520 = vmatpush1.msra.mxu0 %v2499
          %2521 = vmatprep.subr.mxu0 0.0
          %2522 = vmatpush1.msra.mxu0 %v2500
          %2523 = vmatprep.subr.mxu0 0.0
          %2524 = vmatpush1.msra.mxu0 %v2501
          %2525 = vmatprep.subr.mxu0 0.0
          %2526 = vmatpush1.msra.mxu0 0.0
          %2527 = vmatprep.subr.mxu0 0.0
          %2528 = vmatpush1.msra.mxu0 0.0
          %2529 = vmatprep.subr.mxu0 0.0
          %2530 = vmatpush1.msra.mxu0 0.0
          %2531 = vmatprep.subr.mxu0 0.0
          %2532 = vmatpush1.msra.mxu0 0.0
          %2533 = vmatprep.subr.mxu0 0.0
          %2534 = vmatpush1.msra.mxu0 0.0
          %2535 = vmatprep.subr.mxu0 0.0
          %2536 = vmatpush1.msra.mxu0 0.0
          %2537 = vmatprep.subr.mxu0 0.0
          %2538 = vmatpush1.msra.mxu0 0.0
          %2539 = vmatprep.subr.mxu0 0.0
          %2540 = vmatpush1.msra.mxu0 0.0
          %2541 = vmatprep.subr.mxu0 0.0
          %2542 = vmatpush1.msra.mxu0 0.0
          %2543 = vmatprep.subr.mxu0 0.0
          %2544 = vmatpush1.msra.mxu0 0.0
          %2545 = vmatprep.subr.mxu0 0.0
          %2546 = vmatpush1.msra.mxu0 0.0
          %2547 = vmatprep.subr.mxu0 0.0
          %2548 = vmatpush1.msra.mxu0 0.0
          %2549 = vmatprep.subr.mxu0 0.0
          %2550 = vmatpush1.msra.mxu0 0.0
          %2551 = vmatprep.subr.mxu0 0.0
          %2552 = vmatpush1.msra.mxu0 0.0
          %2553 = vmatprep.subr.mxu0 0.0
          %2554 = vmatpush1.msra.mxu0 0.0
          %2555 = vmatprep.subr.mxu0 0.0
          %2556 = vmatpush1.msra.mxu0 0.0
          %2557 = vmatprep.subr.mxu0 0.0
          %2558 = vmatpush1.msra.mxu0 0.0
          %2559 = vmatprep.subr.mxu0 0.0
          %2560 = vmatpush1.msra.mxu0 0.0
          %2561 = vmatprep.subr.mxu0 0.0
          %2562 = vmatpush1.msra.mxu0 0.0
          %2563 = vmatprep.subr.mxu0 0.0
          %2564 = vmatpush1.msra.mxu0 0.0
          %2565 = vmatprep.subr.mxu0 0.0
          %2566 = vmatpush1.msra.mxu0 0.0
          %2567 = vmatprep.subr.mxu0 0.0
          %2568 = vmatpush1.msra.mxu0 0.0
          %2569 = vmatprep.subr.mxu0 0.0
          %2570 = vmatpush1.msra.mxu0 0.0
          %2571 = vmatprep.subr.mxu0 0.0
          %2572 = vmatpush1.msra.mxu0 0.0
          %2573 = vmatprep.mubr.f32.mxu0 0.0
          %2574 = vmatmul.mubr.f32.gmra.mrb[0].mxu0 %v2507
          %v2575 = vpop.f32.mrb[0].mxu0
          %v2576 = vadd.f32 %v2505, %v2575
          %v2577 = vpop.f32.mrb[0].mxu0
          %2578 = vdwg.mxu0
          %v2579 = vadd.f32 %v2576, %v655
          %v2580 = vsel %vm762, %v2579, 0.0
          %2581 = vadd.xlane.f32.xlu0 %v2580
          %v2582 = vpop.xlane.xlu0 %2581
          %v2583 = vrcp.pop 64.0
          %v2584 = vmul.f32 %v2582, %v2583
          %v2585 = vsub.f32 %v2579, %v2584
          %v2586 = vmul.f32 %v2585, %v2585
          %v2587 = vsel %vm762, %v2586, 0.0
          %2588 = vadd.xlane.f32.xlu0 %v2587
          %v2589 = vpop.xlane.xlu0 %2588
          %v2590 = vmul.f32 %v2589, %v2583
          %v2591 = vadd.f32 %v2590, 1e-05
          %v2592 = vrsqrt.pop %v2591
          %v2593 = vmul.f32 %v2585, %v2592
          %v2594 = vlaneseq
          %v2595 = vshrl.u32 %v2594, 7
          %v2596 = vsub.s32 6, %v2595
          %v2597 = vrot.slane %v567, %v2596
          %v2598 = vmul.f32 %v2593, %v2597
          %v2599 = vlaneseq
          %v2600 = vshrl.u32 %v2599, 7
          %v2601 = vsub.s32 7, %v2600
          %v2602 = vrot.slane %v567, %v2601
          %v2603 = vadd.f32 %v2598, %v2602
          %2604 = vst.msk [vmem:[#allocation2] sm:$0xff] %vm762, %v2603
          %2605 = vst.msk [vmem:[#allocation3] sm:$0xff] %vm762, 0.0
        $region114: #{tpu_custom_call.1} parent=97 // pred_fallthru
          _
        %v2606 = vld [vmem:[#allocation2] sm:$0xff]
        %v2607 = vld [vmem:[%s500] sm:$0xff]
        %v2608 = vld [vmem:[%s500 + $0x8] sm:$0xff]
        %v2609 = vld [vmem:[%s500 + $0x10] sm:$0xff]
        %v2610 = vld [vmem:[%s500 + $0x18] sm:$0xff]
        %v2611 = vld [vmem:[%s500 + $0x20] sm:$0xff]
        %v2612 = vld [vmem:[%s500 + $0x28] sm:$0xff]
        %v2613 = vld [vmem:[%s500 + $0x30] sm:$0xff]
        %v2614 = vld [vmem:[%s500 + $0x38] sm:$0xff]
        %v2615 = vld [vmem:[%s566] sm:$0x1]
        %v2617 = vlaneseq
        %v2618 = vshrl.u32 %v2617, 7
        %v2619 = vsub.s32 0, %v2618
        %v2620 = vrot.slane %v2615, %v2619
        %vm2622 = vcmask 523264
        %v2624 = vsel %vm2622, %v2606, 0
        %2626 = vmatprep.subr.mxu0 0.0
        %2627 = vmatpush1.msra.mxu0 %v2607
        %2628 = vmatprep.subr.mxu0 0.0
        %2629 = vmatpush1.msra.mxu0 %v2608
        %2630 = vmatprep.subr.mxu0 0.0
        %2631 = vmatpush1.msra.mxu0 %v2609
        %2632 = vmatprep.subr.mxu0 0.0
        %2633 = vmatpush1.msra.mxu0 %v2610
        %2634 = vmatprep.subr.mxu0 0.0
        %2635 = vmatpush1.msra.mxu0 %v2611
        %2636 = vmatprep.subr.mxu0 0.0
        %2637 = vmatpush1.msra.mxu0 %v2612
        %2638 = vmatprep.subr.mxu0 0.0
        %2639 = vmatpush1.msra.mxu0 %v2613
        %2640 = vmatprep.subr.mxu0 0.0
        %2641 = vmatpush1.msra.mxu0 %v2614
        %2642 = vmatprep.subr.mxu0 0.0
        %2643 = vmatpush1.msra.mxu0 0.0
        %2644 = vmatprep.subr.mxu0 0.0
        %2645 = vmatpush1.msra.mxu0 0.0
        %2646 = vmatprep.subr.mxu0 0.0
        %2647 = vmatpush1.msra.mxu0 0.0
        %2648 = vmatprep.subr.mxu0 0.0
        %2649 = vmatpush1.msra.mxu0 0.0
        %2650 = vmatprep.subr.mxu0 0.0
        %2651 = vmatpush1.msra.mxu0 0.0
        %2652 = vmatprep.subr.mxu0 0.0
        %2653 = vmatpush1.msra.mxu0 0.0
        %2654 = vmatprep.subr.mxu0 0.0
        %2655 = vmatpush1.msra.mxu0 0.0
        %2656 = vmatprep.subr.mxu0 0.0
        %2657 = vmatpush1.msra.mxu0 0.0
        %2658 = vmatprep.subr.mxu0 0.0
        %2659 = vmatpush1.msra.mxu0 0.0
        %2660 = vmatprep.subr.mxu0 0.0
        %2661 = vmatpush1.msra.mxu0 0.0
        %2662 = vmatprep.subr.mxu0 0.0
        %2663 = vmatpush1.msra.mxu0 0.0
        %2664 = vmatprep.subr.mxu0 0.0
        %2665 = vmatpush1.msra.mxu0 0.0
        %2666 = vmatprep.subr.mxu0 0.0
        %2667 = vmatpush1.msra.mxu0 0.0
        %2668 = vmatprep.subr.mxu0 0.0
        %2669 = vmatpush1.msra.mxu0 0.0
        %2670 = vmatprep.subr.mxu0 0.0
        %2671 = vmatpush1.msra.mxu0 0.0
        %2672 = vmatprep.subr.mxu0 0.0
        %2673 = vmatpush1.msra.mxu0 0.0
        %2674 = vmatprep.subr.mxu0 0.0
        %2675 = vmatpush1.msra.mxu0 0.0
        %2676 = vmatprep.subr.mxu0 0.0
        %2677 = vmatpush1.msra.mxu0 0.0
        %2678 = vmatprep.subr.mxu0 0.0
        %2679 = vmatpush1.msra.mxu0 0.0
        %2680 = vmatprep.subr.mxu0 0.0
        %2681 = vmatpush1.msra.mxu0 0.0
        %2682 = vmatprep.subr.mxu0 0.0
        %2683 = vmatpush1.msra.mxu0 0.0
        %2684 = vmatprep.subr.mxu0 0.0
        %2685 = vmatpush1.msra.mxu0 0.0
        %2686 = vmatprep.subr.mxu0 0.0
        %2687 = vmatpush1.msra.mxu0 0.0
        %2688 = vmatprep.subr.mxu0 0.0
        %2689 = vmatpush1.msra.mxu0 0.0
        %2690 = vmatprep.mubr.f32.mxu0 0.0
        %2691 = vmatmul.mubr.f32.gmra.mrb[0].mxu0 %v2624
        %v2692 = vpop.f32.mrb[0].mxu0
        %v2693 = vadd.f32 %v2620, %v2692
        %v2694 = vpop.f32.mrb[0].mxu0
        %2695 = vdwg.mxu0
        %v2696 = vmax.f32 %v2693, 0.0
        %v2697 = vld [vmem:[#allocation3] sm:$0xff]
        %v2698 = vld [vmem:[%s562] sm:$0xff]
        %v2699 = vld [vmem:[%s562 + $0x8] sm:$0xff]
        %v2700 = vld [vmem:[%s562 + $0x10] sm:$0xff]
        %v2701 = vld [vmem:[%s562 + $0x18] sm:$0xff]
        %v2702 = vld [vmem:[%s562 + $0x20] sm:$0xff]
        %v2703 = vld [vmem:[%s562 + $0x28] sm:$0xff]
        %v2704 = vld [vmem:[%s562 + $0x30] sm:$0xff]
        %v2705 = vld [vmem:[%s562 + $0x38] sm:$0xff]
        %v2706 = vld [vmem:[%s562 + $0x40] sm:$0xff]
        %v2707 = vld [vmem:[%s562 + $0x48] sm:$0xff]
        %v2708 = vld [vmem:[%s562 + $0x50] sm:$0xff]
        %v2709 = vld [vmem:[%s562 + $0x58] sm:$0xff]
        %v2710 = vld [vmem:[%s562 + $0x60] sm:$0xff]
        %v2711 = vld [vmem:[%s562 + $0x68] sm:$0xff]
        %v2712 = vld [vmem:[%s562 + $0x70] sm:$0xff]
        %v2713 = vld [vmem:[%s562 + $0x78] sm:$0xff]
        %2714 = vmatprep.subr.mxu0 0.0
        %2715 = vmatpush1.msra.mxu0 %v2698
        %2716 = vmatprep.subr.mxu0 0.0
        %2717 = vmatpush1.msra.mxu0 %v2699
        %2718 = vmatprep.subr.mxu0 0.0
        %2719 = vmatpush1.msra.mxu0 %v2700
        %2720 = vmatprep.subr.mxu0 0.0
        %2721 = vmatpush1.msra.mxu0 %v2701
        %2722 = vmatprep.subr.mxu0 0.0
        %2723 = vmatpush1.msra.mxu0 %v2702
        %2724 = vmatprep.subr.mxu0 0.0
        %2725 = vmatpush1.msra.mxu0 %v2703
        %2726 = vmatprep.subr.mxu0 0.0
        %2727 = vmatpush1.msra.mxu0 %v2704
        %2728 = vmatprep.subr.mxu0 0.0
        %2729 = vmatpush1.msra.mxu0 %v2705
        %2730 = vmatprep.subr.mxu0 0.0
        %2731 = vmatpush1.msra.mxu0 %v2706
        %2732 = vmatprep.subr.mxu0 0.0
        %2733 = vmatpush1.msra.mxu0 %v2707
        %2734 = vmatprep.subr.mxu0 0.0
        %2735 = vmatpush1.msra.mxu0 %v2708
        %2736 = vmatprep.subr.mxu0 0.0
        %2737 = vmatpush1.msra.mxu0 %v2709
        %2738 = vmatprep.subr.mxu0 0.0
        %2739 = vmatpush1.msra.mxu0 %v2710
        %2740 = vmatprep.subr.mxu0 0.0
        %2741 = vmatpush1.msra.mxu0 %v2711
        %2742 = vmatprep.subr.mxu0 0.0
        %2743 = vmatpush1.msra.mxu0 %v2712
        %2744 = vmatprep.subr.mxu0 0.0
        %2745 = vmatpush1.msra.mxu0 %v2713
        %2746 = vmatprep.subr.mxu0 0.0
        %2747 = vmatpush1.msra.mxu0 0.0
        %2748 = vmatprep.subr.mxu0 0.0
        %2749 = vmatpush1.msra.mxu0 0.0
        %2750 = vmatprep.subr.mxu0 0.0
        %2751 = vmatpush1.msra.mxu0 0.0
        %2752 = vmatprep.subr.mxu0 0.0
        %2753 = vmatpush1.msra.mxu0 0.0
        %2754 = vmatprep.subr.mxu0 0.0
        %2755 = vmatpush1.msra.mxu0 0.0
        %2756 = vmatprep.subr.mxu0 0.0
        %2757 = vmatpush1.msra.mxu0 0.0
        %2758 = vmatprep.subr.mxu0 0.0
        %2759 = vmatpush1.msra.mxu0 0.0
        %2760 = vmatprep.subr.mxu0 0.0
        %2761 = vmatpush1.msra.mxu0 0.0
        %2762 = vmatprep.subr.mxu0 0.0
        %2763 = vmatpush1.msra.mxu0 0.0
        %2764 = vmatprep.subr.mxu0 0.0
        %2765 = vmatpush1.msra.mxu0 0.0
        %2766 = vmatprep.subr.mxu0 0.0
        %2767 = vmatpush1.msra.mxu0 0.0
        %2768 = vmatprep.subr.mxu0 0.0
        %2769 = vmatpush1.msra.mxu0 0.0
        %2770 = vmatprep.subr.mxu0 0.0
        %2771 = vmatpush1.msra.mxu0 0.0
        %2772 = vmatprep.subr.mxu0 0.0
        %2773 = vmatpush1.msra.mxu0 0.0
        %2774 = vmatprep.subr.mxu0 0.0
        %2775 = vmatpush1.msra.mxu0 0.0
        %2776 = vmatprep.subr.mxu0 0.0
        %2777 = vmatpush1.msra.mxu0 0.0
        %2778 = vmatprep.mubr.f32.mxu0 0.0
        %2779 = vmatmul.mubr.f32.gmra.mrb[0].mxu0 %v2696
        %v2780 = vpop.f32.mrb[0].mxu0
        %v2781 = vadd.f32 0.0, %v2780
        %v2782 = vpop.f32.mrb[0].mxu0
        %2783 = vdwg.mxu0
        %v2784 = vadd.f32 %v2697, %v2781
        %2785 = vst.msk [vmem:[#allocation3] sm:$0xff] %vm2622, %v2784
        %p2786 = scmp.eq.s32.totalorder %s34, 1
        // Predicated region
        $region115: #{tpu_custom_call.1} parent=97 // pred_check
          %p2787 = pneg %p2786
        $region116: #{tpu_custom_call.1} parent=97 // pred_check_branch
          %2789 = sbr.rel (%p2787) target = $region118
        $region117: #{tpu_custom_call.1} parent=97 // pred_region
          %v2790 = vld [vmem:[#allocation3] sm:$0xff]
          %v2791 = vlaneseq
          %v2792 = vshrl.u32 %v2791, 7
          %v2793 = vsub.s32 0, %v2792
          %v2794 = vrot.slane %v568, %v2793
          %v2795 = vadd.f32 %v2790, %v2794
          %v2796 = vld [vmem:[#allocation2] sm:$0xff]
          %v2797 = vadd.f32 %v2795, %v2796
          %v2798 = vsel %vm2622, %v2797, 0.0
          %2799 = vadd.xlane.f32.xlu0 %v2798
          %v2800 = vpop.xlane.xlu0 %2799
          %v2801 = vrcp.pop 64.0
          %v2802 = vmul.f32 %v2800, %v2801
          %v2803 = vsub.f32 %v2797, %v2802
          %v2804 = vmul.f32 %v2803, %v2803
          %v2805 = vsel %vm2622, %v2804, 0.0
          %2806 = vadd.xlane.f32.xlu0 %v2805
          %v2807 = vpop.xlane.xlu0 %2806
          %v2808 = vmul.f32 %v2807, %v2801
          %v2809 = vadd.f32 %v2808, 1e-05
          %v2810 = vrsqrt.pop %v2809
          %v2811 = vmul.f32 %v2803, %v2810
          %v2812 = vlaneseq
          %v2813 = vshrl.u32 %v2812, 7
          %v2814 = vsub.s32 1, %v2813
          %v2815 = vrot.slane %v568, %v2814
          %v2816 = vmul.f32 %v2811, %v2815
          %v2817 = vlaneseq
          %v2818 = vshrl.u32 %v2817, 7
          %v2819 = vsub.s32 2, %v2818
          %v2820 = vrot.slane %v568, %v2819
          %v2821 = vadd.f32 %v2816, %v2820
          %2822 = vst.msk [vmem:[%s553] sm:$0xff] %vm2622, %v2821
        $region118: #{tpu_custom_call.1} parent=97 // pred_fallthru
          _
        %s2823 = sand.u32 %s305, 1
        %s2824 = scalar_lea.sflag [#allocation6], %s2823
        %s2825 = sand.u32 %s305, 1
        %s2826 = smul.addr %s2825, 8
        %s2827 = scalar_lea.vmem [#allocation10], %s2826
        // Predicated region
        $region119: #{tpu_custom_call.1} parent=97 // pred_check
          %p2828 = pneg %p315
        $region120: #{tpu_custom_call.1} parent=97 // pred_check_branch
          %2830 = sbr.rel (%p2828) target = $region122
        $region121: #{tpu_custom_call.1} parent=97 // pred_region
          %s2832 = ssub.s32 128, 128
          %2833 = vsyncadd %s2824, %s2832
          %s2834 = smul.addr %s33, 128
          %s2835 = scalar_lea.hbm %s11, %s2834
          %s2837 = sshll.u32 %s2827, 4
          %s2838 = int_to_ptr.vmem [resolvable:$true] %s2837
          %2840 = dma.vmem_to_hbm [thread:$0]  %s2838, 128, %s2835, %s2824
        $region122: #{tpu_custom_call.1} parent=97 // pred_fallthru
          _
      $region98: #{tpu_custom_call.1} parent=5 // pred_fallthru
        _
      %p2841 = scmp.le.s32.totalorder 2, %s24
      // Predicated region
      $region123: #{tpu_custom_call.1} parent=5 // pred_check
        %p2842 = pneg %p2841
      $region124: #{tpu_custom_call.1} parent=5 // pred_check_branch
        %2844 = sbr.rel (%p2842) target = $region126
      $region125: #{tpu_custom_call.1} parent=5 // pred_region
        %s2845 = ssub.s32 %s24, 2
        // Predicated region
        $region127: #{tpu_custom_call.1} parent=125 // pred_check
          %p2846 = pneg %p321
        $region128: #{tpu_custom_call.1} parent=125 // pred_check_branch
          %2848 = sbr.rel (%p2846) target = $region130
        $region129: #{tpu_custom_call.1} parent=125 // pred_region
          %s2849 = sand.u32 %s306, 1
          %s2850 = scalar_lea.sflag [#allocation6], %s2849
          %s2851 = sand.u32 %s306, 1
          %s2852 = smul.addr %s2851, 8
          %s2853 = scalar_lea.vmem [#allocation10], %s2852
          %2854 = dma.done %s2850, 128
        $region130: #{tpu_custom_call.1} parent=125 // pred_fallthru
          _
      $region126: #{tpu_custom_call.1} parent=5 // pred_fallthru
        _
    $region6: #{tpu_custom_call.1} parent=1 // loop_footer
      %s28 = sadd.s32 1, %s24
    $region7: #{tpu_custom_call.1} parent=1 // loop_footer_branch
      %23 = sbr.rel target = $region3
    $region8: #{tpu_custom_call.1} parent=1 // loop_exit
      _
    %2855 = vsyncpa [#allocation5], 1
    %s2856 = scalar_lea.sflag [#allocation5], 1
    %2857 = vsyncpa %s2856, 1
    %2858 = vsyncpa [#allocation8], 1
    %2859 = vsyncpa [#allocation6], 1
    %s2860 = scalar_lea.sflag [#allocation6], 1
    %2861 = vsyncpa %s2860, 1

</llo_original>
